<compile_context>
chip_gen: v6e
topology: v6e:2x2x1
jax: 0.10.0
libtpu: 0.0.40
codegen_flags: <defaults>
</compile_context>

<pallas_src>
import functools

import jax
import jax.numpy as jnp
from jax import lax
from jax.experimental import pallas as pl
from jax.experimental.pallas import tpu as pltpu

NEG_SLOPE = 0.1
LANES = 128
ACT_DTYPE = jnp.bfloat16


def _round_up(n, m):
    return ((n + m - 1) // m) * m


def get_padding(kernel_size, dilation=1):
    return (kernel_size * dilation - dilation) // 2


# ----------------------------------------------------------------------------
# In-kernel helpers
# ----------------------------------------------------------------------------
def _leaky_f32(x):
    return jnp.where(x >= 0, x, NEG_SLOPE * x)


def _mask_time(acc, t_valid):
    """Zero lanes >= t_valid (keeps the zero-beyond-valid invariant)."""
    Tp = acc.shape[-1]
    if t_valid >= Tp:
        return acc
    col = lax.broadcasted_iota(jnp.int32, acc.shape, acc.ndim - 1)
    return jnp.where(col < t_valid, acc, 0.0)


def _folded_conv(x, w_aug, K, dil, t_valid):
    """'same' dilated conv as a single MXU matmul.

    x     : (Cin, Tp) bf16, zero on lanes >= t_valid
    w_aug : (Cout, K*Cin + 1) bf16 — taps stacked along axis 1, bias last col
    returns (Cout, Tp) f32, zero on lanes >= t_valid
    """
    Cin, Tp = x.shape
    pad = dil * (K - 1) // 2
    if pad:
        z = jnp.zeros((Cin, pad), x.dtype)
        xp = jnp.concatenate([z, x, z], axis=1)
    else:
        xp = x
    parts = [xp[:, k * dil : k * dil + Tp] for k in range(K)]
    parts.append(jnp.ones((1, Tp), x.dtype))          # bias row
    stack = jnp.concatenate(parts, axis=0)            # (K*Cin+1, Tp)
    acc = jnp.dot(w_aug, stack, preferred_element_type=jnp.float32)
    return _mask_time(acc, t_valid)


# ----------------------------------------------------------------------------
# Pallas kernels
# ----------------------------------------------------------------------------
def _emb_kernel(s_ref, et_ref, o_ref):
    """Soft-unit embedding fused with the (0,2,1) transpose.

    s_ref : (1, Tp, U) bf16   et_ref : (E, U) bf16   o_ref : (1, E, Tp) bf16
    o[0] = emb.T @ soft_units[b].T  (lane-dense along T).
    """
    acc = lax.dot_general(
        et_ref[...], s_ref[0],
        dimension_numbers=(((1,), (1,)), ((), ())),
        preferred_element_type=jnp.float32,
    )  # (E, Tp)
    o_ref[0] = acc.astype(o_ref.dtype)


def _conv1d_kernel(x_ref, w_ref, o_ref, *, K, dil, t_valid, in_act, out_act):
    """Single 'same' dilated conv (+ optional pre/post activation)."""
    x = x_ref[0]                                      # (Cin, Tp) bf16
    if in_act == "leaky":
        x = _leaky_f32(x.astype(jnp.float32)).astype(ACT_DTYPE)
    acc = _folded_conv(x, w_ref[...], K, dil, t_valid)  # (Cout, Tp) f32, masked
    if out_act == "leaky":
        acc = _leaky_f32(acc)                          # leaky(0)=0: mask preserved
    elif out_act == "tanh":
        acc = jnp.tanh(acc)                            # tanh(0)=0: mask preserved
    o_ref[0] = acc.astype(o_ref.dtype)


def _convT_kernel(x_ref, w_ref, o_ref, *, K, stride, padding, t_valid, out_act):
    """Polyphase ConvTranspose1d: one folded matmul per output phase.

    x_ref : (1, Cin, Tp) bf16
    w_ref : (stride, Cout, Qmax*Cin + 1) bf16 — per-phase sub-kernels + bias col
    o_ref : (1, stride, Cout, Tp) bf16 with o[0, s, :, m] == y[:, m*stride + s]
    """
    x = x_ref[0]
    Cin, Tp = x.shape
    Qmax = -(-K // stride)
    L = Qmax - 1                                  # left halo (zeros)
    R = (stride - 1 + padding) // stride          # right halo (zeros)
    parts = []
    if L:
        parts.append(jnp.zeros((Cin, L), x.dtype))
    parts.append(x)
    if R:
        parts.append(jnp.zeros((Cin, R), x.dtype))
    xp = jnp.concatenate(parts, axis=1) if len(parts) > 1 else x
    ones = jnp.ones((1, Tp), x.dtype)

    for s in range(stride):
        off = (s + padding) // stride
        slices = [xp[:, L + off - q : L + off - q + Tp] for q in range(Qmax)]
        slices.append(ones)                        # bias row
        stack = jnp.concatenate(slices, axis=0)    # (Qmax*Cin+1, Tp)
        acc = jnp.dot(w_ref[s], stack, preferred_element_type=jnp.float32)
        if out_act == "leaky":
            acc = _leaky_f32(acc)
        acc = _mask_time(acc, t_valid)
        o_ref[0, s] = acc.astype(o_ref.dtype)


def _resblock_kernel(x_ref, w_ref, o_ref, *, K, dils, t_valid):
    """Fused ResBlock: for each dilation d:
         xt = conv1(leaky(xb), dil=d); xt = conv2(leaky(xt), dil=1); xb += xt
    x_ref : (1, C, Tp) bf16
    w_ref : (2*len(dils), C, K*C + 1) bf16 (conv1_0, conv2_0, conv1_1, ...)
    """
    xb = x_ref[0].astype(jnp.float32)
    for i, d in enumerate(dils):
        a1 = _leaky_f32(xb).astype(ACT_DTYPE)
        t = _folded_conv(a1, w_ref[2 * i], K, d, t_valid)
        a2 = _leaky_f32(t).astype(ACT_DTYPE)
        t = _folded_conv(a2, w_ref[2 * i + 1], K, 1, t_valid)
        xb = xb + t
    o_ref[0] = xb.astype(o_ref.dtype)


# ----------------------------------------------------------------------------
# pallas_call wrappers
# ----------------------------------------------------------------------------
_COMPILER_PARAMS = pltpu.CompilerParams(dimension_semantics=("parallel",))


def soft_embedding_pallas(soft_units, emb_t):
    """soft_units: (B, Tp, U) bf16, emb_t: (E, U) bf16 -> (B, E, Tp) bf16."""
    B, Tp, U = soft_units.shape
    E = emb_t.shape[0]
    return pl.pallas_call(
        _emb_kernel,
        out_shape=jax.ShapeDtypeStruct((B, E, Tp), ACT_DTYPE),
        grid=(B,),
        in_specs=[pl.BlockSpec((1, Tp, U), lambda i: (i, 0, 0)),
                  pl.BlockSpec((E, U), lambda i: (0, 0))],
        out_specs=pl.BlockSpec((1, E, Tp), lambda i: (i, 0, 0)),
        compiler_params=_COMPILER_PARAMS,
    )(soft_units, emb_t)


def conv1d_pallas(x, w_aug, *, K, dil, t_valid, in_act=None, out_act=None,
                  out_dtype=ACT_DTYPE):
    """x: (B, Cin, Tp) bf16, w_aug: (Cout, K*Cin+1) bf16 (bias folded)."""
    B, Cin, Tp = x.shape
    Cout = w_aug.shape[0]
    kernel = functools.partial(_conv1d_kernel, K=K, dil=dil, t_valid=t_valid,
                               in_act=in_act, out_act=out_act)
    return pl.pallas_call(
        kernel,
        out_shape=jax.ShapeDtypeStruct((B, Cout, Tp), out_dtype),
        grid=(B,),
        in_specs=[pl.BlockSpec((1, Cin, Tp), lambda i: (i, 0, 0)),
                  pl.BlockSpec(w_aug.shape, lambda i: (0, 0))],
        out_specs=pl.BlockSpec((1, Cout, Tp), lambda i: (i, 0, 0)),
        compiler_params=_COMPILER_PARAMS,
    )(x, w_aug)


def conv_transpose1d_pallas(x, w_ph, *, K, stride, padding, t_valid,
                            out_act=None):
    """Polyphase ConvTranspose1d.  x: (B, Cin, Tp), w_ph: (stride, Cout, Q*Cin+1)."""
    B, Cin, Tp = x.shape
    _, Cout, _ = w_ph.shape
    assert K >= stride and (K - stride) % 2 == 0 and padding == (K - stride) // 2, (
        "polyphase path assumes output length == stride * input length")
    kernel = functools.partial(_convT_kernel, K=K, stride=stride,
                               padding=padding, t_valid=t_valid, out_act=out_act)
    ph = pl.pallas_call(
        kernel,
        out_shape=jax.ShapeDtypeStruct((B, stride, Cout, Tp), ACT_DTYPE),
        grid=(B,),
        in_specs=[pl.BlockSpec((1, Cin, Tp), lambda i: (i, 0, 0)),
                  pl.BlockSpec(w_ph.shape, lambda i: (0, 0, 0))],
        out_specs=pl.BlockSpec((1, stride, Cout, Tp), lambda i: (i, 0, 0, 0)),
        compiler_params=_COMPILER_PARAMS,
    )(x, w_ph)
    # Interleave phases: y[b, c, m*stride + s] = ph[b, s, c, m].
    return jnp.transpose(ph, (0, 2, 3, 1)).reshape(B, Cout, Tp * stride)


def resblock_pallas(x, ws, *, K, dils, t_valid):
    """Fused ResBlock.  x: (B, C, Tp) bf16, ws: (2*len(dils), C, K*C+1) bf16."""
    B, C, Tp = x.shape
    kernel = functools.partial(_resblock_kernel, K=K, dils=tuple(dils),
                               t_valid=t_valid)
    return pl.pallas_call(
        kernel,
        out_shape=jax.ShapeDtypeStruct((B, C, Tp), ACT_DTYPE),
        grid=(B,),
        in_specs=[pl.BlockSpec((1, C, Tp), lambda i: (i, 0, 0)),
                  pl.BlockSpec(ws.shape, lambda i: (0, 0, 0))],
        out_specs=pl.BlockSpec((1, C, Tp), lambda i: (i, 0, 0)),
        compiler_params=_COMPILER_PARAMS,
    )(x, ws)


# ----------------------------------------------------------------------------
# Config, weight preprocessing, deterministic init, forward
# ----------------------------------------------------------------------------
class Config:
    soft_unit_dim = 32
    embedding_dim = 16
    upsample_initial_channel = 32
    upsample_rates = (2, 2)
    upsample_kernel_sizes = (4, 4)
    resblock_kernel_sizes = (3,)
    resblock_dilation_sizes = ((1, 3),)
    periods = (2, 3, 5, 7, 11)  # discriminator only; unused in forward


def _stack_conv(w, b):
    """(Cout, Cin, K) PyTorch conv weight + bias -> (Cout, K*Cin+1) bf16."""
    Cout, Cin, K = w.shape
    ws = jnp.transpose(w, (0, 2, 1)).reshape(Cout, K * Cin)
    return jnp.concatenate([ws, b.reshape(Cout, 1)], axis=1).astype(ACT_DTYPE)


def _stack_convT(w_ct, b, stride, padding):
    """(Cin, Cout, K) ConvTranspose1d weight -> (stride, Cout, Qmax*Cin+1) bf16.

    Phase s uses taps k = (s+padding)%stride + q*stride applied to x[m+off-q],
    off = (s+padding)//stride, matching the slice order in _convT_kernel.
    """
    Cin, Cout, K = w_ct.shape
    Qmax = -(-K // stride)
    phases = []
    for s in range(stride):
        r = (s + padding) % stride
        blocks = []
        for q in range(Qmax):
            k = r + q * stride
            if k < K:
                blocks.append(w_ct[:, :, k].T)              # (Cout, Cin)
            else:
                blocks.append(jnp.zeros((Cout, Cin), w_ct.dtype))
        blocks.append(b.reshape(Cout, 1))
        phases.append(jnp.concatenate(blocks, axis=1))
    return jnp.stack(phases, axis=0).astype(ACT_DTYPE)


def init_params(key, cfg):
    keys = iter(jax.random.split(key, 512))

    def nrm(shape, std):
        return jax.random.normal(next(keys), shape, jnp.float32) * std

    p = {}
    # SoftUnitEmbedding: randn(U, E) * 0.1, stored transposed as (E, U) bf16.
    p["emb_t"] = jnp.transpose(nrm((cfg.soft_unit_dim, cfg.embedding_dim), 0.1)
                               ).astype(ACT_DTYPE)
    ch0 = cfg.upsample_initial_channel
    p["conv_pre"] = _stack_conv(nrm((ch0, cfg.embedding_dim, 7), 0.01),
                                nrm((ch0,), 0.01))

    p["ups"], p["resblocks"] = [], []
    ch = ch0
    for i, (rate, kern) in enumerate(zip(cfg.upsample_rates,
                                         cfg.upsample_kernel_sizes)):
        cin = ch0 // (2 ** i)
        cout = ch0 // (2 ** (i + 1))
        p["ups"].append(_stack_convT(nrm((cin, cout, kern), 0.01),
                                     nrm((cout,), 0.01),
                                     rate, (kern - rate) // 2))
        blocks = []
        for ksz, dils in zip(cfg.resblock_kernel_sizes,
                             cfg.resblock_dilation_sizes):
            ws = []
            for _d in dils:
                ws.append(_stack_conv(nrm((cout, cout, ksz), 0.01),
                                      nrm((cout,), 0.01)))
                ws.append(_stack_conv(nrm((cout, cout, ksz), 0.01),
                                      nrm((cout,), 0.01)))
            blocks.append(jnp.stack(ws, axis=0))  # (2*len(dils), C, ksz*C+1)
        p["resblocks"].append(blocks)
        ch = cout
    p["conv_post"] = _stack_conv(nrm((1, ch, 7), 0.01), nrm((1,), 0.01))
    return p


def soft_hifigan_forward(params, soft_units, cfg):
    """Matches SoftHiFiGAN.forward == SoftHiFiGANGenerator.forward."""
    B, T, _ = soft_units.shape
    Tp = _round_up(max(T, LANES), LANES)  # lane-dense time, zero-padded
    s = jnp.pad(soft_units, ((0, 0), (0, Tp - T), (0, 0))).astype(ACT_DTYPE)

    # embedding (+ fused transpose)  -> (B, E, Tp)
    x = soft_embedding_pallas(s, params["emb_t"])

    # conv_pre, then leaky (fused as out_act)
    x = conv1d_pallas(x, params["conv_pre"], K=7, dil=1, t_valid=T,
                      out_act="leaky")

    n_kernels = len(cfg.resblock_kernel_sizes)
    t_valid = T
    for i, rate in enumerate(cfg.upsample_rates):
        kern = cfg.upsample_kernel_sizes[i]
        # x = up(x); x = leaky(x)
        x = conv_transpose1d_pallas(x, params["ups"][i], K=kern, stride=rate,
                                    padding=(kern - rate) // 2,
                                    t_valid=t_valid, out_act="leaky")
        t_valid *= rate
        # xs = sum_j resblock_j(x); x = xs / n_kernels
        xs = None
        for j, ws in enumerate(params["resblocks"][i]):
            xb = resblock_pallas(x, ws, K=cfg.resblock_kernel_sizes[j],
                                 dils=cfg.resblock_dilation_sizes[j],
                                 t_valid=t_valid)
            xs = xb if xs is None else xs + xb
        x = xs if n_kernels == 1 else xs / n_kernels

    # x = leaky(x); x = conv_post(x); x = tanh(x)
    x = conv1d_pallas(x, params["conv_post"], K=7, dil=1, t_valid=t_valid,
                      in_act="leaky", out_act="tanh", out_dtype=jnp.float32)
    return x[:, :, :t_valid]  # (B, 1, audio_length) f32


if __name__ == "__main__":
    cfg = Config()
    key = jax.random.PRNGKey(0)
    k_param, k_in = jax.random.split(key)
    params = init_params(k_param, cfg)

    B, T = 2, 8
    soft_units = jax.nn.softmax(
        jax.random.normal(k_in, (B, T, cfg.soft_unit_dim), jnp.float32), axis=-1
    )

    fwd = jax.jit(functools.partial(soft_hifigan_forward, cfg=cfg))
    audio = fwd(params, soft_units)
    jax.block_until_ready(audio)

    total_up = 1
    for r in cfg.upsample_rates:
        total_up *= r
    assert audio.shape == (B, 1, T * total_up), audio.shape
    assert bool(jnp.all(jnp.isfinite(audio)))
    print("KERNEL_OK")
</pallas_src>

<mosaic_0001>
module attributes {stable_mosaic.version = 11 : i64} {
  func.func @_conv1d_kernel(%arg0: i32, %arg1: memref<1x16x128xbf16, #tpu.memory_space<vmem>>, %arg2: memref<32x113xbf16, #tpu.memory_space<vmem>>, %arg3: memref<1x32x128xbf16, #tpu.memory_space<vmem>>) attributes {dimension_semantics = [#tpu.dimension_semantics<parallel>], iteration_bounds = array<i64: 2>, scalar_prefetch = 0 : i64, scratch_operands = 0 : i64, tpu.core_type = #tpu.core_type<tc>, window_params = [{transform_indices = @transform_0, window_bounds = array<i64: 1, 16, 128>}, {pipeline_mode = #tpu.pipeline_mode<synchronous>, transform_indices = @transform_1, window_bounds = array<i64: 32, 113>}, {transform_indices = @transform_2, window_bounds = array<i64: 1, 32, 128>}]} {
    %c0 = arith.constant 0 : index
    %c0_0 = arith.constant 0 : index
    %c0_1 = arith.constant 0 : index
    %0 = vector.load %arg1[%c0, %c0_0, %c0_1] : memref<1x16x128xbf16, #tpu.memory_space<vmem>>, vector<1x16x128xbf16>
    %1 = vector.shape_cast %0 : vector<1x16x128xbf16> to vector<16x128xbf16>
    %c0_2 = arith.constant 0 : index
    %c0_3 = arith.constant 0 : index
    %2 = vector.load %arg2[%c0_2, %c0_3] : memref<32x113xbf16, #tpu.memory_space<vmem>>, vector<32x113xbf16>
    %cst = arith.constant 0.000000e+00 : bf16
    %3 = vector.broadcast %cst : bf16 to vector<16x3xbf16>
    %4 = tpu.concatenate %3, %1, %3 in 1 : vector<16x3xbf16>, vector<16x128xbf16>, vector<16x3xbf16> -> vector<16x134xbf16>
    %5 = vector.extract_strided_slice %4 {offsets = [0, 0], sizes = [16, 128], strides = [1, 1]} : vector<16x134xbf16> to vector<16x128xbf16>
    %6 = vector.extract_strided_slice %4 {offsets = [0, 1], sizes = [16, 128], strides = [1, 1]} : vector<16x134xbf16> to vector<16x128xbf16>
    %7 = vector.extract_strided_slice %4 {offsets = [0, 2], sizes = [16, 128], strides = [1, 1]} : vector<16x134xbf16> to vector<16x128xbf16>
    %8 = vector.extract_strided_slice %4 {offsets = [0, 3], sizes = [16, 128], strides = [1, 1]} : vector<16x134xbf16> to vector<16x128xbf16>
    %9 = vector.extract_strided_slice %4 {offsets = [0, 4], sizes = [16, 128], strides = [1, 1]} : vector<16x134xbf16> to vector<16x128xbf16>
    %10 = vector.extract_strided_slice %4 {offsets = [0, 5], sizes = [16, 128], strides = [1, 1]} : vector<16x134xbf16> to vector<16x128xbf16>
    %11 = vector.extract_strided_slice %4 {offsets = [0, 6], sizes = [16, 128], strides = [1, 1]} : vector<16x134xbf16> to vector<16x128xbf16>
    %cst_4 = arith.constant 1.000000e+00 : bf16
    %12 = vector.broadcast %cst_4 : bf16 to vector<1x128xbf16>
    %13 = tpu.concatenate %5, %6, %7, %8, %9, %10, %11, %12 in 0 : vector<16x128xbf16>, vector<16x128xbf16>, vector<16x128xbf16>, vector<16x128xbf16>, vector<16x128xbf16>, vector<16x128xbf16>, vector<16x128xbf16>, vector<1x128xbf16> -> vector<113x128xbf16>
    %cst_5 = arith.constant dense<0.000000e+00> : vector<32x128xf32>
    %14 = tpu.matmul %2, %13, %cst_5 {dimension_numbers = #tpu.dot_dimension_numbers<[1], [0], [0], [1], [0, 0, 1, 1], [], []>} : vector<32x113xbf16>, vector<113x128xbf16>, vector<32x128xf32> -> vector<32x128xf32>
    %15 = tpu.iota {dimensions = array<i32: 1>} : vector<32x128xi32>
    %c8_i32 = arith.constant 8 : i32
    %16 = vector.broadcast %c8_i32 : i32 to vector<32x128xi32>
    %17 = arith.cmpi slt, %15, %16 : vector<32x128xi32>
    %cst_6 = arith.constant 0.000000e+00 : f32
    %18 = vector.broadcast %cst_6 : f32 to vector<32x128xf32>
    %19 = arith.select %17, %14, %18 : vector<32x128xi1>, vector<32x128xf32>
    %cst_7 = arith.constant 0.000000e+00 : f32
    %20 = vector.broadcast %cst_7 : f32 to vector<32x128xf32>
    %21 = arith.cmpf oge, %19, %20 : vector<32x128xf32>
    %cst_8 = arith.constant 1.000000e-01 : f32
    %22 = vector.broadcast %cst_8 : f32 to vector<32x128xf32>
    %23 = arith.mulf %22, %19 : vector<32x128xf32>
    %24 = arith.select %21, %19, %23 : vector<32x128xi1>, vector<32x128xf32>
    %25 = arith.truncf %24 : vector<32x128xf32> to vector<32x128xbf16>
    %c0_9 = arith.constant 0 : index
    %c0_10 = arith.constant 0 : index
    %c0_11 = arith.constant 0 : index
    %26 = vector.load %arg3[%c0_9, %c0_10, %c0_11] : memref<1x32x128xbf16, #tpu.memory_space<vmem>>, vector<1x32x128xbf16>
    %27 = vector.shape_cast %26 : vector<1x32x128xbf16> to vector<32x128xbf16>
    %28 = vector.shape_cast %25 : vector<32x128xbf16> to vector<1x32x128xbf16>
    tpu.vector_store %arg3[%c0_9, %c0_10, %c0_11], %28 {strides = array<i32>} : memref<1x32x128xbf16, #tpu.memory_space<vmem>>, vector<1x32x128xbf16>,
    return
  }
  func.func @transform_0(%arg0: i32) -> (i32, i32, i32) {
    %c0_i32 = arith.constant 0 : i32
    %c0_i32_0 = arith.constant 0 : i32
    %c0_i32_1 = arith.constant 0 : i32
    return %arg0, %c0_i32, %c0_i32_0 : i32, i32, i32
  }
  func.func @transform_1(%arg0: i32) -> (i32, i32) {
    %c0_i32 = arith.constant 0 : i32
    %c0_i32_0 = arith.constant 0 : i32
    %c0_i32_1 = arith.constant 0 : i32
    return %c0_i32, %c0_i32_0 : i32, i32
  }
  func.func @transform_2(%arg0: i32) -> (i32, i32, i32) {
    %c0_i32 = arith.constant 0 : i32
    %c0_i32_0 = arith.constant 0 : i32
    %c0_i32_1 = arith.constant 0 : i32
    return %arg0, %c0_i32, %c0_i32_0 : i32, i32, i32
  }
}

module attributes {stable_mosaic.version = 11 : i64} {
  func.func @_emb_kernel(%arg0: i32, %arg1: memref<1x128x32xbf16, #tpu.memory_space<vmem>>, %arg2: memref<16x32xbf16, #tpu.memory_space<vmem>>, %arg3: memref<1x16x128xbf16, #tpu.memory_space<vmem>>) attributes {dimension_semantics = [#tpu.dimension_semantics<parallel>], iteration_bounds = array<i64: 2>, scalar_prefetch = 0 : i64, scratch_operands = 0 : i64, tpu.core_type = #tpu.core_type<tc>, window_params = [{transform_indices = @transform_0, window_bounds = array<i64: 1, 128, 32>}, {pipeline_mode = #tpu.pipeline_mode<synchronous>, transform_indices = @transform_1, window_bounds = array<i64: 16, 32>}, {transform_indices = @transform_2, window_bounds = array<i64: 1, 16, 128>}]} {
    %c0 = arith.constant 0 : index
    %c0_0 = arith.constant 0 : index
    %0 = vector.load %arg2[%c0, %c0_0] : memref<16x32xbf16, #tpu.memory_space<vmem>>, vector<16x32xbf16>
    %c0_1 = arith.constant 0 : index
    %c0_2 = arith.constant 0 : index
    %c0_3 = arith.constant 0 : index
    %1 = vector.load %arg1[%c0_1, %c0_2, %c0_3] : memref<1x128x32xbf16, #tpu.memory_space<vmem>>, vector<1x128x32xbf16>
    %2 = vector.shape_cast %1 : vector<1x128x32xbf16> to vector<128x32xbf16>
    %cst = arith.constant dense<0.000000e+00> : vector<16x128xf32>
    %3 = tpu.matmul %0, %2, %cst {dimension_numbers = #tpu.dot_dimension_numbers<[1], [1], [0], [0], [0, 0, 1, 0], [], []>} : vector<16x32xbf16>, vector<128x32xbf16>, vector<16x128xf32> -> vector<16x128xf32>
    %4 = arith.truncf %3 : vector<16x128xf32> to vector<16x128xbf16>
    %c0_4 = arith.constant 0 : index
    %c0_5 = arith.constant 0 : index
    %c0_6 = arith.constant 0 : index
    %5 = vector.load %arg3[%c0_4, %c0_5, %c0_6] : memref<1x16x128xbf16, #tpu.memory_space<vmem>>, vector<1x16x128xbf16>
    %6 = vector.shape_cast %5 : vector<1x16x128xbf16> to vector<16x128xbf16>
    %7 = vector.shape_cast %4 : vector<16x128xbf16> to vector<1x16x128xbf16>
    tpu.vector_store %arg3[%c0_4, %c0_5, %c0_6], %7 {strides = array<i32>} : memref<1x16x128xbf16, #tpu.memory_space<vmem>>, vector<1x16x128xbf16>,
    return
  }
  func.func @transform_0(%arg0: i32) -> (i32, i32, i32) {
    %c0_i32 = arith.constant 0 : i32
    %c0_i32_0 = arith.constant 0 : i32
    %c0_i32_1 = arith.constant 0 : i32
    return %arg0, %c0_i32, %c0_i32_0 : i32, i32, i32
  }
  func.func @transform_1(%arg0: i32) -> (i32, i32) {
    %c0_i32 = arith.constant 0 : i32
    %c0_i32_0 = arith.constant 0 : i32
    %c0_i32_1 = arith.constant 0 : i32
    return %c0_i32, %c0_i32_0 : i32, i32
  }
  func.func @transform_2(%arg0: i32) -> (i32, i32, i32) {
    %c0_i32 = arith.constant 0 : i32
    %c0_i32_0 = arith.constant 0 : i32
    %c0_i32_1 = arith.constant 0 : i32
    return %arg0, %c0_i32, %c0_i32_0 : i32, i32, i32
  }
}

module attributes {stable_mosaic.version = 11 : i64} {
  func.func @_convT_kernel(%arg0: i32, %arg1: memref<1x32x128xbf16, #tpu.memory_space<vmem>>, %arg2: memref<2x16x65xbf16, #tpu.memory_space<vmem>>, %arg3: memref<1x2x16x128xbf16, #tpu.memory_space<vmem>>) attributes {dimension_semantics = [#tpu.dimension_semantics<parallel>], iteration_bounds = array<i64: 2>, scalar_prefetch = 0 : i64, scratch_operands = 0 : i64, tpu.core_type = #tpu.core_type<tc>, window_params = [{transform_indices = @transform_0, window_bounds = array<i64: 1, 32, 128>}, {pipeline_mode = #tpu.pipeline_mode<synchronous>, transform_indices = @transform_1, window_bounds = array<i64: 2, 16, 65>}, {transform_indices = @transform_2, window_bounds = array<i64: 1, 2, 16, 128>}]} {
    %c0 = arith.constant 0 : index
    %c0_0 = arith.constant 0 : index
    %c0_1 = arith.constant 0 : index
    %0 = vector.load %arg1[%c0, %c0_0, %c0_1] : memref<1x32x128xbf16, #tpu.memory_space<vmem>>, vector<1x32x128xbf16>
    %1 = vector.shape_cast %0 : vector<1x32x128xbf16> to vector<32x128xbf16>
    %cst = arith.constant 0.000000e+00 : bf16
    %2 = vector.broadcast %cst : bf16 to vector<32x1xbf16>
    %cst_2 = arith.constant 0.000000e+00 : bf16
    %3 = vector.broadcast %cst_2 : bf16 to vector<32x1xbf16>
    %4 = tpu.concatenate %2, %1, %3 in 1 : vector<32x1xbf16>, vector<32x128xbf16>, vector<32x1xbf16> -> vector<32x130xbf16>
    %cst_3 = arith.constant 1.000000e+00 : bf16
    %5 = vector.broadcast %cst_3 : bf16 to vector<1x128xbf16>
    %6 = vector.extract_strided_slice %4 {offsets = [0, 1], sizes = [32, 128], strides = [1, 1]} : vector<32x130xbf16> to vector<32x128xbf16>
    %7 = vector.extract_strided_slice %4 {offsets = [0, 0], sizes = [32, 128], strides = [1, 1]} : vector<32x130xbf16> to vector<32x128xbf16>
    %8 = tpu.concatenate %6, %7, %5 in 0 : vector<32x128xbf16>, vector<32x128xbf16>, vector<1x128xbf16> -> vector<65x128xbf16>
    %c0_4 = arith.constant 0 : index
    %c0_5 = arith.constant 0 : index
    %c0_6 = arith.constant 0 : index
    %9 = vector.load %arg2[%c0_4, %c0_5, %c0_6] : memref<2x16x65xbf16, #tpu.memory_space<vmem>>, vector<1x16x65xbf16>
    %10 = vector.shape_cast %9 : vector<1x16x65xbf16> to vector<16x65xbf16>
    %cst_7 = arith.constant dense<0.000000e+00> : vector<16x128xf32>
    %11 = tpu.matmul %10, %8, %cst_7 {dimension_numbers = #tpu.dot_dimension_numbers<[1], [0], [0], [1], [0, 0, 1, 1], [], []>} : vector<16x65xbf16>, vector<65x128xbf16>, vector<16x128xf32> -> vector<16x128xf32>
    %cst_8 = arith.constant 0.000000e+00 : f32
    %12 = vector.broadcast %cst_8 : f32 to vector<16x128xf32>
    %13 = arith.cmpf oge, %11, %12 : vector<16x128xf32>
    %cst_9 = arith.constant 1.000000e-01 : f32
    %14 = vector.broadcast %cst_9 : f32 to vector<16x128xf32>
    %15 = arith.mulf %14, %11 : vector<16x128xf32>
    %16 = arith.select %13, %11, %15 : vector<16x128xi1>, vector<16x128xf32>
    %17 = tpu.iota {dimensions = array<i32: 1>} : vector<16x128xi32>
    %c8_i32 = arith.constant 8 : i32
    %18 = vector.broadcast %c8_i32 : i32 to vector<16x128xi32>
    %19 = arith.cmpi slt, %17, %18 : vector<16x128xi32>
    %cst_10 = arith.constant 0.000000e+00 : f32
    %20 = vector.broadcast %cst_10 : f32 to vector<16x128xf32>
    %21 = arith.select %19, %16, %20 : vector<16x128xi1>, vector<16x128xf32>
    %22 = arith.truncf %21 : vector<16x128xf32> to vector<16x128xbf16>
    %c0_11 = arith.constant 0 : index
    %c0_12 = arith.constant 0 : index
    %c0_13 = arith.constant 0 : index
    %c0_14 = arith.constant 0 : index
    %23 = vector.load %arg3[%c0_11, %c0_12, %c0_13, %c0_14] : memref<1x2x16x128xbf16, #tpu.memory_space<vmem>>, vector<1x1x16x128xbf16>
    %24 = vector.shape_cast %23 : vector<1x1x16x128xbf16> to vector<16x128xbf16>
    %25 = vector.shape_cast %22 : vector<16x128xbf16> to vector<1x1x16x128xbf16>
    tpu.vector_store %arg3[%c0_11, %c0_12, %c0_13, %c0_14], %25 {strides = array<i32>} : memref<1x2x16x128xbf16, #tpu.memory_space<vmem>>, vector<1x1x16x128xbf16>,
    %26 = vector.extract_strided_slice %4 {offsets = [0, 2], sizes = [32, 128], strides = [1, 1]} : vector<32x130xbf16> to vector<32x128xbf16>
    %27 = vector.extract_strided_slice %4 {offsets = [0, 1], sizes = [32, 128], strides = [1, 1]} : vector<32x130xbf16> to vector<32x128xbf16>
    %28 = tpu.concatenate %26, %27, %5 in 0 : vector<32x128xbf16>, vector<32x128xbf16>, vector<1x128xbf16> -> vector<65x128xbf16>
    %c1 = arith.constant 1 : index
    %c0_15 = arith.constant 0 : index
    %c0_16 = arith.constant 0 : index
    %29 = vector.load %arg2[%c1, %c0_15, %c0_16] : memref<2x16x65xbf16, #tpu.memory_space<vmem>>, vector<1x16x65xbf16>
    %30 = vector.shape_cast %29 : vector<1x16x65xbf16> to vector<16x65xbf16>
    %cst_17 = arith.constant dense<0.000000e+00> : vector<16x128xf32>
    %31 = tpu.matmul %30, %28, %cst_17 {dimension_numbers = #tpu.dot_dimension_numbers<[1], [0], [0], [1], [0, 0, 1, 1], [], []>} : vector<16x65xbf16>, vector<65x128xbf16>, vector<16x128xf32> -> vector<16x128xf32>
    %cst_18 = arith.constant 0.000000e+00 : f32
    %32 = vector.broadcast %cst_18 : f32 to vector<16x128xf32>
    %33 = arith.cmpf oge, %31, %32 : vector<16x128xf32>
    %cst_19 = arith.constant 1.000000e-01 : f32
    %34 = vector.broadcast %cst_19 : f32 to vector<16x128xf32>
    %35 = arith.mulf %34, %31 : vector<16x128xf32>
    %36 = arith.select %33, %31, %35 : vector<16x128xi1>, vector<16x128xf32>
    %37 = tpu.iota {dimensions = array<i32: 1>} : vector<16x128xi32>
    %c8_i32_20 = arith.constant 8 : i32
    %38 = vector.broadcast %c8_i32_20 : i32 to vector<16x128xi32>
    %39 = arith.cmpi slt, %37, %38 : vector<16x128xi32>
    %cst_21 = arith.constant 0.000000e+00 : f32
    %40 = vector.broadcast %cst_21 : f32 to vector<16x128xf32>
    %41 = arith.select %39, %36, %40 : vector<16x128xi1>, vector<16x128xf32>
    %42 = arith.truncf %41 : vector<16x128xf32> to vector<16x128xbf16>
    %c0_22 = arith.constant 0 : index
    %c1_23 = arith.constant 1 : index
    %c0_24 = arith.constant 0 : index
    %c0_25 = arith.constant 0 : index
    %43 = vector.load %arg3[%c0_22, %c1_23, %c0_24, %c0_25] : memref<1x2x16x128xbf16, #tpu.memory_space<vmem>>, vector<1x1x16x128xbf16>
    %44 = vector.shape_cast %43 : vector<1x1x16x128xbf16> to vector<16x128xbf16>
    %45 = vector.shape_cast %42 : vector<16x128xbf16> to vector<1x1x16x128xbf16>
    tpu.vector_store %arg3[%c0_22, %c1_23, %c0_24, %c0_25], %45 {strides = array<i32>} : memref<1x2x16x128xbf16, #tpu.memory_space<vmem>>, vector<1x1x16x128xbf16>,
    return
  }
  func.func @transform_0(%arg0: i32) -> (i32, i32, i32) {
    %c0_i32 = arith.constant 0 : i32
    %c0_i32_0 = arith.constant 0 : i32
    %c0_i32_1 = arith.constant 0 : i32
    return %arg0, %c0_i32, %c0_i32_0 : i32, i32, i32
  }
  func.func @transform_1(%arg0: i32) -> (i32, i32, i32) {
    %c0_i32 = arith.constant 0 : i32
    %c0_i32_0 = arith.constant 0 : i32
    %c0_i32_1 = arith.constant 0 : i32
    %c0_i32_2 = arith.constant 0 : i32
    return %c0_i32, %c0_i32_0, %c0_i32_1 : i32, i32, i32
  }
  func.func @transform_2(%arg0: i32) -> (i32, i32, i32, i32) {
    %c0_i32 = arith.constant 0 : i32
    %c0_i32_0 = arith.constant 0 : i32
    %c0_i32_1 = arith.constant 0 : i32
    %c0_i32_2 = arith.constant 0 : i32
    return %arg0, %c0_i32, %c0_i32_0, %c0_i32_1 : i32, i32, i32, i32
  }
}

module attributes {stable_mosaic.version = 11 : i64} {
  func.func @_convT_kernel(%arg0: i32, %arg1: memref<1x16x256xbf16, #tpu.memory_space<vmem>>, %arg2: memref<2x8x33xbf16, #tpu.memory_space<vmem>>, %arg3: memref<1x2x8x256xbf16, #tpu.memory_space<vmem>>) attributes {dimension_semantics = [#tpu.dimension_semantics<parallel>], iteration_bounds = array<i64: 2>, scalar_prefetch = 0 : i64, scratch_operands = 0 : i64, tpu.core_type = #tpu.core_type<tc>, window_params = [{transform_indices = @transform_0, window_bounds = array<i64: 1, 16, 256>}, {pipeline_mode = #tpu.pipeline_mode<synchronous>, transform_indices = @transform_1, window_bounds = array<i64: 2, 8, 33>}, {transform_indices = @transform_2, window_bounds = array<i64: 1, 2, 8, 256>}]} {
    %c0 = arith.constant 0 : index
    %c0_0 = arith.constant 0 : index
    %c0_1 = arith.constant 0 : index
    %0 = vector.load %arg1[%c0, %c0_0, %c0_1] : memref<1x16x256xbf16, #tpu.memory_space<vmem>>, vector<1x16x256xbf16>
    %1 = vector.shape_cast %0 : vector<1x16x256xbf16> to vector<16x256xbf16>
    %cst = arith.constant 0.000000e+00 : bf16
    %2 = vector.broadcast %cst : bf16 to vector<16x1xbf16>
    %cst_2 = arith.constant 0.000000e+00 : bf16
    %3 = vector.broadcast %cst_2 : bf16 to vector<16x1xbf16>
    %4 = tpu.concatenate %2, %1, %3 in 1 : vector<16x1xbf16>, vector<16x256xbf16>, vector<16x1xbf16> -> vector<16x258xbf16>
    %cst_3 = arith.constant 1.000000e+00 : bf16
    %5 = vector.broadcast %cst_3 : bf16 to vector<1x256xbf16>
    %6 = vector.extract_strided_slice %4 {offsets = [0, 1], sizes = [16, 256], strides = [1, 1]} : vector<16x258xbf16> to vector<16x256xbf16>
    %7 = vector.extract_strided_slice %4 {offsets = [0, 0], sizes = [16, 256], strides = [1, 1]} : vector<16x258xbf16> to vector<16x256xbf16>
    %8 = tpu.concatenate %6, %7, %5 in 0 : vector<16x256xbf16>, vector<16x256xbf16>, vector<1x256xbf16> -> vector<33x256xbf16>
    %c0_4 = arith.constant 0 : index
    %c0_5 = arith.constant 0 : index
    %c0_6 = arith.constant 0 : index
    %9 = vector.load %arg2[%c0_4, %c0_5, %c0_6] : memref<2x8x33xbf16, #tpu.memory_space<vmem>>, vector<1x8x33xbf16>
    %10 = vector.shape_cast %9 : vector<1x8x33xbf16> to vector<8x33xbf16>
    %cst_7 = arith.constant dense<0.000000e+00> : vector<8x256xf32>
    %11 = tpu.matmul %10, %8, %cst_7 {dimension_numbers = #tpu.dot_dimension_numbers<[1], [0], [0], [1], [0, 0, 1, 1], [], []>} : vector<8x33xbf16>, vector<33x256xbf16>, vector<8x256xf32> -> vector<8x256xf32>
    %cst_8 = arith.constant 0.000000e+00 : f32
    %12 = vector.broadcast %cst_8 : f32 to vector<8x256xf32>
    %13 = arith.cmpf oge, %11, %12 : vector<8x256xf32>
    %cst_9 = arith.constant 1.000000e-01 : f32
    %14 = vector.broadcast %cst_9 : f32 to vector<8x256xf32>
    %15 = arith.mulf %14, %11 : vector<8x256xf32>
    %16 = arith.select %13, %11, %15 : vector<8x256xi1>, vector<8x256xf32>
    %17 = tpu.iota {dimensions = array<i32: 1>} : vector<8x256xi32>
    %c16_i32 = arith.constant 16 : i32
    %18 = vector.broadcast %c16_i32 : i32 to vector<8x256xi32>
    %19 = arith.cmpi slt, %17, %18 : vector<8x256xi32>
    %cst_10 = arith.constant 0.000000e+00 : f32
    %20 = vector.broadcast %cst_10 : f32 to vector<8x256xf32>
    %21 = arith.select %19, %16, %20 : vector<8x256xi1>, vector<8x256xf32>
    %22 = arith.truncf %21 : vector<8x256xf32> to vector<8x256xbf16>
    %c0_11 = arith.constant 0 : index
    %c0_12 = arith.constant 0 : index
    %c0_13 = arith.constant 0 : index
    %c0_14 = arith.constant 0 : index
    %23 = vector.load %arg3[%c0_11, %c0_12, %c0_13, %c0_14] : memref<1x2x8x256xbf16, #tpu.memory_space<vmem>>, vector<1x1x8x256xbf16>
    %24 = vector.shape_cast %23 : vector<1x1x8x256xbf16> to vector<8x256xbf16>
    %25 = vector.shape_cast %22 : vector<8x256xbf16> to vector<1x1x8x256xbf16>
    tpu.vector_store %arg3[%c0_11, %c0_12, %c0_13, %c0_14], %25 {strides = array<i32>} : memref<1x2x8x256xbf16, #tpu.memory_space<vmem>>, vector<1x1x8x256xbf16>,
    %26 = vector.extract_strided_slice %4 {offsets = [0, 2], sizes = [16, 256], strides = [1, 1]} : vector<16x258xbf16> to vector<16x256xbf16>
    %27 = vector.extract_strided_slice %4 {offsets = [0, 1], sizes = [16, 256], strides = [1, 1]} : vector<16x258xbf16> to vector<16x256xbf16>
    %28 = tpu.concatenate %26, %27, %5 in 0 : vector<16x256xbf16>, vector<16x256xbf16>, vector<1x256xbf16> -> vector<33x256xbf16>
    %c1 = arith.constant 1 : index
    %c0_15 = arith.constant 0 : index
    %c0_16 = arith.constant 0 : index
    %29 = vector.load %arg2[%c1, %c0_15, %c0_16] : memref<2x8x33xbf16, #tpu.memory_space<vmem>>, vector<1x8x33xbf16>
    %30 = vector.shape_cast %29 : vector<1x8x33xbf16> to vector<8x33xbf16>
    %cst_17 = arith.constant dense<0.000000e+00> : vector<8x256xf32>
    %31 = tpu.matmul %30, %28, %cst_17 {dimension_numbers = #tpu.dot_dimension_numbers<[1], [0], [0], [1], [0, 0, 1, 1], [], []>} : vector<8x33xbf16>, vector<33x256xbf16>, vector<8x256xf32> -> vector<8x256xf32>
    %cst_18 = arith.constant 0.000000e+00 : f32
    %32 = vector.broadcast %cst_18 : f32 to vector<8x256xf32>
    %33 = arith.cmpf oge, %31, %32 : vector<8x256xf32>
    %cst_19 = arith.constant 1.000000e-01 : f32
    %34 = vector.broadcast %cst_19 : f32 to vector<8x256xf32>
    %35 = arith.mulf %34, %31 : vector<8x256xf32>
    %36 = arith.select %33, %31, %35 : vector<8x256xi1>, vector<8x256xf32>
    %37 = tpu.iota {dimensions = array<i32: 1>} : vector<8x256xi32>
    %c16_i32_20 = arith.constant 16 : i32
    %38 = vector.broadcast %c16_i32_20 : i32 to vector<8x256xi32>
    %39 = arith.cmpi slt, %37, %38 : vector<8x256xi32>
    %cst_21 = arith.constant 0.000000e+00 : f32
    %40 = vector.broadcast %cst_21 : f32 to vector<8x256xf32>
    %41 = arith.select %39, %36, %40 : vector<8x256xi1>, vector<8x256xf32>
    %42 = arith.truncf %41 : vector<8x256xf32> to vector<8x256xbf16>
    %c0_22 = arith.constant 0 : index
    %c1_23 = arith.constant 1 : index
    %c0_24 = arith.constant 0 : index
    %c0_25 = arith.constant 0 : index
    %43 = vector.load %arg3[%c0_22, %c1_23, %c0_24, %c0_25] : memref<1x2x8x256xbf16, #tpu.memory_space<vmem>>, vector<1x1x8x256xbf16>
    %44 = vector.shape_cast %43 : vector<1x1x8x256xbf16> to vector<8x256xbf16>
    %45 = vector.shape_cast %42 : vector<8x256xbf16> to vector<1x1x8x256xbf16>
    tpu.vector_store %arg3[%c0_22, %c1_23, %c0_24, %c0_25], %45 {strides = array<i32>} : memref<1x2x8x256xbf16, #tpu.memory_space<vmem>>, vector<1x1x8x256xbf16>,
    return
  }
  func.func @transform_0(%arg0: i32) -> (i32, i32, i32) {
    %c0_i32 = arith.constant 0 : i32
    %c0_i32_0 = arith.constant 0 : i32
    %c0_i32_1 = arith.constant 0 : i32
    return %arg0, %c0_i32, %c0_i32_0 : i32, i32, i32
  }
  func.func @transform_1(%arg0: i32) -> (i32, i32, i32) {
    %c0_i32 = arith.constant 0 : i32
    %c0_i32_0 = arith.constant 0 : i32
    %c0_i32_1 = arith.constant 0 : i32
    %c0_i32_2 = arith.constant 0 : i32
    return %c0_i32, %c0_i32_0, %c0_i32_1 : i32, i32, i32
  }
  func.func @transform_2(%arg0: i32) -> (i32, i32, i32, i32) {
    %c0_i32 = arith.constant 0 : i32
    %c0_i32_0 = arith.constant 0 : i32
    %c0_i32_1 = arith.constant 0 : i32
    %c0_i32_2 = arith.constant 0 : i32
    return %arg0, %c0_i32, %c0_i32_0, %c0_i32_1 : i32, i32, i32, i32
  }
}

module attributes {stable_mosaic.version = 11 : i64} {
  func.func @_resblock_kernel(%arg0: i32, %arg1: memref<1x16x256xbf16, #tpu.memory_space<vmem>>, %arg2: memref<4x16x49xbf16, #tpu.memory_space<vmem>>, %arg3: memref<1x16x256xbf16, #tpu.memory_space<vmem>>) attributes {dimension_semantics = [#tpu.dimension_semantics<parallel>], iteration_bounds = array<i64: 2>, scalar_prefetch = 0 : i64, scratch_operands = 0 : i64, tpu.core_type = #tpu.core_type<tc>, window_params = [{transform_indices = @transform_0, window_bounds = array<i64: 1, 16, 256>}, {pipeline_mode = #tpu.pipeline_mode<synchronous>, transform_indices = @transform_1, window_bounds = array<i64: 4, 16, 49>}, {transform_indices = @transform_2, window_bounds = array<i64: 1, 16, 256>}]} {
    %c0 = arith.constant 0 : index
    %c0_0 = arith.constant 0 : index
    %c0_1 = arith.constant 0 : index
    %0 = vector.load %arg1[%c0, %c0_0, %c0_1] : memref<1x16x256xbf16, #tpu.memory_space<vmem>>, vector<1x16x256xbf16>
    %1 = vector.shape_cast %0 : vector<1x16x256xbf16> to vector<16x256xbf16>
    %2 = arith.extf %1 : vector<16x256xbf16> to vector<16x256xf32>
    %cst = arith.constant 0.000000e+00 : f32
    %3 = vector.broadcast %cst : f32 to vector<16x256xf32>
    %4 = arith.cmpf oge, %2, %3 : vector<16x256xf32>
    %cst_2 = arith.constant 1.000000e-01 : f32
    %5 = vector.broadcast %cst_2 : f32 to vector<16x256xf32>
    %6 = arith.mulf %5, %2 : vector<16x256xf32>
    %7 = arith.select %4, %2, %6 : vector<16x256xi1>, vector<16x256xf32>
    %8 = arith.truncf %7 : vector<16x256xf32> to vector<16x256xbf16>
    %c0_3 = arith.constant 0 : index
    %c0_4 = arith.constant 0 : index
    %c0_5 = arith.constant 0 : index
    %9 = vector.load %arg2[%c0_3, %c0_4, %c0_5] : memref<4x16x49xbf16, #tpu.memory_space<vmem>>, vector<1x16x49xbf16>
    %10 = vector.shape_cast %9 : vector<1x16x49xbf16> to vector<16x49xbf16>
    %cst_6 = arith.constant 0.000000e+00 : bf16
    %11 = vector.broadcast %cst_6 : bf16 to vector<16x1xbf16>
    %12 = tpu.concatenate %11, %8, %11 in 1 : vector<16x1xbf16>, vector<16x256xbf16>, vector<16x1xbf16> -> vector<16x258xbf16>
    %13 = vector.extract_strided_slice %12 {offsets = [0, 0], sizes = [16, 256], strides = [1, 1]} : vector<16x258xbf16> to vector<16x256xbf16>
    %14 = vector.extract_strided_slice %12 {offsets = [0, 1], sizes = [16, 256], strides = [1, 1]} : vector<16x258xbf16> to vector<16x256xbf16>
    %15 = vector.extract_strided_slice %12 {offsets = [0, 2], sizes = [16, 256], strides = [1, 1]} : vector<16x258xbf16> to vector<16x256xbf16>
    %cst_7 = arith.constant 1.000000e+00 : bf16
    %16 = vector.broadcast %cst_7 : bf16 to vector<1x256xbf16>
    %17 = tpu.concatenate %13, %14, %15, %16 in 0 : vector<16x256xbf16>, vector<16x256xbf16>, vector<16x256xbf16>, vector<1x256xbf16> -> vector<49x256xbf16>
    %cst_8 = arith.constant dense<0.000000e+00> : vector<16x256xf32>
    %18 = tpu.matmul %10, %17, %cst_8 {dimension_numbers = #tpu.dot_dimension_numbers<[1], [0], [0], [1], [0, 0, 1, 1], [], []>} : vector<16x49xbf16>, vector<49x256xbf16>, vector<16x256xf32> -> vector<16x256xf32>
    %19 = tpu.iota {dimensions = array<i32: 1>} : vector<16x256xi32>
    %c16_i32 = arith.constant 16 : i32
    %20 = vector.broadcast %c16_i32 : i32 to vector<16x256xi32>
    %21 = arith.cmpi slt, %19, %20 : vector<16x256xi32>
    %cst_9 = arith.constant 0.000000e+00 : f32
    %22 = vector.broadcast %cst_9 : f32 to vector<16x256xf32>
    %23 = arith.select %21, %18, %22 : vector<16x256xi1>, vector<16x256xf32>
    %cst_10 = arith.constant 0.000000e+00 : f32
    %24 = vector.broadcast %cst_10 : f32 to vector<16x256xf32>
    %25 = arith.cmpf oge, %23, %24 : vector<16x256xf32>
    %cst_11 = arith.constant 1.000000e-01 : f32
    %26 = vector.broadcast %cst_11 : f32 to vector<16x256xf32>
    %27 = arith.mulf %26, %23 : vector<16x256xf32>
    %28 = arith.select %25, %23, %27 : vector<16x256xi1>, vector<16x256xf32>
    %29 = arith.truncf %28 : vector<16x256xf32> to vector<16x256xbf16>
    %c1 = arith.constant 1 : index
    %c0_12 = arith.constant 0 : index
    %c0_13 = arith.constant 0 : index
    %30 = vector.load %arg2[%c1, %c0_12, %c0_13] : memref<4x16x49xbf16, #tpu.memory_space<vmem>>, vector<1x16x49xbf16>
    %31 = vector.shape_cast %30 : vector<1x16x49xbf16> to vector<16x49xbf16>
    %cst_14 = arith.constant 0.000000e+00 : bf16
    %32 = vector.broadcast %cst_14 : bf16 to vector<16x1xbf16>
    %33 = tpu.concatenate %32, %29, %32 in 1 : vector<16x1xbf16>, vector<16x256xbf16>, vector<16x1xbf16> -> vector<16x258xbf16>
    %34 = vector.extract_strided_slice %33 {offsets = [0, 0], sizes = [16, 256], strides = [1, 1]} : vector<16x258xbf16> to vector<16x256xbf16>
    %35 = vector.extract_strided_slice %33 {offsets = [0, 1], sizes = [16, 256], strides = [1, 1]} : vector<16x258xbf16> to vector<16x256xbf16>
    %36 = vector.extract_strided_slice %33 {offsets = [0, 2], sizes = [16, 256], strides = [1, 1]} : vector<16x258xbf16> to vector<16x256xbf16>
    %cst_15 = arith.constant 1.000000e+00 : bf16
    %37 = vector.broadcast %cst_15 : bf16 to vector<1x256xbf16>
    %38 = tpu.concatenate %34, %35, %36, %37 in 0 : vector<16x256xbf16>, vector<16x256xbf16>, vector<16x256xbf16>, vector<1x256xbf16> -> vector<49x256xbf16>
    %cst_16 = arith.constant dense<0.000000e+00> : vector<16x256xf32>
    %39 = tpu.matmul %31, %38, %cst_16 {dimension_numbers = #tpu.dot_dimension_numbers<[1], [0], [0], [1], [0, 0, 1, 1], [], []>} : vector<16x49xbf16>, vector<49x256xbf16>, vector<16x256xf32> -> vector<16x256xf32>
    %40 = tpu.iota {dimensions = array<i32: 1>} : vector<16x256xi32>
    %c16_i32_17 = arith.constant 16 : i32
    %41 = vector.broadcast %c16_i32_17 : i32 to vector<16x256xi32>
    %42 = arith.cmpi slt, %40, %41 : vector<16x256xi32>
    %cst_18 = arith.constant 0.000000e+00 : f32
    %43 = vector.broadcast %cst_18 : f32 to vector<16x256xf32>
    %44 = arith.select %42, %39, %43 : vector<16x256xi1>, vector<16x256xf32>
    %45 = arith.addf %2, %44 : vector<16x256xf32>
    %cst_19 = arith.constant 0.000000e+00 : f32
    %46 = vector.broadcast %cst_19 : f32 to vector<16x256xf32>
    %47 = arith.cmpf oge, %45, %46 : vector<16x256xf32>
    %cst_20 = arith.constant 1.000000e-01 : f32
    %48 = vector.broadcast %cst_20 : f32 to vector<16x256xf32>
    %49 = arith.mulf %48, %45 : vector<16x256xf32>
    %50 = arith.select %47, %45, %49 : vector<16x256xi1>, vector<16x256xf32>
    %51 = arith.truncf %50 : vector<16x256xf32> to vector<16x256xbf16>
    %c2 = arith.constant 2 : index
    %c0_21 = arith.constant 0 : index
    %c0_22 = arith.constant 0 : index
    %52 = vector.load %arg2[%c2, %c0_21, %c0_22] : memref<4x16x49xbf16, #tpu.memory_space<vmem>>, vector<1x16x49xbf16>
    %53 = vector.shape_cast %52 : vector<1x16x49xbf16> to vector<16x49xbf16>
    %cst_23 = arith.constant 0.000000e+00 : bf16
    %54 = vector.broadcast %cst_23 : bf16 to vector<16x3xbf16>
    %55 = tpu.concatenate %54, %51, %54 in 1 : vector<16x3xbf16>, vector<16x256xbf16>, vector<16x3xbf16> -> vector<16x262xbf16>
    %56 = vector.extract_strided_slice %55 {offsets = [0, 0], sizes = [16, 256], strides = [1, 1]} : vector<16x262xbf16> to vector<16x256xbf16>
    %57 = vector.extract_strided_slice %55 {offsets = [0, 3], sizes = [16, 256], strides = [1, 1]} : vector<16x262xbf16> to vector<16x256xbf16>
    %58 = vector.extract_strided_slice %55 {offsets = [0, 6], sizes = [16, 256], strides = [1, 1]} : vector<16x262xbf16> to vector<16x256xbf16>
    %cst_24 = arith.constant 1.000000e+00 : bf16
    %59 = vector.broadcast %cst_24 : bf16 to vector<1x256xbf16>
    %60 = tpu.concatenate %56, %57, %58, %59 in 0 : vector<16x256xbf16>, vector<16x256xbf16>, vector<16x256xbf16>, vector<1x256xbf16> -> vector<49x256xbf16>
    %cst_25 = arith.constant dense<0.000000e+00> : vector<16x256xf32>
    %61 = tpu.matmul %53, %60, %cst_25 {dimension_numbers = #tpu.dot_dimension_numbers<[1], [0], [0], [1], [0, 0, 1, 1], [], []>} : vector<16x49xbf16>, vector<49x256xbf16>, vector<16x256xf32> -> vector<16x256xf32>
    %62 = tpu.iota {dimensions = array<i32: 1>} : vector<16x256xi32>
    %c16_i32_26 = arith.constant 16 : i32
    %63 = vector.broadcast %c16_i32_26 : i32 to vector<16x256xi32>
    %64 = arith.cmpi slt, %62, %63 : vector<16x256xi32>
    %cst_27 = arith.constant 0.000000e+00 : f32
    %65 = vector.broadcast %cst_27 : f32 to vector<16x256xf32>
    %66 = arith.select %64, %61, %65 : vector<16x256xi1>, vector<16x256xf32>
    %cst_28 = arith.constant 0.000000e+00 : f32
    %67 = vector.broadcast %cst_28 : f32 to vector<16x256xf32>
    %68 = arith.cmpf oge, %66, %67 : vector<16x256xf32>
    %cst_29 = arith.constant 1.000000e-01 : f32
    %69 = vector.broadcast %cst_29 : f32 to vector<16x256xf32>
    %70 = arith.mulf %69, %66 : vector<16x256xf32>
    %71 = arith.select %68, %66, %70 : vector<16x256xi1>, vector<16x256xf32>
    %72 = arith.truncf %71 : vector<16x256xf32> to vector<16x256xbf16>
    %c3 = arith.constant 3 : index
    %c0_30 = arith.constant 0 : index
    %c0_31 = arith.constant 0 : index
    %73 = vector.load %arg2[%c3, %c0_30, %c0_31] : memref<4x16x49xbf16, #tpu.memory_space<vmem>>, vector<1x16x49xbf16>
    %74 = vector.shape_cast %73 : vector<1x16x49xbf16> to vector<16x49xbf16>
    %cst_32 = arith.constant 0.000000e+00 : bf16
    %75 = vector.broadcast %cst_32 : bf16 to vector<16x1xbf16>
    %76 = tpu.concatenate %75, %72, %75 in 1 : vector<16x1xbf16>, vector<16x256xbf16>, vector<16x1xbf16> -> vector<16x258xbf16>
    %77 = vector.extract_strided_slice %76 {offsets = [0, 0], sizes = [16, 256], strides = [1, 1]} : vector<16x258xbf16> to vector<16x256xbf16>
    %78 = vector.extract_strided_slice %76 {offsets = [0, 1], sizes = [16, 256], strides = [1, 1]} : vector<16x258xbf16> to vector<16x256xbf16>
    %79 = vector.extract_strided_slice %76 {offsets = [0, 2], sizes = [16, 256], strides = [1, 1]} : vector<16x258xbf16> to vector<16x256xbf16>
    %cst_33 = arith.constant 1.000000e+00 : bf16
    %80 = vector.broadcast %cst_33 : bf16 to vector<1x256xbf16>
    %81 = tpu.concatenate %77, %78, %79, %80 in 0 : vector<16x256xbf16>, vector<16x256xbf16>, vector<16x256xbf16>, vector<1x256xbf16> -> vector<49x256xbf16>
    %cst_34 = arith.constant dense<0.000000e+00> : vector<16x256xf32>
    %82 = tpu.matmul %74, %81, %cst_34 {dimension_numbers = #tpu.dot_dimension_numbers<[1], [0], [0], [1], [0, 0, 1, 1], [], []>} : vector<16x49xbf16>, vector<49x256xbf16>, vector<16x256xf32> -> vector<16x256xf32>
    %83 = tpu.iota {dimensions = array<i32: 1>} : vector<16x256xi32>
    %c16_i32_35 = arith.constant 16 : i32
    %84 = vector.broadcast %c16_i32_35 : i32 to vector<16x256xi32>
    %85 = arith.cmpi slt, %83, %84 : vector<16x256xi32>
    %cst_36 = arith.constant 0.000000e+00 : f32
    %86 = vector.broadcast %cst_36 : f32 to vector<16x256xf32>
    %87 = arith.select %85, %82, %86 : vector<16x256xi1>, vector<16x256xf32>
    %88 = arith.addf %45, %87 : vector<16x256xf32>
    %89 = arith.truncf %88 : vector<16x256xf32> to vector<16x256xbf16>
    %c0_37 = arith.constant 0 : index
    %c0_38 = arith.constant 0 : index
    %c0_39 = arith.constant 0 : index
    %90 = vector.load %arg3[%c0_37, %c0_38, %c0_39] : memref<1x16x256xbf16, #tpu.memory_space<vmem>>, vector<1x16x256xbf16>
    %91 = vector.shape_cast %90 : vector<1x16x256xbf16> to vector<16x256xbf16>
    %92 = vector.shape_cast %89 : vector<16x256xbf16> to vector<1x16x256xbf16>
    tpu.vector_store %arg3[%c0_37, %c0_38, %c0_39], %92 {strides = array<i32>} : memref<1x16x256xbf16, #tpu.memory_space<vmem>>, vector<1x16x256xbf16>,
    return
  }
  func.func @transform_0(%arg0: i32) -> (i32, i32, i32) {
    %c0_i32 = arith.constant 0 : i32
    %c0_i32_0 = arith.constant 0 : i32
    %c0_i32_1 = arith.constant 0 : i32
    return %arg0, %c0_i32, %c0_i32_0 : i32, i32, i32
  }
  func.func @transform_1(%arg0: i32) -> (i32, i32, i32) {
    %c0_i32 = arith.constant 0 : i32
    %c0_i32_0 = arith.constant 0 : i32
    %c0_i32_1 = arith.constant 0 : i32
    %c0_i32_2 = arith.constant 0 : i32
    return %c0_i32, %c0_i32_0, %c0_i32_1 : i32, i32, i32
  }
  func.func @transform_2(%arg0: i32) -> (i32, i32, i32) {
    %c0_i32 = arith.constant 0 : i32
    %c0_i32_0 = arith.constant 0 : i32
    %c0_i32_1 = arith.constant 0 : i32
    return %arg0, %c0_i32, %c0_i32_0 : i32, i32, i32
  }
}

module attributes {stable_mosaic.version = 11 : i64} {
  func.func @_resblock_kernel(%arg0: i32, %arg1: memref<1x8x512xbf16, #tpu.memory_space<vmem>>, %arg2: memref<4x8x25xbf16, #tpu.memory_space<vmem>>, %arg3: memref<1x8x512xbf16, #tpu.memory_space<vmem>>) attributes {dimension_semantics = [#tpu.dimension_semantics<parallel>], iteration_bounds = array<i64: 2>, scalar_prefetch = 0 : i64, scratch_operands = 0 : i64, tpu.core_type = #tpu.core_type<tc>, window_params = [{transform_indices = @transform_0, window_bounds = array<i64: 1, 8, 512>}, {pipeline_mode = #tpu.pipeline_mode<synchronous>, transform_indices = @transform_1, window_bounds = array<i64: 4, 8, 25>}, {transform_indices = @transform_2, window_bounds = array<i64: 1, 8, 512>}]} {
    %c0 = arith.constant 0 : index
    %c0_0 = arith.constant 0 : index
    %c0_1 = arith.constant 0 : index
    %0 = vector.load %arg1[%c0, %c0_0, %c0_1] : memref<1x8x512xbf16, #tpu.memory_space<vmem>>, vector<1x8x512xbf16>
    %1 = vector.shape_cast %0 : vector<1x8x512xbf16> to vector<8x512xbf16>
    %2 = arith.extf %1 : vector<8x512xbf16> to vector<8x512xf32>
    %cst = arith.constant 0.000000e+00 : f32
    %3 = vector.broadcast %cst : f32 to vector<8x512xf32>
    %4 = arith.cmpf oge, %2, %3 : vector<8x512xf32>
    %cst_2 = arith.constant 1.000000e-01 : f32
    %5 = vector.broadcast %cst_2 : f32 to vector<8x512xf32>
    %6 = arith.mulf %5, %2 : vector<8x512xf32>
    %7 = arith.select %4, %2, %6 : vector<8x512xi1>, vector<8x512xf32>
    %8 = arith.truncf %7 : vector<8x512xf32> to vector<8x512xbf16>
    %c0_3 = arith.constant 0 : index
    %c0_4 = arith.constant 0 : index
    %c0_5 = arith.constant 0 : index
    %9 = vector.load %arg2[%c0_3, %c0_4, %c0_5] : memref<4x8x25xbf16, #tpu.memory_space<vmem>>, vector<1x8x25xbf16>
    %10 = vector.shape_cast %9 : vector<1x8x25xbf16> to vector<8x25xbf16>
    %cst_6 = arith.constant 0.000000e+00 : bf16
    %11 = vector.broadcast %cst_6 : bf16 to vector<8x1xbf16>
    %12 = tpu.concatenate %11, %8, %11 in 1 : vector<8x1xbf16>, vector<8x512xbf16>, vector<8x1xbf16> -> vector<8x514xbf16>
    %13 = vector.extract_strided_slice %12 {offsets = [0, 0], sizes = [8, 512], strides = [1, 1]} : vector<8x514xbf16> to vector<8x512xbf16>
    %14 = vector.extract_strided_slice %12 {offsets = [0, 1], sizes = [8, 512], strides = [1, 1]} : vector<8x514xbf16> to vector<8x512xbf16>
    %15 = vector.extract_strided_slice %12 {offsets = [0, 2], sizes = [8, 512], strides = [1, 1]} : vector<8x514xbf16> to vector<8x512xbf16>
    %cst_7 = arith.constant 1.000000e+00 : bf16
    %16 = vector.broadcast %cst_7 : bf16 to vector<1x512xbf16>
    %17 = tpu.concatenate %13, %14, %15, %16 in 0 : vector<8x512xbf16>, vector<8x512xbf16>, vector<8x512xbf16>, vector<1x512xbf16> -> vector<25x512xbf16>
    %cst_8 = arith.constant dense<0.000000e+00> : vector<8x512xf32>
    %18 = tpu.matmul %10, %17, %cst_8 {dimension_numbers = #tpu.dot_dimension_numbers<[1], [0], [0], [1], [0, 0, 1, 1], [], []>} : vector<8x25xbf16>, vector<25x512xbf16>, vector<8x512xf32> -> vector<8x512xf32>
    %19 = tpu.iota {dimensions = array<i32: 1>} : vector<8x512xi32>
    %c32_i32 = arith.constant 32 : i32
    %20 = vector.broadcast %c32_i32 : i32 to vector<8x512xi32>
    %21 = arith.cmpi slt, %19, %20 : vector<8x512xi32>
    %cst_9 = arith.constant 0.000000e+00 : f32
    %22 = vector.broadcast %cst_9 : f32 to vector<8x512xf32>
    %23 = arith.select %21, %18, %22 : vector<8x512xi1>, vector<8x512xf32>
    %cst_10 = arith.constant 0.000000e+00 : f32
    %24 = vector.broadcast %cst_10 : f32 to vector<8x512xf32>
    %25 = arith.cmpf oge, %23, %24 : vector<8x512xf32>
    %cst_11 = arith.constant 1.000000e-01 : f32
    %26 = vector.broadcast %cst_11 : f32 to vector<8x512xf32>
    %27 = arith.mulf %26, %23 : vector<8x512xf32>
    %28 = arith.select %25, %23, %27 : vector<8x512xi1>, vector<8x512xf32>
    %29 = arith.truncf %28 : vector<8x512xf32> to vector<8x512xbf16>
    %c1 = arith.constant 1 : index
    %c0_12 = arith.constant 0 : index
    %c0_13 = arith.constant 0 : index
    %30 = vector.load %arg2[%c1, %c0_12, %c0_13] : memref<4x8x25xbf16, #tpu.memory_space<vmem>>, vector<1x8x25xbf16>
    %31 = vector.shape_cast %30 : vector<1x8x25xbf16> to vector<8x25xbf16>
    %cst_14 = arith.constant 0.000000e+00 : bf16
    %32 = vector.broadcast %cst_14 : bf16 to vector<8x1xbf16>
    %33 = tpu.concatenate %32, %29, %32 in 1 : vector<8x1xbf16>, vector<8x512xbf16>, vector<8x1xbf16> -> vector<8x514xbf16>
    %34 = vector.extract_strided_slice %33 {offsets = [0, 0], sizes = [8, 512], strides = [1, 1]} : vector<8x514xbf16> to vector<8x512xbf16>
    %35 = vector.extract_strided_slice %33 {offsets = [0, 1], sizes = [8, 512], strides = [1, 1]} : vector<8x514xbf16> to vector<8x512xbf16>
    %36 = vector.extract_strided_slice %33 {offsets = [0, 2], sizes = [8, 512], strides = [1, 1]} : vector<8x514xbf16> to vector<8x512xbf16>
    %cst_15 = arith.constant 1.000000e+00 : bf16
    %37 = vector.broadcast %cst_15 : bf16 to vector<1x512xbf16>
    %38 = tpu.concatenate %34, %35, %36, %37 in 0 : vector<8x512xbf16>, vector<8x512xbf16>, vector<8x512xbf16>, vector<1x512xbf16> -> vector<25x512xbf16>
    %cst_16 = arith.constant dense<0.000000e+00> : vector<8x512xf32>
    %39 = tpu.matmul %31, %38, %cst_16 {dimension_numbers = #tpu.dot_dimension_numbers<[1], [0], [0], [1], [0, 0, 1, 1], [], []>} : vector<8x25xbf16>, vector<25x512xbf16>, vector<8x512xf32> -> vector<8x512xf32>
    %40 = tpu.iota {dimensions = array<i32: 1>} : vector<8x512xi32>
    %c32_i32_17 = arith.constant 32 : i32
    %41 = vector.broadcast %c32_i32_17 : i32 to vector<8x512xi32>
    %42 = arith.cmpi slt, %40, %41 : vector<8x512xi32>
    %cst_18 = arith.constant 0.000000e+00 : f32
    %43 = vector.broadcast %cst_18 : f32 to vector<8x512xf32>
    %44 = arith.select %42, %39, %43 : vector<8x512xi1>, vector<8x512xf32>
    %45 = arith.addf %2, %44 : vector<8x512xf32>
    %cst_19 = arith.constant 0.000000e+00 : f32
    %46 = vector.broadcast %cst_19 : f32 to vector<8x512xf32>
    %47 = arith.cmpf oge, %45, %46 : vector<8x512xf32>
    %cst_20 = arith.constant 1.000000e-01 : f32
    %48 = vector.broadcast %cst_20 : f32 to vector<8x512xf32>
    %49 = arith.mulf %48, %45 : vector<8x512xf32>
    %50 = arith.select %47, %45, %49 : vector<8x512xi1>, vector<8x512xf32>
    %51 = arith.truncf %50 : vector<8x512xf32> to vector<8x512xbf16>
    %c2 = arith.constant 2 : index
    %c0_21 = arith.constant 0 : index
    %c0_22 = arith.constant 0 : index
    %52 = vector.load %arg2[%c2, %c0_21, %c0_22] : memref<4x8x25xbf16, #tpu.memory_space<vmem>>, vector<1x8x25xbf16>
    %53 = vector.shape_cast %52 : vector<1x8x25xbf16> to vector<8x25xbf16>
    %cst_23 = arith.constant 0.000000e+00 : bf16
    %54 = vector.broadcast %cst_23 : bf16 to vector<8x3xbf16>
    %55 = tpu.concatenate %54, %51, %54 in 1 : vector<8x3xbf16>, vector<8x512xbf16>, vector<8x3xbf16> -> vector<8x518xbf16>
    %56 = vector.extract_strided_slice %55 {offsets = [0, 0], sizes = [8, 512], strides = [1, 1]} : vector<8x518xbf16> to vector<8x512xbf16>
    %57 = vector.extract_strided_slice %55 {offsets = [0, 3], sizes = [8, 512], strides = [1, 1]} : vector<8x518xbf16> to vector<8x512xbf16>
    %58 = vector.extract_strided_slice %55 {offsets = [0, 6], sizes = [8, 512], strides = [1, 1]} : vector<8x518xbf16> to vector<8x512xbf16>
    %cst_24 = arith.constant 1.000000e+00 : bf16
    %59 = vector.broadcast %cst_24 : bf16 to vector<1x512xbf16>
    %60 = tpu.concatenate %56, %57, %58, %59 in 0 : vector<8x512xbf16>, vector<8x512xbf16>, vector<8x512xbf16>, vector<1x512xbf16> -> vector<25x512xbf16>
    %cst_25 = arith.constant dense<0.000000e+00> : vector<8x512xf32>
    %61 = tpu.matmul %53, %60, %cst_25 {dimension_numbers = #tpu.dot_dimension_numbers<[1], [0], [0], [1], [0, 0, 1, 1], [], []>} : vector<8x25xbf16>, vector<25x512xbf16>, vector<8x512xf32> -> vector<8x512xf32>
    %62 = tpu.iota {dimensions = array<i32: 1>} : vector<8x512xi32>
    %c32_i32_26 = arith.constant 32 : i32
    %63 = vector.broadcast %c32_i32_26 : i32 to vector<8x512xi32>
    %64 = arith.cmpi slt, %62, %63 : vector<8x512xi32>
    %cst_27 = arith.constant 0.000000e+00 : f32
    %65 = vector.broadcast %cst_27 : f32 to vector<8x512xf32>
    %66 = arith.select %64, %61, %65 : vector<8x512xi1>, vector<8x512xf32>
    %cst_28 = arith.constant 0.000000e+00 : f32
    %67 = vector.broadcast %cst_28 : f32 to vector<8x512xf32>
    %68 = arith.cmpf oge, %66, %67 : vector<8x512xf32>
    %cst_29 = arith.constant 1.000000e-01 : f32
    %69 = vector.broadcast %cst_29 : f32 to vector<8x512xf32>
    %70 = arith.mulf %69, %66 : vector<8x512xf32>
    %71 = arith.select %68, %66, %70 : vector<8x512xi1>, vector<8x512xf32>
    %72 = arith.truncf %71 : vector<8x512xf32> to vector<8x512xbf16>
    %c3 = arith.constant 3 : index
    %c0_30 = arith.constant 0 : index
    %c0_31 = arith.constant 0 : index
    %73 = vector.load %arg2[%c3, %c0_30, %c0_31] : memref<4x8x25xbf16, #tpu.memory_space<vmem>>, vector<1x8x25xbf16>
    %74 = vector.shape_cast %73 : vector<1x8x25xbf16> to vector<8x25xbf16>
    %cst_32 = arith.constant 0.000000e+00 : bf16
    %75 = vector.broadcast %cst_32 : bf16 to vector<8x1xbf16>
    %76 = tpu.concatenate %75, %72, %75 in 1 : vector<8x1xbf16>, vector<8x512xbf16>, vector<8x1xbf16> -> vector<8x514xbf16>
    %77 = vector.extract_strided_slice %76 {offsets = [0, 0], sizes = [8, 512], strides = [1, 1]} : vector<8x514xbf16> to vector<8x512xbf16>
    %78 = vector.extract_strided_slice %76 {offsets = [0, 1], sizes = [8, 512], strides = [1, 1]} : vector<8x514xbf16> to vector<8x512xbf16>
    %79 = vector.extract_strided_slice %76 {offsets = [0, 2], sizes = [8, 512], strides = [1, 1]} : vector<8x514xbf16> to vector<8x512xbf16>
    %cst_33 = arith.constant 1.000000e+00 : bf16
    %80 = vector.broadcast %cst_33 : bf16 to vector<1x512xbf16>
    %81 = tpu.concatenate %77, %78, %79, %80 in 0 : vector<8x512xbf16>, vector<8x512xbf16>, vector<8x512xbf16>, vector<1x512xbf16> -> vector<25x512xbf16>
    %cst_34 = arith.constant dense<0.000000e+00> : vector<8x512xf32>
    %82 = tpu.matmul %74, %81, %cst_34 {dimension_numbers = #tpu.dot_dimension_numbers<[1], [0], [0], [1], [0, 0, 1, 1], [], []>} : vector<8x25xbf16>, vector<25x512xbf16>, vector<8x512xf32> -> vector<8x512xf32>
    %83 = tpu.iota {dimensions = array<i32: 1>} : vector<8x512xi32>
    %c32_i32_35 = arith.constant 32 : i32
    %84 = vector.broadcast %c32_i32_35 : i32 to vector<8x512xi32>
    %85 = arith.cmpi slt, %83, %84 : vector<8x512xi32>
    %cst_36 = arith.constant 0.000000e+00 : f32
    %86 = vector.broadcast %cst_36 : f32 to vector<8x512xf32>
    %87 = arith.select %85, %82, %86 : vector<8x512xi1>, vector<8x512xf32>
    %88 = arith.addf %45, %87 : vector<8x512xf32>
    %89 = arith.truncf %88 : vector<8x512xf32> to vector<8x512xbf16>
    %c0_37 = arith.constant 0 : index
    %c0_38 = arith.constant 0 : index
    %c0_39 = arith.constant 0 : index
    %90 = vector.load %arg3[%c0_37, %c0_38, %c0_39] : memref<1x8x512xbf16, #tpu.memory_space<vmem>>, vector<1x8x512xbf16>
    %91 = vector.shape_cast %90 : vector<1x8x512xbf16> to vector<8x512xbf16>
    %92 = vector.shape_cast %89 : vector<8x512xbf16> to vector<1x8x512xbf16>
    tpu.vector_store %arg3[%c0_37, %c0_38, %c0_39], %92 {strides = array<i32>} : memref<1x8x512xbf16, #tpu.memory_space<vmem>>, vector<1x8x512xbf16>,
    return
  }
  func.func @transform_0(%arg0: i32) -> (i32, i32, i32) {
    %c0_i32 = arith.constant 0 : i32
    %c0_i32_0 = arith.constant 0 : i32
    %c0_i32_1 = arith.constant 0 : i32
    return %arg0, %c0_i32, %c0_i32_0 : i32, i32, i32
  }
  func.func @transform_1(%arg0: i32) -> (i32, i32, i32) {
    %c0_i32 = arith.constant 0 : i32
    %c0_i32_0 = arith.constant 0 : i32
    %c0_i32_1 = arith.constant 0 : i32
    %c0_i32_2 = arith.constant 0 : i32
    return %c0_i32, %c0_i32_0, %c0_i32_1 : i32, i32, i32
  }
  func.func @transform_2(%arg0: i32) -> (i32, i32, i32) {
    %c0_i32 = arith.constant 0 : i32
    %c0_i32_0 = arith.constant 0 : i32
    %c0_i32_1 = arith.constant 0 : i32
    return %arg0, %c0_i32, %c0_i32_0 : i32, i32, i32
  }
}

module attributes {stable_mosaic.version = 11 : i64} {
  func.func @_conv1d_kernel(%arg0: i32, %arg1: memref<1x8x512xbf16, #tpu.memory_space<vmem>>, %arg2: memref<1x57xbf16, #tpu.memory_space<vmem>>, %arg3: memref<1x1x512xf32, #tpu.memory_space<vmem>>) attributes {dimension_semantics = [#tpu.dimension_semantics<parallel>], iteration_bounds = array<i64: 2>, scalar_prefetch = 0 : i64, scratch_operands = 0 : i64, tpu.core_type = #tpu.core_type<tc>, window_params = [{transform_indices = @transform_0, window_bounds = array<i64: 1, 8, 512>}, {pipeline_mode = #tpu.pipeline_mode<synchronous>, transform_indices = @transform_1, window_bounds = array<i64: 1, 57>}, {transform_indices = @transform_2, window_bounds = array<i64: 1, 1, 512>}]} {
    %c0 = arith.constant 0 : index
    %c0_0 = arith.constant 0 : index
    %c0_1 = arith.constant 0 : index
    %0 = vector.load %arg1[%c0, %c0_0, %c0_1] : memref<1x8x512xbf16, #tpu.memory_space<vmem>>, vector<1x8x512xbf16>
    %1 = vector.shape_cast %0 : vector<1x8x512xbf16> to vector<8x512xbf16>
    %2 = arith.extf %1 : vector<8x512xbf16> to vector<8x512xf32>
    %cst = arith.constant 0.000000e+00 : f32
    %3 = vector.broadcast %cst : f32 to vector<8x512xf32>
    %4 = arith.cmpf oge, %2, %3 : vector<8x512xf32>
    %cst_2 = arith.constant 1.000000e-01 : f32
    %5 = vector.broadcast %cst_2 : f32 to vector<8x512xf32>
    %6 = arith.mulf %5, %2 : vector<8x512xf32>
    %7 = arith.select %4, %2, %6 : vector<8x512xi1>, vector<8x512xf32>
    %8 = arith.truncf %7 : vector<8x512xf32> to vector<8x512xbf16>
    %c0_3 = arith.constant 0 : index
    %c0_4 = arith.constant 0 : index
    %9 = vector.load %arg2[%c0_3, %c0_4] : memref<1x57xbf16, #tpu.memory_space<vmem>>, vector<1x57xbf16>
    %cst_5 = arith.constant 0.000000e+00 : bf16
    %10 = vector.broadcast %cst_5 : bf16 to vector<8x3xbf16>
    %11 = tpu.concatenate %10, %8, %10 in 1 : vector<8x3xbf16>, vector<8x512xbf16>, vector<8x3xbf16> -> vector<8x518xbf16>
    %12 = vector.extract_strided_slice %11 {offsets = [0, 0], sizes = [8, 512], strides = [1, 1]} : vector<8x518xbf16> to vector<8x512xbf16>
    %13 = vector.extract_strided_slice %11 {offsets = [0, 1], sizes = [8, 512], strides = [1, 1]} : vector<8x518xbf16> to vector<8x512xbf16>
    %14 = vector.extract_strided_slice %11 {offsets = [0, 2], sizes = [8, 512], strides = [1, 1]} : vector<8x518xbf16> to vector<8x512xbf16>
    %15 = vector.extract_strided_slice %11 {offsets = [0, 3], sizes = [8, 512], strides = [1, 1]} : vector<8x518xbf16> to vector<8x512xbf16>
    %16 = vector.extract_strided_slice %11 {offsets = [0, 4], sizes = [8, 512], strides = [1, 1]} : vector<8x518xbf16> to vector<8x512xbf16>
    %17 = vector.extract_strided_slice %11 {offsets = [0, 5], sizes = [8, 512], strides = [1, 1]} : vector<8x518xbf16> to vector<8x512xbf16>
    %18 = vector.extract_strided_slice %11 {offsets = [0, 6], sizes = [8, 512], strides = [1, 1]} : vector<8x518xbf16> to vector<8x512xbf16>
    %cst_6 = arith.constant 1.000000e+00 : bf16
    %19 = vector.broadcast %cst_6 : bf16 to vector<1x512xbf16>
    %20 = tpu.concatenate %12, %13, %14, %15, %16, %17, %18, %19 in 0 : vector<8x512xbf16>, vector<8x512xbf16>, vector<8x512xbf16>, vector<8x512xbf16>, vector<8x512xbf16>, vector<8x512xbf16>, vector<8x512xbf16>, vector<1x512xbf16> -> vector<57x512xbf16>
    %cst_7 = arith.constant dense<0.000000e+00> : vector<1x512xf32>
    %21 = tpu.matmul %9, %20, %cst_7 {dimension_numbers = #tpu.dot_dimension_numbers<[1], [0], [0], [1], [0, 0, 1, 1], [], []>} : vector<1x57xbf16>, vector<57x512xbf16>, vector<1x512xf32> -> vector<1x512xf32>
    %22 = tpu.iota {dimensions = array<i32: 1>} : vector<1x512xi32>
    %c32_i32 = arith.constant 32 : i32
    %23 = vector.broadcast %c32_i32 : i32 to vector<1x512xi32>
    %24 = arith.cmpi slt, %22, %23 : vector<1x512xi32>
    %cst_8 = arith.constant 0.000000e+00 : f32
    %25 = vector.broadcast %cst_8 : f32 to vector<1x512xf32>
    %26 = arith.select %24, %21, %25 : vector<1x512xi1>, vector<1x512xf32>
    %27 = math.tanh %26 : vector<1x512xf32>
    %c0_9 = arith.constant 0 : index
    %c0_10 = arith.constant 0 : index
    %c0_11 = arith.constant 0 : index
    %28 = vector.load %arg3[%c0_9, %c0_10, %c0_11] : memref<1x1x512xf32, #tpu.memory_space<vmem>>, vector<1x1x512xf32>
    %29 = vector.shape_cast %28 : vector<1x1x512xf32> to vector<1x512xf32>
    %30 = vector.shape_cast %27 : vector<1x512xf32> to vector<1x1x512xf32>
    tpu.vector_store %arg3[%c0_9, %c0_10, %c0_11], %30 {strides = array<i32>} : memref<1x1x512xf32, #tpu.memory_space<vmem>>, vector<1x1x512xf32>,
    return
  }
  func.func @transform_0(%arg0: i32) -> (i32, i32, i32) {
    %c0_i32 = arith.constant 0 : i32
    %c0_i32_0 = arith.constant 0 : i32
    %c0_i32_1 = arith.constant 0 : i32
    return %arg0, %c0_i32, %c0_i32_0 : i32, i32, i32
  }
  func.func @transform_1(%arg0: i32) -> (i32, i32) {
    %c0_i32 = arith.constant 0 : i32
    %c0_i32_0 = arith.constant 0 : i32
    %c0_i32_1 = arith.constant 0 : i32
    return %c0_i32, %c0_i32_0 : i32, i32
  }
  func.func @transform_2(%arg0: i32) -> (i32, i32, i32) {
    %c0_i32 = arith.constant 0 : i32
    %c0_i32_0 = arith.constant 0 : i32
    %c0_i32_1 = arith.constant 0 : i32
    return %arg0, %c0_i32, %c0_i32_0 : i32, i32, i32
  }
}

</mosaic_0001>

<llo_original>
// kernel: soft_hifigan_forward.8
$region0: #{soft_hifigan_forward.8}
  #allocation0 [shape = 'u32[]', space=smem, size = 0x4, offset = 0x4, fixed_abs, tag = 'smem constant byte address 0x4 - core index']
  #allocation1 [shape = 'u32[144,128]{1,0:T(1,128)}', space=vmem, size = 0x12000, scoped, tag = 'internal scratch']
  %s0 = inlined_call_operand.vmem [shape: bf16[2,16,128], index: 0, kind: input, shape index: {}]
  %s1 = inlined_call_operand.vmem [shape: bf16[32,113], index: 1, kind: input, shape index: {}]
  %s2 = inlined_call_operand.vmem [shape: bf16[2,32,128], index: 2, kind: output, shape index: {}]
  %s3 = sld [smem:[#allocation0]]
  $region41: #{soft_hifigan_forward.8} parent=0
    _
  %s5 = ssub.s32 1, %s3
  %s6 = scalar_select 0, %s5, %s3
  loop: start=0, step=1, limit=4
  $region2: #{soft_hifigan_forward.8} parent=0 // loop_pre_header
    _
  $region3: #{soft_hifigan_forward.8} parent=0 // loop_header
    %s8 = sphi 0, %s12
    %p9 = scmp.ge.s32.totalorder %s8, 4
    %s18 = sphi 0, %s20
    %s21 = sphi 0, %s18
    %s22 = sphi 0, %s21
    %s38 = sphi 0, %s22
    %s42 = sphi 0, %s42
    %s44 = sphi 0, %s42
    %s45 = sphi 0, %s44
    %s59 = sphi 0, %s45
    %s65 = sphi 0, %s67
    %s68 = sphi 0, %s65
    %s69 = sphi 0, %s68
    %s85 = sphi 0, %s69
  $region4: #{soft_hifigan_forward.8} parent=0 // loop_header_branch
    %11 = sbr.rel (%p9) target = $region8
  $region5: #{soft_hifigan_forward.8} parent=0 // loop_body
    %s13 = ssub.s32 %s8, 1
    %s14 = ssub.s32 %s8, 2
    %s15 = sadd.s32 %s8, 1
    %s16 = ssub.s32 %s8, %s15
    %p17 = scmp.eq.s32.totalorder %s16, 0
    %s19 = sadd.s32 %s18, 1
    %s20 = scalar_select %p17, %s18, %s19
    %p23 = pneg %p17
    %p24 = scmp.eq.s32.totalorder %s8, 1
    %p25 = por %p23, %p24
    %p26 = scmp.ne.s32.totalorder %s18, %s21
    %p27 = scmp.eq.s32.totalorder %s8, 0
    %p28 = por %p26, %p27
    %p29 = scmp.ne.s32.totalorder %s18, %s21
    %p30 = scmp.eq.s32.totalorder %s13, 1
    %p31 = por %p29, %p30
    %p32 = scmp.ne.s32.totalorder %s21, %s22
    %p33 = scmp.eq.s32.totalorder %s13, 0
    %p34 = por %p32, %p33
    %p35 = scmp.ne.s32.totalorder %s21, %s22
    %p36 = scmp.eq.s32.totalorder %s14, 1
    %p37 = por %p35, %p36
    %p39 = scmp.ne.s32.totalorder %s22, %s38
    %p40 = scmp.eq.s32.totalorder %s14, 0
    %p41 = por %p39, %p40
    %s43 = sadd.s32 %s42, 1
    %p46 = scmp.eq.s32.totalorder %s8, 1
    %p47 = scmp.ne.s32.totalorder %s42, %s44
    %p48 = scmp.eq.s32.totalorder %s8, 0
    %p49 = por %p47, %p48
    %p50 = scmp.ne.s32.totalorder %s42, %s44
    %p51 = scmp.eq.s32.totalorder %s13, 1
    %p52 = por %p50, %p51
    %p53 = scmp.ne.s32.totalorder %s44, %s45
    %p54 = scmp.eq.s32.totalorder %s13, 0
    %p55 = por %p53, %p54
    %p56 = scmp.ne.s32.totalorder %s44, %s45
    %p57 = scmp.eq.s32.totalorder %s14, 1
    %p58 = por %p56, %p57
    %p60 = scmp.ne.s32.totalorder %s45, %s59
    %p61 = scmp.eq.s32.totalorder %s14, 0
    %p62 = por %p60, %p61
    %s63 = ssub.s32 %s8, %s15
    %p64 = scmp.eq.s32.totalorder %s63, 0
    %s66 = sadd.s32 %s65, 1
    %s67 = scalar_select %p64, %s65, %s66
    %p70 = pneg %p64
    %p71 = scmp.eq.s32.totalorder %s8, 1
    %p72 = por %p70, %p71
    %p73 = scmp.ne.s32.totalorder %s65, %s68
    %p74 = scmp.eq.s32.totalorder %s8, 0
    %p75 = por %p73, %p74
    %p76 = scmp.ne.s32.totalorder %s65, %s68
    %p77 = scmp.eq.s32.totalorder %s13, 1
    %p78 = por %p76, %p77
    %p79 = scmp.ne.s32.totalorder %s68, %s69
    %p80 = scmp.eq.s32.totalorder %s13, 0
    %p81 = por %p79, %p80
    %p82 = scmp.ne.s32.totalorder %s68, %s69
    %p83 = scmp.eq.s32.totalorder %s14, 1
    %p84 = por %p82, %p83
    %p86 = scmp.ne.s32.totalorder %s69, %s85
    %p87 = scmp.eq.s32.totalorder %s14, 0
    %p88 = por %p86, %p87
    %p89 = scmp.le.s32.totalorder 1, %s8
    %p90 = scmp.lt.s32.totalorder %s8, 3
    %p91 = pnand %p89, %p90
    %p92 = pneg %p91
    // Predicated region
    $region9: #{soft_hifigan_forward.8} parent=5 // pred_check
      _
    $region10: #{soft_hifigan_forward.8} parent=5 // pred_check_branch
      %94 = sbr.rel (%p91) target = $region12
    $region11: #{soft_hifigan_forward.8} parent=5 // pred_region
      %s95 = ssub.s32 %s8, 1
      // Predicated region
      $region13: #{soft_hifigan_forward.8} parent=11 // pred_check
        %p96 = pneg %p55
      $region14: #{soft_hifigan_forward.8} parent=11 // pred_check_branch
        %98 = sbr.rel (%p96) target = $region16
      $region15: #{soft_hifigan_forward.8} parent=11 // pred_region
        _
      $region16: #{soft_hifigan_forward.8} parent=11 // pred_fallthru
        _
    $region12: #{soft_hifigan_forward.8} parent=5 // pred_fallthru
      _
    %p99 = scmp.lt.s32.totalorder %s8, 2
    // Predicated region
    $region17: #{soft_hifigan_forward.8} parent=5 // pred_check
      %p100 = pneg %p99
    $region18: #{soft_hifigan_forward.8} parent=5 // pred_check_branch
      %102 = sbr.rel (%p100) target = $region20
    $region19: #{soft_hifigan_forward.8} parent=5 // pred_region
      // Predicated region
      $region21: #{soft_hifigan_forward.8} parent=19 // pred_check
        %p103 = pneg %p28
      $region22: #{soft_hifigan_forward.8} parent=19 // pred_check_branch
        %105 = sbr.rel (%p103) target = $region24
      $region23: #{soft_hifigan_forward.8} parent=19 // pred_region
        %p106 = scmp.lt.s32.totalorder %s8, 1
        %s107 = scalar_select %p106, %s8, 1
        %s108 = smul.addr %s107, 2
        %s109 = smul.addr %s108, 4
        %s110 = scalar_lea.vmem %s0, %s109
      $region24: #{soft_hifigan_forward.8} parent=19 // pred_fallthru
        _
    $region20: #{soft_hifigan_forward.8} parent=5 // pred_fallthru
      _
    %p111 = scmp.le.s32.totalorder 1, %s8
    %p112 = scmp.lt.s32.totalorder %s8, 3
    %p113 = pnand %p111, %p112
    %p114 = pneg %p113
    // Predicated region
    $region25: #{soft_hifigan_forward.8} parent=5 // pred_check
      _
    $region26: #{soft_hifigan_forward.8} parent=5 // pred_check_branch
      %116 = sbr.rel (%p113) target = $region28
    $region27: #{soft_hifigan_forward.8} parent=5 // pred_region
      %s117 = ssub.s32 %s8, 1
      %p118 = scmp.lt.s32.totalorder %s13, 1
      %s119 = scalar_select %p118, %s13, 1
      %s120 = smul.addr %s119, 2
      %s121 = smul.addr %s120, 4
      %s122 = scalar_lea.vmem %s0, %s121
      %p123 = pneg %p34
      %p124 = pneg %p31
      %p125 = pneg %p55
      %p126 = pneg %p52
      %p127 = pneg %p81
      %p128 = pneg %p78
      %p129 = scmp.lt.s32.totalorder %s13, 1
      %s130 = scalar_select %p129, %s13, 1
      %s131 = smul.addr %s130, 4
      %s132 = smul.addr %s131, 4
      %s133 = scalar_lea.vmem %s2, %s132
      %p134 = scmp.lt.s32.totalorder %s13, 1
      %s135 = scalar_select %p134, %s13, 1
      %s136 = smul.addr %s135, 2
      %s137 = smul.addr %s136, 4
      %s138 = scalar_lea.vmem %s0, %s137
      %p139 = scmp.lt.s32.totalorder %s13, 1
      %s140 = scalar_select %p139, %s13, 1
      %s141 = smul.addr %s140, 4
      %s142 = smul.addr %s141, 4
      %s143 = scalar_lea.vmem %s2, %s142
      %v146 = vld [vmem:[%s138] sm:$0xf]
      %v147 = vld [vmem:[%s138 + $0x4] sm:$0xf]
      %v148 = vld [vmem:[%s1] sm:$0xf]
      %v149 = vld [vmem:[%s1 + $0x4] sm:$0xf]
      %v150 = vld [vmem:[%s1 + $0x8] sm:$0xf]
      %v151 = vld [vmem:[%s1 + $0xc] sm:$0xf]
      %v154 = vunpack.c.l.b16 %v146
      %v155 = vunpack.c.l.b16 %v147
      %v156 = vpack.c.b16 %v155, %v154
      %157 = vrot.lane.b32.xlu0 %v156, 3
      %v158 = vpop.permute.xlu0 %157
      %vm159 = vcmask 23552
      %v162 = vsel %vm159, 0, %v158
      %v164 = vsel %vm159, %v158, 0
      %167 = vrot.lane.b32.xlu0 %v162, 127
      %v168 = vpop.permute.xlu0 %167
      %169 = vrot.lane.b32.xlu0 %v164, 127
      %v170 = vpop.permute.xlu0 %169
      %vm171 = vcmask 1039360
      %v172 = vsel %vm171, %v168, %v170
      %174 = vrot.lane.b32.xlu0 %v162, 126
      %v175 = vpop.permute.xlu0 %174
      %176 = vrot.lane.b32.xlu0 %v164, 126
      %v177 = vpop.permute.xlu0 %176
      %vm178 = vcmask 1031168
      %v179 = vsel %vm178, %v175, %v177
      %181 = vrot.lane.b32.xlu0 %v162, 125
      %v182 = vpop.permute.xlu0 %181
      %183 = vrot.lane.b32.xlu0 %v164, 125
      %v184 = vpop.permute.xlu0 %183
      %vm185 = vcmask 1022976
      %v186 = vsel %vm185, %v182, %v184
      %188 = vrot.lane.b32.xlu0 %v162, 124
      %v189 = vpop.permute.xlu0 %188
      %190 = vrot.lane.b32.xlu0 %v164, 124
      %v191 = vpop.permute.xlu0 %190
      %vm192 = vcmask 1014784
      %v193 = vsel %vm192, %v189, %v191
      %195 = vrot.lane.b32.xlu0 %v162, 123
      %v196 = vpop.permute.xlu0 %195
      %197 = vrot.lane.b32.xlu0 %v164, 123
      %v198 = vpop.permute.xlu0 %197
      %vm199 = vcmask 1006592
      %v200 = vsel %vm199, %v196, %v198
      %202 = vrot.lane.b32.xlu0 %v162, 122
      %v203 = vpop.permute.xlu0 %202
      %204 = vrot.lane.b32.xlu0 %v164, 122
      %v205 = vpop.permute.xlu0 %204
      %vm206 = vcmask 998400
      %v207 = vsel %vm206, %v203, %v205
      %v213 = vunpack.c.l.b16 %v148
      %v214 = vunpack.c.l.b16 %v149
      %v215 = vunpack.c.l.b16 %v150
      %v216 = vunpack.c.l.b16 %v151
      %v217 = vpack.c.b16 %v214, %v213
      %v218 = vpack.c.b16 %v216, %v215
      %vm219 = vcmask 924672
      %v221 = vsel %vm219, %v217, 0
      %v224 = vsel %vm219, %v218, 0
      %vm226 = vcmask 1040384
      %v227 = vsel 0, 4294967295, 65535
      %v228 = vsel %vm226, %v227, 0
      %v230 = vand.u32 1065369472, %v228
      %232 = vmatprep.subr.bf16.mxu0 0
      %233 = vmatpush1.bf16.msra.mxu0 %v230
      %234 = vmatprep.subr.bf16.mxu0 0
      %235 = vmatpush1.bf16.msra.mxu0 %v207
      %236 = vmatprep.subr.bf16.mxu0 0
      %237 = vmatpush1.bf16.msra.mxu0 %v200
      %238 = vmatprep.subr.bf16.mxu0 0
      %239 = vmatpush1.bf16.msra.mxu0 %v193
      %240 = vmatprep.subr.bf16.mxu0 0
      %241 = vmatpush1.bf16.msra.mxu0 %v186
      %242 = vmatprep.subr.bf16.mxu0 0
      %243 = vmatpush1.bf16.msra.mxu0 %v179
      %244 = vmatprep.subr.bf16.mxu0 0
      %245 = vmatpush1.bf16.msra.mxu0 %v172
      %246 = vmatprep.subr.bf16.mxu0 0
      %247 = vmatpush1.bf16.msra.mxu0 %v162
      %248 = vmatprep.subr.bf16.mxu0 0
      %249 = vmatpush2.bf16.msra.mxu0 0
      %250 = vmatprep.subr.bf16.mxu0 0
      %251 = vmatpush2.bf16.msra.mxu0 0
      %252 = vmatprep.subr.bf16.mxu0 0
      %253 = vmatpush2.bf16.msra.mxu0 0
      %254 = vmatprep.subr.bf16.mxu0 0
      %255 = vmatpush2.bf16.msra.mxu0 0
      %256 = vmatprep.subr.bf16.mxu0 0
      %257 = vmatpush2.bf16.msra.mxu0 0
      %258 = vmatprep.subr.bf16.mxu0 0
      %259 = vmatpush2.bf16.msra.mxu0 0
      %260 = vmatprep.subr.bf16.mxu0 0
      %261 = vmatpush2.bf16.msra.mxu0 0
      %262 = vmatprep.subr.bf16.mxu0 0
      %263 = vmatpush2.bf16.msra.mxu0 0
      %264 = vmatprep.mubr.bf16.mxu0 0
      %265 = vmatmul.mubr.bf16.gmra.mxu0 %v221
      %v266 = vpop.f32.mrf.mxu0
      %v267 = vadd.f32 0.0, %v266
      %v268 = vpop.f32.mrf.mxu0
      %v269 = vpop.f32.mrf.mxu0
      %v270 = vadd.f32 0.0, %v269
      %v271 = vpop.f32.mrf.mxu0
      %272 = vmatprep.mubr.bf16.mxu0 0
      %273 = vmatmul.mubr.bf16.gmra.mxu0 %v224
      %v274 = vpop.f32.mrf.mxu0
      %v275 = vadd.f32 0.0, %v274
      %v276 = vpop.f32.mrf.mxu0
      %v277 = vpop.f32.mrf.mxu0
      %v278 = vadd.f32 0.0, %v277
      %v279 = vpop.f32.mrf.mxu0
      %280 = vdwg.mxu0
      %v281 = vlaneseq
      %v282 = vand.u32 %v281, 127
      %vm283 = vcmp.lt.s32.totalorder %v282, 8
      %v284 = vsel %vm283, %v267, 0.0
      %v285 = vsel %vm283, %v270, 0.0
      %v286 = vsel %vm283, %v275, 0.0
      %v287 = vsel %vm283, %v278, 0.0
      %vm288 = vcmp.ge.f32.partialorder %v284, 0.0
      %vm289 = vcmp.ge.f32.partialorder %v285, 0.0
      %vm290 = vcmp.ge.f32.partialorder %v286, 0.0
      %vm291 = vcmp.ge.f32.partialorder %v287, 0.0
      %v292 = vmul.f32 %v284, 0.1
      %v293 = vmul.f32 %v285, 0.1
      %v294 = vmul.f32 %v286, 0.1
      %v295 = vmul.f32 %v287, 0.1
      %v296 = vsel %vm288, %v284, %v292
      %v297 = vsel %vm289, %v285, %v293
      %v298 = vsel %vm290, %v286, %v294
      %v299 = vsel %vm291, %v287, %v295
      %v300 = vpack.c.bf16 %v297, %v296
      %v301 = vpack.c.bf16 %v299, %v298
      %v304 = vunpack.c.l.b16 %v300
      %v305 = vunpack.c.h.b16 %v300
      %v306 = vunpack.c.l.b16 %v301
      %v307 = vunpack.c.h.b16 %v301
      %v308 = vpack.c.b16 %v304, %v304
      %v309 = vpack.c.b16 %v305, %v305
      %v310 = vpack.c.b16 %v306, %v306
      %v311 = vpack.c.b16 %v307, %v307
      %316 = vst [vmem:[%s143] sm:$0xf] %v308
      %317 = vst [vmem:[%s143 + $0x4] sm:$0xf] %v309
      %318 = vst [vmem:[%s143 + $0x8] sm:$0xf] %v310
      %319 = vst [vmem:[%s143 + $0xc] sm:$0xf] %v311
      %p320 = scmp.lt.s32.totalorder %s13, 1
      %s321 = scalar_select %p320, %s13, 1
      %s322 = smul.addr %s321, 4
      %s323 = smul.addr %s322, 4
      %s324 = scalar_lea.vmem %s2, %s323
      // Predicated region
      $region29: #{soft_hifigan_forward.8} parent=27 // pred_check
        %p325 = pneg %p78
      $region30: #{soft_hifigan_forward.8} parent=27 // pred_check_branch
        %327 = sbr.rel (%p325) target = $region32
      $region31: #{soft_hifigan_forward.8} parent=27 // pred_region
        _
      $region32: #{soft_hifigan_forward.8} parent=27 // pred_fallthru
        _
    $region28: #{soft_hifigan_forward.8} parent=5 // pred_fallthru
      _
    %p328 = scmp.le.s32.totalorder 2, %s8
    // Predicated region
    $region33: #{soft_hifigan_forward.8} parent=5 // pred_check
      %p329 = pneg %p328
    $region34: #{soft_hifigan_forward.8} parent=5 // pred_check_branch
      %331 = sbr.rel (%p329) target = $region36
    $region35: #{soft_hifigan_forward.8} parent=5 // pred_region
      %s332 = ssub.s32 %s8, 2
      // Predicated region
      $region37: #{soft_hifigan_forward.8} parent=35 // pred_check
        %p333 = pneg %p84
      $region38: #{soft_hifigan_forward.8} parent=35 // pred_check_branch
        %335 = sbr.rel (%p333) target = $region40
      $region39: #{soft_hifigan_forward.8} parent=35 // pred_region
        %p336 = scmp.lt.s32.totalorder %s14, 1
        %s337 = scalar_select %p336, %s14, 1
        %s338 = smul.addr %s337, 4
        %s339 = smul.addr %s338, 4
        %s340 = scalar_lea.vmem %s2, %s339
      $region40: #{soft_hifigan_forward.8} parent=35 // pred_fallthru
        _
    $region36: #{soft_hifigan_forward.8} parent=5 // pred_fallthru
      _
  $region6: #{soft_hifigan_forward.8} parent=0 // loop_footer
    %s12 = sadd.s32 1, %s8
  $region7: #{soft_hifigan_forward.8} parent=0 // loop_footer_branch
    %7 = sbr.rel target = $region3
  $region8: #{soft_hifigan_forward.8} parent=0 // loop_exit
    _

// kernel: soft_hifigan_forward.7
$region0: #{soft_hifigan_forward.7}
  #allocation0 [shape = 'u32[]', space=smem, size = 0x4, offset = 0x4, fixed_abs, tag = 'smem constant byte address 0x4 - core index']
  #allocation1 [shape = 'u32[144,128]{1,0:T(1,128)}', space=vmem, size = 0x12000, scoped, tag = 'internal scratch']
  %s0 = inlined_call_operand.vmem [shape: bf16[2,128,32], index: 0, kind: input, shape index: {}]
  %s1 = inlined_call_operand.vmem [shape: bf16[16,32], index: 1, kind: input, shape index: {}]
  %s2 = inlined_call_operand.vmem [shape: bf16[2,16,128], index: 2, kind: output, shape index: {}]
  %s3 = sld [smem:[#allocation0]]
  $region41: #{soft_hifigan_forward.7} parent=0
    _
  %s5 = ssub.s32 1, %s3
  %s6 = scalar_select 0, %s5, %s3
  loop: start=0, step=1, limit=4
  $region2: #{soft_hifigan_forward.7} parent=0 // loop_pre_header
    _
  $region3: #{soft_hifigan_forward.7} parent=0 // loop_header
    %s8 = sphi 0, %s12
    %p9 = scmp.ge.s32.totalorder %s8, 4
    %s18 = sphi 0, %s20
    %s21 = sphi 0, %s18
    %s22 = sphi 0, %s21
    %s38 = sphi 0, %s22
    %s42 = sphi 0, %s42
    %s44 = sphi 0, %s42
    %s45 = sphi 0, %s44
    %s59 = sphi 0, %s45
    %s65 = sphi 0, %s67
    %s68 = sphi 0, %s65
    %s69 = sphi 0, %s68
    %s85 = sphi 0, %s69
  $region4: #{soft_hifigan_forward.7} parent=0 // loop_header_branch
    %11 = sbr.rel (%p9) target = $region8
  $region5: #{soft_hifigan_forward.7} parent=0 // loop_body
    %s13 = ssub.s32 %s8, 1
    %s14 = ssub.s32 %s8, 2
    %s15 = sadd.s32 %s8, 1
    %s16 = ssub.s32 %s8, %s15
    %p17 = scmp.eq.s32.totalorder %s16, 0
    %s19 = sadd.s32 %s18, 1
    %s20 = scalar_select %p17, %s18, %s19
    %p23 = pneg %p17
    %p24 = scmp.eq.s32.totalorder %s8, 1
    %p25 = por %p23, %p24
    %p26 = scmp.ne.s32.totalorder %s18, %s21
    %p27 = scmp.eq.s32.totalorder %s8, 0
    %p28 = por %p26, %p27
    %p29 = scmp.ne.s32.totalorder %s18, %s21
    %p30 = scmp.eq.s32.totalorder %s13, 1
    %p31 = por %p29, %p30
    %p32 = scmp.ne.s32.totalorder %s21, %s22
    %p33 = scmp.eq.s32.totalorder %s13, 0
    %p34 = por %p32, %p33
    %p35 = scmp.ne.s32.totalorder %s21, %s22
    %p36 = scmp.eq.s32.totalorder %s14, 1
    %p37 = por %p35, %p36
    %p39 = scmp.ne.s32.totalorder %s22, %s38
    %p40 = scmp.eq.s32.totalorder %s14, 0
    %p41 = por %p39, %p40
    %s43 = sadd.s32 %s42, 1
    %p46 = scmp.eq.s32.totalorder %s8, 1
    %p47 = scmp.ne.s32.totalorder %s42, %s44
    %p48 = scmp.eq.s32.totalorder %s8, 0
    %p49 = por %p47, %p48
    %p50 = scmp.ne.s32.totalorder %s42, %s44
    %p51 = scmp.eq.s32.totalorder %s13, 1
    %p52 = por %p50, %p51
    %p53 = scmp.ne.s32.totalorder %s44, %s45
    %p54 = scmp.eq.s32.totalorder %s13, 0
    %p55 = por %p53, %p54
    %p56 = scmp.ne.s32.totalorder %s44, %s45
    %p57 = scmp.eq.s32.totalorder %s14, 1
    %p58 = por %p56, %p57
    %p60 = scmp.ne.s32.totalorder %s45, %s59
    %p61 = scmp.eq.s32.totalorder %s14, 0
    %p62 = por %p60, %p61
    %s63 = ssub.s32 %s8, %s15
    %p64 = scmp.eq.s32.totalorder %s63, 0
    %s66 = sadd.s32 %s65, 1
    %s67 = scalar_select %p64, %s65, %s66
    %p70 = pneg %p64
    %p71 = scmp.eq.s32.totalorder %s8, 1
    %p72 = por %p70, %p71
    %p73 = scmp.ne.s32.totalorder %s65, %s68
    %p74 = scmp.eq.s32.totalorder %s8, 0
    %p75 = por %p73, %p74
    %p76 = scmp.ne.s32.totalorder %s65, %s68
    %p77 = scmp.eq.s32.totalorder %s13, 1
    %p78 = por %p76, %p77
    %p79 = scmp.ne.s32.totalorder %s68, %s69
    %p80 = scmp.eq.s32.totalorder %s13, 0
    %p81 = por %p79, %p80
    %p82 = scmp.ne.s32.totalorder %s68, %s69
    %p83 = scmp.eq.s32.totalorder %s14, 1
    %p84 = por %p82, %p83
    %p86 = scmp.ne.s32.totalorder %s69, %s85
    %p87 = scmp.eq.s32.totalorder %s14, 0
    %p88 = por %p86, %p87
    %p89 = scmp.le.s32.totalorder 1, %s8
    %p90 = scmp.lt.s32.totalorder %s8, 3
    %p91 = pnand %p89, %p90
    %p92 = pneg %p91
    // Predicated region
    $region9: #{soft_hifigan_forward.7} parent=5 // pred_check
      _
    $region10: #{soft_hifigan_forward.7} parent=5 // pred_check_branch
      %94 = sbr.rel (%p91) target = $region12
    $region11: #{soft_hifigan_forward.7} parent=5 // pred_region
      %s95 = ssub.s32 %s8, 1
      // Predicated region
      $region13: #{soft_hifigan_forward.7} parent=11 // pred_check
        %p96 = pneg %p55
      $region14: #{soft_hifigan_forward.7} parent=11 // pred_check_branch
        %98 = sbr.rel (%p96) target = $region16
      $region15: #{soft_hifigan_forward.7} parent=11 // pred_region
        _
      $region16: #{soft_hifigan_forward.7} parent=11 // pred_fallthru
        _
    $region12: #{soft_hifigan_forward.7} parent=5 // pred_fallthru
      _
    %p99 = scmp.lt.s32.totalorder %s8, 2
    // Predicated region
    $region17: #{soft_hifigan_forward.7} parent=5 // pred_check
      %p100 = pneg %p99
    $region18: #{soft_hifigan_forward.7} parent=5 // pred_check_branch
      %102 = sbr.rel (%p100) target = $region20
    $region19: #{soft_hifigan_forward.7} parent=5 // pred_region
      // Predicated region
      $region21: #{soft_hifigan_forward.7} parent=19 // pred_check
        %p103 = pneg %p28
      $region22: #{soft_hifigan_forward.7} parent=19 // pred_check_branch
        %105 = sbr.rel (%p103) target = $region24
      $region23: #{soft_hifigan_forward.7} parent=19 // pred_region
        %p106 = scmp.lt.s32.totalorder %s8, 1
        %s107 = scalar_select %p106, %s8, 1
        %s108 = smul.addr %s107, 16
        %s109 = smul.addr %s108, 4
        %s110 = scalar_lea.vmem %s0, %s109
      $region24: #{soft_hifigan_forward.7} parent=19 // pred_fallthru
        _
    $region20: #{soft_hifigan_forward.7} parent=5 // pred_fallthru
      _
    %p111 = scmp.le.s32.totalorder 1, %s8
    %p112 = scmp.lt.s32.totalorder %s8, 3
    %p113 = pnand %p111, %p112
    %p114 = pneg %p113
    // Predicated region
    $region25: #{soft_hifigan_forward.7} parent=5 // pred_check
      _
    $region26: #{soft_hifigan_forward.7} parent=5 // pred_check_branch
      %116 = sbr.rel (%p113) target = $region28
    $region27: #{soft_hifigan_forward.7} parent=5 // pred_region
      %s117 = ssub.s32 %s8, 1
      %p118 = scmp.lt.s32.totalorder %s13, 1
      %s119 = scalar_select %p118, %s13, 1
      %s120 = smul.addr %s119, 16
      %s121 = smul.addr %s120, 4
      %s122 = scalar_lea.vmem %s0, %s121
      %p123 = pneg %p34
      %p124 = pneg %p31
      %p125 = pneg %p55
      %p126 = pneg %p52
      %p127 = pneg %p81
      %p128 = pneg %p78
      %p129 = scmp.lt.s32.totalorder %s13, 1
      %s130 = scalar_select %p129, %s13, 1
      %s131 = smul.addr %s130, 2
      %s132 = smul.addr %s131, 4
      %s133 = scalar_lea.vmem %s2, %s132
      %p134 = scmp.lt.s32.totalorder %s13, 1
      %s135 = scalar_select %p134, %s13, 1
      %s136 = smul.addr %s135, 16
      %s137 = smul.addr %s136, 4
      %s138 = scalar_lea.vmem %s0, %s137
      %p139 = scmp.lt.s32.totalorder %s13, 1
      %s140 = scalar_select %p139, %s13, 1
      %s141 = smul.addr %s140, 2
      %s142 = smul.addr %s141, 4
      %s143 = scalar_lea.vmem %s2, %s142
      %v145 = vld [vmem:[%s1] sm:$0xf]
      %v146 = vld [vmem:[%s1 + $0x4] sm:$0xf]
      %v147 = vld [vmem:[%s138] sm:$0xf]
      %v148 = vld [vmem:[%s138 + $0x4] sm:$0xf]
      %v149 = vld [vmem:[%s138 + $0x8] sm:$0xf]
      %v150 = vld [vmem:[%s138 + $0xc] sm:$0xf]
      %v151 = vld [vmem:[%s138 + $0x10] sm:$0xf]
      %v152 = vld [vmem:[%s138 + $0x14] sm:$0xf]
      %v153 = vld [vmem:[%s138 + $0x18] sm:$0xf]
      %v154 = vld [vmem:[%s138 + $0x1c] sm:$0xf]
      %v155 = vld [vmem:[%s138 + $0x20] sm:$0xf]
      %v156 = vld [vmem:[%s138 + $0x24] sm:$0xf]
      %v157 = vld [vmem:[%s138 + $0x28] sm:$0xf]
      %v158 = vld [vmem:[%s138 + $0x2c] sm:$0xf]
      %v159 = vld [vmem:[%s138 + $0x30] sm:$0xf]
      %v160 = vld [vmem:[%s138 + $0x34] sm:$0xf]
      %v161 = vld [vmem:[%s138 + $0x38] sm:$0xf]
      %v162 = vld [vmem:[%s138 + $0x3c] sm:$0xf]
      %v165 = vunpack.c.l.b16 %v145
      %v166 = vunpack.c.l.b16 %v146
      %v167 = vpack.c.b16 %v166, %v165
      %v184 = vunpack.c.l.b16 %v147
      %v185 = vunpack.c.l.b16 %v148
      %v186 = vunpack.c.l.b16 %v149
      %v187 = vunpack.c.l.b16 %v150
      %v188 = vunpack.c.l.b16 %v151
      %v189 = vunpack.c.l.b16 %v152
      %v190 = vunpack.c.l.b16 %v153
      %v191 = vunpack.c.l.b16 %v154
      %v192 = vunpack.c.l.b16 %v155
      %v193 = vunpack.c.l.b16 %v156
      %v194 = vunpack.c.l.b16 %v157
      %v195 = vunpack.c.l.b16 %v158
      %v196 = vunpack.c.l.b16 %v159
      %v197 = vunpack.c.l.b16 %v160
      %v198 = vunpack.c.l.b16 %v161
      %v199 = vunpack.c.l.b16 %v162
      %v200 = vpack.c.b16 %v185, %v184
      %v201 = vpack.c.b16 %v187, %v186
      %v202 = vpack.c.b16 %v189, %v188
      %v203 = vpack.c.b16 %v191, %v190
      %v204 = vpack.c.b16 %v193, %v192
      %v205 = vpack.c.b16 %v195, %v194
      %v206 = vpack.c.b16 %v197, %v196
      %v207 = vpack.c.b16 %v199, %v198
      %vm208 = vcmask 261120
      %v210 = vsel %vm208, %v167, 0
      %v213 = vsel %vm208, %v200, 0
      %v216 = vsel %vm208, %v201, 0
      %v219 = vsel %vm208, %v202, 0
      %v222 = vsel %vm208, %v203, 0
      %v225 = vsel %vm208, %v204, 0
      %v228 = vsel %vm208, %v205, 0
      %v231 = vsel %vm208, %v206, 0
      %v234 = vsel %vm208, %v207, 0
      %236 = vmatprep.subr.bf16.mxu0 0
      %237 = vmatpush1.bf16.xpose.msra.mxu0 %v234
      %238 = vmatprep.subr.bf16.mxu0 0
      %239 = vmatpush1.bf16.xpose.msra.mxu0 %v231
      %240 = vmatprep.subr.bf16.mxu0 0
      %241 = vmatpush1.bf16.xpose.msra.mxu0 %v228
      %242 = vmatprep.subr.bf16.mxu0 0
      %243 = vmatpush1.bf16.xpose.msra.mxu0 %v225
      %244 = vmatprep.subr.bf16.mxu0 0
      %245 = vmatpush1.bf16.xpose.msra.mxu0 %v222
      %246 = vmatprep.subr.bf16.mxu0 0
      %247 = vmatpush1.bf16.xpose.msra.mxu0 %v219
      %248 = vmatprep.subr.bf16.mxu0 0
      %249 = vmatpush1.bf16.xpose.msra.mxu0 %v216
      %250 = vmatprep.subr.bf16.mxu0 0
      %251 = vmatpush1.bf16.xpose.msra.mxu0 %v213
      %252 = vmatprep.subr.bf16.mxu0 0
      %253 = vmatpush2.bf16.xpose.msra.mxu0 0
      %254 = vmatprep.subr.bf16.mxu0 0
      %255 = vmatpush2.bf16.xpose.msra.mxu0 0
      %256 = vmatprep.subr.bf16.mxu0 0
      %257 = vmatpush2.bf16.xpose.msra.mxu0 0
      %258 = vmatprep.subr.bf16.mxu0 0
      %259 = vmatpush2.bf16.xpose.msra.mxu0 0
      %260 = vmatprep.subr.bf16.mxu0 0
      %261 = vmatpush2.bf16.xpose.msra.mxu0 0
      %262 = vmatprep.subr.bf16.mxu0 0
      %263 = vmatpush2.bf16.xpose.msra.mxu0 0
      %264 = vmatprep.subr.bf16.mxu0 0
      %265 = vmatpush2.bf16.xpose.msra.mxu0 0
      %266 = vmatprep.subr.bf16.mxu0 0
      %267 = vmatpush2.bf16.xpose.msra.mxu0 0
      %268 = vmatprep.mubr.bf16.mxu0 0
      %269 = vmatmul.mubr.bf16.gmra.mxu0 %v210
      %v270 = vpop.f32.mrf.mxu0
      %v271 = vadd.f32 0.0, %v270
      %v272 = vpop.f32.mrf.mxu0
      %v273 = vpop.f32.mrf.mxu0
      %v274 = vadd.f32 0.0, %v273
      %v275 = vpop.f32.mrf.mxu0
      %276 = vdwg.mxu0
      %v277 = vpack.c.bf16 %v274, %v271
      %v279 = vunpack.c.l.b16 %v277
      %v280 = vunpack.c.h.b16 %v277
      %v281 = vpack.c.b16 %v279, %v279
      %v282 = vpack.c.b16 %v280, %v280
      %285 = vst [vmem:[%s143] sm:$0xf] %v281
      %286 = vst [vmem:[%s143 + $0x4] sm:$0xf] %v282
      %p287 = scmp.lt.s32.totalorder %s13, 1
      %s288 = scalar_select %p287, %s13, 1
      %s289 = smul.addr %s288, 2
      %s290 = smul.addr %s289, 4
      %s291 = scalar_lea.vmem %s2, %s290
      // Predicated region
      $region29: #{soft_hifigan_forward.7} parent=27 // pred_check
        %p292 = pneg %p78
      $region30: #{soft_hifigan_forward.7} parent=27 // pred_check_branch
        %294 = sbr.rel (%p292) target = $region32
      $region31: #{soft_hifigan_forward.7} parent=27 // pred_region
        _
      $region32: #{soft_hifigan_forward.7} parent=27 // pred_fallthru
        _
    $region28: #{soft_hifigan_forward.7} parent=5 // pred_fallthru
      _
    %p295 = scmp.le.s32.totalorder 2, %s8
    // Predicated region
    $region33: #{soft_hifigan_forward.7} parent=5 // pred_check
      %p296 = pneg %p295
    $region34: #{soft_hifigan_forward.7} parent=5 // pred_check_branch
      %298 = sbr.rel (%p296) target = $region36
    $region35: #{soft_hifigan_forward.7} parent=5 // pred_region
      %s299 = ssub.s32 %s8, 2
      // Predicated region
      $region37: #{soft_hifigan_forward.7} parent=35 // pred_check
        %p300 = pneg %p84
      $region38: #{soft_hifigan_forward.7} parent=35 // pred_check_branch
        %302 = sbr.rel (%p300) target = $region40
      $region39: #{soft_hifigan_forward.7} parent=35 // pred_region
        %p303 = scmp.lt.s32.totalorder %s14, 1
        %s304 = scalar_select %p303, %s14, 1
        %s305 = smul.addr %s304, 2
        %s306 = smul.addr %s305, 4
        %s307 = scalar_lea.vmem %s2, %s306
      $region40: #{soft_hifigan_forward.7} parent=35 // pred_fallthru
        _
    $region36: #{soft_hifigan_forward.7} parent=5 // pred_fallthru
      _
  $region6: #{soft_hifigan_forward.7} parent=0 // loop_footer
    %s12 = sadd.s32 1, %s8
  $region7: #{soft_hifigan_forward.7} parent=0 // loop_footer_branch
    %7 = sbr.rel target = $region3
  $region8: #{soft_hifigan_forward.7} parent=0 // loop_exit
    _

// kernel: soft_hifigan_forward.9
$region0: #{soft_hifigan_forward.9}
  #allocation0 [shape = 'u32[]', space=smem, size = 0x4, offset = 0x4, fixed_abs, tag = 'smem constant byte address 0x4 - core index']
  #allocation1 [shape = 'u32[144,128]{1,0:T(1,128)}', space=vmem, size = 0x12000, scoped, tag = 'internal scratch']
  %s0 = inlined_call_operand.vmem [shape: bf16[2,32,128], index: 0, kind: input, shape index: {}]
  %s1 = inlined_call_operand.vmem [shape: bf16[2,16,65], index: 1, kind: input, shape index: {}]
  %s2 = inlined_call_operand.vmem [shape: bf16[2,2,16,128], index: 2, kind: output, shape index: {}]
  %s3 = sld [smem:[#allocation0]]
  $region41: #{soft_hifigan_forward.9} parent=0
    _
  %s5 = ssub.s32 1, %s3
  %s6 = scalar_select 0, %s5, %s3
  loop: start=0, step=1, limit=4
  $region2: #{soft_hifigan_forward.9} parent=0 // loop_pre_header
    _
  $region3: #{soft_hifigan_forward.9} parent=0 // loop_header
    %s8 = sphi 0, %s12
    %p9 = scmp.ge.s32.totalorder %s8, 4
    %s18 = sphi 0, %s20
    %s21 = sphi 0, %s18
    %s22 = sphi 0, %s21
    %s38 = sphi 0, %s22
    %s42 = sphi 0, %s42
    %s44 = sphi 0, %s42
    %s45 = sphi 0, %s44
    %s59 = sphi 0, %s45
    %s65 = sphi 0, %s67
    %s68 = sphi 0, %s65
    %s69 = sphi 0, %s68
    %s85 = sphi 0, %s69
  $region4: #{soft_hifigan_forward.9} parent=0 // loop_header_branch
    %11 = sbr.rel (%p9) target = $region8
  $region5: #{soft_hifigan_forward.9} parent=0 // loop_body
    %s13 = ssub.s32 %s8, 1
    %s14 = ssub.s32 %s8, 2
    %s15 = sadd.s32 %s8, 1
    %s16 = ssub.s32 %s8, %s15
    %p17 = scmp.eq.s32.totalorder %s16, 0
    %s19 = sadd.s32 %s18, 1
    %s20 = scalar_select %p17, %s18, %s19
    %p23 = pneg %p17
    %p24 = scmp.eq.s32.totalorder %s8, 1
    %p25 = por %p23, %p24
    %p26 = scmp.ne.s32.totalorder %s18, %s21
    %p27 = scmp.eq.s32.totalorder %s8, 0
    %p28 = por %p26, %p27
    %p29 = scmp.ne.s32.totalorder %s18, %s21
    %p30 = scmp.eq.s32.totalorder %s13, 1
    %p31 = por %p29, %p30
    %p32 = scmp.ne.s32.totalorder %s21, %s22
    %p33 = scmp.eq.s32.totalorder %s13, 0
    %p34 = por %p32, %p33
    %p35 = scmp.ne.s32.totalorder %s21, %s22
    %p36 = scmp.eq.s32.totalorder %s14, 1
    %p37 = por %p35, %p36
    %p39 = scmp.ne.s32.totalorder %s22, %s38
    %p40 = scmp.eq.s32.totalorder %s14, 0
    %p41 = por %p39, %p40
    %s43 = sadd.s32 %s42, 1
    %p46 = scmp.eq.s32.totalorder %s8, 1
    %p47 = scmp.ne.s32.totalorder %s42, %s44
    %p48 = scmp.eq.s32.totalorder %s8, 0
    %p49 = por %p47, %p48
    %p50 = scmp.ne.s32.totalorder %s42, %s44
    %p51 = scmp.eq.s32.totalorder %s13, 1
    %p52 = por %p50, %p51
    %p53 = scmp.ne.s32.totalorder %s44, %s45
    %p54 = scmp.eq.s32.totalorder %s13, 0
    %p55 = por %p53, %p54
    %p56 = scmp.ne.s32.totalorder %s44, %s45
    %p57 = scmp.eq.s32.totalorder %s14, 1
    %p58 = por %p56, %p57
    %p60 = scmp.ne.s32.totalorder %s45, %s59
    %p61 = scmp.eq.s32.totalorder %s14, 0
    %p62 = por %p60, %p61
    %s63 = ssub.s32 %s8, %s15
    %p64 = scmp.eq.s32.totalorder %s63, 0
    %s66 = sadd.s32 %s65, 1
    %s67 = scalar_select %p64, %s65, %s66
    %p70 = pneg %p64
    %p71 = scmp.eq.s32.totalorder %s8, 1
    %p72 = por %p70, %p71
    %p73 = scmp.ne.s32.totalorder %s65, %s68
    %p74 = scmp.eq.s32.totalorder %s8, 0
    %p75 = por %p73, %p74
    %p76 = scmp.ne.s32.totalorder %s65, %s68
    %p77 = scmp.eq.s32.totalorder %s13, 1
    %p78 = por %p76, %p77
    %p79 = scmp.ne.s32.totalorder %s68, %s69
    %p80 = scmp.eq.s32.totalorder %s13, 0
    %p81 = por %p79, %p80
    %p82 = scmp.ne.s32.totalorder %s68, %s69
    %p83 = scmp.eq.s32.totalorder %s14, 1
    %p84 = por %p82, %p83
    %p86 = scmp.ne.s32.totalorder %s69, %s85
    %p87 = scmp.eq.s32.totalorder %s14, 0
    %p88 = por %p86, %p87
    %p89 = scmp.le.s32.totalorder 1, %s8
    %p90 = scmp.lt.s32.totalorder %s8, 3
    %p91 = pnand %p89, %p90
    %p92 = pneg %p91
    // Predicated region
    $region9: #{soft_hifigan_forward.9} parent=5 // pred_check
      _
    $region10: #{soft_hifigan_forward.9} parent=5 // pred_check_branch
      %94 = sbr.rel (%p91) target = $region12
    $region11: #{soft_hifigan_forward.9} parent=5 // pred_region
      %s95 = ssub.s32 %s8, 1
      // Predicated region
      $region13: #{soft_hifigan_forward.9} parent=11 // pred_check
        %p96 = pneg %p55
      $region14: #{soft_hifigan_forward.9} parent=11 // pred_check_branch
        %98 = sbr.rel (%p96) target = $region16
      $region15: #{soft_hifigan_forward.9} parent=11 // pred_region
        _
      $region16: #{soft_hifigan_forward.9} parent=11 // pred_fallthru
        _
    $region12: #{soft_hifigan_forward.9} parent=5 // pred_fallthru
      _
    %p99 = scmp.lt.s32.totalorder %s8, 2
    // Predicated region
    $region17: #{soft_hifigan_forward.9} parent=5 // pred_check
      %p100 = pneg %p99
    $region18: #{soft_hifigan_forward.9} parent=5 // pred_check_branch
      %102 = sbr.rel (%p100) target = $region20
    $region19: #{soft_hifigan_forward.9} parent=5 // pred_region
      // Predicated region
      $region21: #{soft_hifigan_forward.9} parent=19 // pred_check
        %p103 = pneg %p28
      $region22: #{soft_hifigan_forward.9} parent=19 // pred_check_branch
        %105 = sbr.rel (%p103) target = $region24
      $region23: #{soft_hifigan_forward.9} parent=19 // pred_region
        %p106 = scmp.lt.s32.totalorder %s8, 1
        %s107 = scalar_select %p106, %s8, 1
        %s108 = smul.addr %s107, 4
        %s109 = smul.addr %s108, 4
        %s110 = scalar_lea.vmem %s0, %s109
      $region24: #{soft_hifigan_forward.9} parent=19 // pred_fallthru
        _
    $region20: #{soft_hifigan_forward.9} parent=5 // pred_fallthru
      _
    %p111 = scmp.le.s32.totalorder 1, %s8
    %p112 = scmp.lt.s32.totalorder %s8, 3
    %p113 = pnand %p111, %p112
    %p114 = pneg %p113
    // Predicated region
    $region25: #{soft_hifigan_forward.9} parent=5 // pred_check
      _
    $region26: #{soft_hifigan_forward.9} parent=5 // pred_check_branch
      %116 = sbr.rel (%p113) target = $region28
    $region27: #{soft_hifigan_forward.9} parent=5 // pred_region
      %s117 = ssub.s32 %s8, 1
      %p118 = scmp.lt.s32.totalorder %s13, 1
      %s119 = scalar_select %p118, %s13, 1
      %s120 = smul.addr %s119, 4
      %s121 = smul.addr %s120, 4
      %s122 = scalar_lea.vmem %s0, %s121
      %p123 = pneg %p34
      %p124 = pneg %p31
      %p125 = pneg %p55
      %p126 = pneg %p52
      %p127 = pneg %p81
      %p128 = pneg %p78
      %p129 = scmp.lt.s32.totalorder %s13, 1
      %s130 = scalar_select %p129, %s13, 1
      %s131 = smul.addr %s130, 4
      %s132 = smul.addr %s131, 4
      %s133 = scalar_lea.vmem %s2, %s132
      %p134 = scmp.lt.s32.totalorder %s13, 1
      %s135 = scalar_select %p134, %s13, 1
      %s136 = smul.addr %s135, 4
      %s137 = smul.addr %s136, 4
      %s138 = scalar_lea.vmem %s0, %s137
      %p139 = scmp.lt.s32.totalorder %s13, 1
      %s140 = scalar_select %p139, %s13, 1
      %s141 = smul.addr %s140, 4
      %s142 = smul.addr %s141, 4
      %s143 = scalar_lea.vmem %s2, %s142
      %v146 = vld [vmem:[%s138] sm:$0xf]
      %v147 = vld [vmem:[%s138 + $0x4] sm:$0xf]
      %v148 = vld [vmem:[%s138 + $0x8] sm:$0xf]
      %v149 = vld [vmem:[%s138 + $0xc] sm:$0xf]
      %v154 = vunpack.c.l.b16 %v146
      %v155 = vunpack.c.l.b16 %v147
      %v156 = vunpack.c.l.b16 %v148
      %v157 = vunpack.c.l.b16 %v149
      %v158 = vpack.c.b16 %v155, %v154
      %v159 = vpack.c.b16 %v157, %v156
      %160 = vrot.lane.b32.xlu0 %v158, 1
      %v161 = vpop.permute.xlu0 %160
      %162 = vrot.lane.b32.xlu0 %v159, 1
      %v163 = vpop.permute.xlu0 %162
      %vm164 = vcmask 7168
      %v167 = vsel %vm164, 0, %v161
      %v169 = vsel %vm164, 0, %v163
      %v170 = vsel %vm164, %v161, 0
      %v171 = vsel %vm164, %v163, 0
      %174 = vrot.lane.b32.xlu0 %v167, 1
      %v175 = vpop.permute.xlu0 %174
      %176 = vrot.lane.b32.xlu0 %v169, 1
      %v177 = vpop.permute.xlu0 %176
      %v178 = vld [vmem:[%s1] sm:$0xf]
      %v179 = vld [vmem:[%s1 + $0x4] sm:$0xf]
      %v182 = vunpack.c.l.b16 %v178
      %v183 = vunpack.c.l.b16 %v179
      %v184 = vpack.c.b16 %v183, %v182
      %188 = vrot.lane.b32.xlu0 %v167, 127
      %v189 = vpop.permute.xlu0 %188
      %190 = vrot.lane.b32.xlu0 %v170, 127
      %v191 = vpop.permute.xlu0 %190
      %192 = vrot.lane.b32.xlu0 %v169, 127
      %v193 = vpop.permute.xlu0 %192
      %194 = vrot.lane.b32.xlu0 %v171, 127
      %v195 = vpop.permute.xlu0 %194
      %196 = vrot.lane.b32.xlu0 %v175, 127
      %v197 = vpop.permute.xlu0 %196
      %198 = vrot.lane.b32.xlu0 %v177, 127
      %v199 = vpop.permute.xlu0 %198
      %200 = vrot.lane.b32.xlu0 1065369472, 127
      %v201 = vpop.permute.xlu0 %200
      %vm202 = vcmask 1039360
      %v203 = vsel %vm202, %v189, %v191
      %v204 = vsel %vm202, %v193, %v195
      %vm209 = vcmask 531456
      %v211 = vsel %vm209, %v184, 0
      %vm213 = vcmask 1040384
      %v214 = vsel 0, 4294967295, 65535
      %v215 = vsel %vm213, %v214, 0
      %v217 = vand.u32 %v201, %v215
      %219 = vmatprep.subr.bf16.mxu0 0
      %220 = vmatpush1.bf16.msra.mxu0 0
      %221 = vmatprep.subr.bf16.mxu0 0
      %222 = vmatpush1.bf16.msra.mxu0 0
      %223 = vmatprep.subr.bf16.mxu0 0
      %224 = vmatpush1.bf16.msra.mxu0 0
      %225 = vmatprep.subr.bf16.mxu0 0
      %226 = vmatpush1.bf16.msra.mxu0 %v217
      %227 = vmatprep.subr.bf16.mxu0 0
      %228 = vmatpush1.bf16.msra.mxu0 %v199
      %229 = vmatprep.subr.bf16.mxu0 0
      %230 = vmatpush1.bf16.msra.mxu0 %v197
      %231 = vmatprep.subr.bf16.mxu0 0
      %232 = vmatpush1.bf16.msra.mxu0 %v204
      %233 = vmatprep.subr.bf16.mxu0 0
      %234 = vmatpush1.bf16.msra.mxu0 %v203
      %235 = vmatprep.subr.bf16.mxu0 0
      %236 = vmatpush2.bf16.msra.mxu0 0
      %237 = vmatprep.subr.bf16.mxu0 0
      %238 = vmatpush2.bf16.msra.mxu0 0
      %239 = vmatprep.subr.bf16.mxu0 0
      %240 = vmatpush2.bf16.msra.mxu0 0
      %241 = vmatprep.subr.bf16.mxu0 0
      %242 = vmatpush2.bf16.msra.mxu0 0
      %243 = vmatprep.subr.bf16.mxu0 0
      %244 = vmatpush2.bf16.msra.mxu0 0
      %245 = vmatprep.subr.bf16.mxu0 0
      %246 = vmatpush2.bf16.msra.mxu0 0
      %247 = vmatprep.subr.bf16.mxu0 0
      %248 = vmatpush2.bf16.msra.mxu0 0
      %249 = vmatprep.subr.bf16.mxu0 0
      %250 = vmatpush2.bf16.msra.mxu0 0
      %251 = vmatprep.mubr.bf16.mxu0 0
      %252 = vmatmul.mubr.bf16.gmra.mxu0 %v211
      %v253 = vpop.f32.mrf.mxu0
      %v254 = vadd.f32 0.0, %v253
      %v255 = vpop.f32.mrf.mxu0
      %v256 = vpop.f32.mrf.mxu0
      %v257 = vadd.f32 0.0, %v256
      %v258 = vpop.f32.mrf.mxu0
      %259 = vdwg.mxu0
      %vm260 = vcmp.ge.f32.partialorder %v254, 0.0
      %vm261 = vcmp.ge.f32.partialorder %v257, 0.0
      %v262 = vmul.f32 %v254, 0.1
      %v263 = vmul.f32 %v257, 0.1
      %v264 = vsel %vm260, %v254, %v262
      %v265 = vsel %vm261, %v257, %v263
      %v266 = vlaneseq
      %v267 = vand.u32 %v266, 127
      %vm268 = vcmp.lt.s32.totalorder %v267, 8
      %v269 = vsel %vm268, %v264, 0.0
      %v270 = vsel %vm268, %v265, 0.0
      %v271 = vpack.c.bf16 %v270, %v269
      %v273 = vunpack.c.l.b16 %v271
      %v274 = vunpack.c.h.b16 %v271
      %v275 = vpack.c.b16 %v273, %v273
      %v276 = vpack.c.b16 %v274, %v274
      %279 = vst [vmem:[%s143] sm:$0xf] %v275
      %280 = vst [vmem:[%s143 + $0x4] sm:$0xf] %v276
      %281 = vrot.lane.b32.xlu0 %v170, 1
      %v282 = vpop.permute.xlu0 %281
      %283 = vrot.lane.b32.xlu0 %v171, 1
      %v284 = vpop.permute.xlu0 %283
      %vm285 = vcmask 7168
      %v286 = vsel %vm285, %v175, %v282
      %v287 = vsel %vm285, %v177, %v284
      %s288 = scalar_lea.vmem %s1, 8
      %v289 = vld [vmem:[%s288] sm:$0xf]
      %v290 = vld [vmem:[%s288 + $0x4] sm:$0xf]
      %v293 = vunpack.c.l.b16 %v289
      %v294 = vunpack.c.l.b16 %v290
      %v295 = vpack.c.b16 %v294, %v293
      %296 = vrot.lane.b32.xlu0 %v167, 126
      %v297 = vpop.permute.xlu0 %296
      %298 = vrot.lane.b32.xlu0 %v170, 126
      %v299 = vpop.permute.xlu0 %298
      %300 = vrot.lane.b32.xlu0 %v169, 126
      %v301 = vpop.permute.xlu0 %300
      %302 = vrot.lane.b32.xlu0 %v171, 126
      %v303 = vpop.permute.xlu0 %302
      %304 = vrot.lane.b32.xlu0 %v175, 126
      %v305 = vpop.permute.xlu0 %304
      %306 = vrot.lane.b32.xlu0 %v286, 126
      %v307 = vpop.permute.xlu0 %306
      %308 = vrot.lane.b32.xlu0 %v177, 126
      %v309 = vpop.permute.xlu0 %308
      %310 = vrot.lane.b32.xlu0 %v287, 126
      %v311 = vpop.permute.xlu0 %310
      %312 = vrot.lane.b32.xlu0 1065369472, 126
      %v313 = vpop.permute.xlu0 %312
      %vm314 = vcmask 1031168
      %v315 = vsel %vm314, %v297, %v299
      %v316 = vsel %vm314, %v301, %v303
      %v317 = vsel %vm314, %v305, %v307
      %v318 = vsel %vm314, %v309, %v311
      %v324 = vsel %vm209, %v295, 0
      %v327 = vand.u32 %v313, %v215
      %329 = vmatprep.subr.bf16.mxu0 0
      %330 = vmatpush1.bf16.msra.mxu0 0
      %331 = vmatprep.subr.bf16.mxu0 0
      %332 = vmatpush1.bf16.msra.mxu0 0
      %333 = vmatprep.subr.bf16.mxu0 0
      %334 = vmatpush1.bf16.msra.mxu0 0
      %335 = vmatprep.subr.bf16.mxu0 0
      %336 = vmatpush1.bf16.msra.mxu0 %v327
      %337 = vmatprep.subr.bf16.mxu0 0
      %338 = vmatpush1.bf16.msra.mxu0 %v318
      %339 = vmatprep.subr.bf16.mxu0 0
      %340 = vmatpush1.bf16.msra.mxu0 %v317
      %341 = vmatprep.subr.bf16.mxu0 0
      %342 = vmatpush1.bf16.msra.mxu0 %v316
      %343 = vmatprep.subr.bf16.mxu0 0
      %344 = vmatpush1.bf16.msra.mxu0 %v315
      %345 = vmatprep.subr.bf16.mxu0 0
      %346 = vmatpush2.bf16.msra.mxu0 0
      %347 = vmatprep.subr.bf16.mxu0 0
      %348 = vmatpush2.bf16.msra.mxu0 0
      %349 = vmatprep.subr.bf16.mxu0 0
      %350 = vmatpush2.bf16.msra.mxu0 0
      %351 = vmatprep.subr.bf16.mxu0 0
      %352 = vmatpush2.bf16.msra.mxu0 0
      %353 = vmatprep.subr.bf16.mxu0 0
      %354 = vmatpush2.bf16.msra.mxu0 0
      %355 = vmatprep.subr.bf16.mxu0 0
      %356 = vmatpush2.bf16.msra.mxu0 0
      %357 = vmatprep.subr.bf16.mxu0 0
      %358 = vmatpush2.bf16.msra.mxu0 0
      %359 = vmatprep.subr.bf16.mxu0 0
      %360 = vmatpush2.bf16.msra.mxu0 0
      %361 = vmatprep.mubr.bf16.mxu0 0
      %362 = vmatmul.mubr.bf16.gmra.mxu0 %v324
      %v363 = vpop.f32.mrf.mxu0
      %v364 = vadd.f32 0.0, %v363
      %v365 = vpop.f32.mrf.mxu0
      %v366 = vpop.f32.mrf.mxu0
      %v367 = vadd.f32 0.0, %v366
      %v368 = vpop.f32.mrf.mxu0
      %369 = vdwg.mxu0
      %vm370 = vcmp.ge.f32.partialorder %v364, 0.0
      %vm371 = vcmp.ge.f32.partialorder %v367, 0.0
      %v372 = vmul.f32 %v364, 0.1
      %v373 = vmul.f32 %v367, 0.1
      %v374 = vsel %vm370, %v364, %v372
      %v375 = vsel %vm371, %v367, %v373
      %v376 = vsel %vm268, %v374, 0.0
      %v377 = vsel %vm268, %v375, 0.0
      %v378 = vpack.c.bf16 %v377, %v376
      %v380 = vunpack.c.l.b16 %v378
      %v381 = vunpack.c.h.b16 %v378
      %v382 = vpack.c.b16 %v380, %v380
      %v383 = vpack.c.b16 %v381, %v381
      %s386 = scalar_lea.vmem %s143, 8
      %387 = vst [vmem:[%s386] sm:$0xf] %v382
      %388 = vst [vmem:[%s386 + $0x4] sm:$0xf] %v383
      %p389 = scmp.lt.s32.totalorder %s13, 1
      %s390 = scalar_select %p389, %s13, 1
      %s391 = smul.addr %s390, 4
      %s392 = smul.addr %s391, 4
      %s393 = scalar_lea.vmem %s2, %s392
      // Predicated region
      $region29: #{soft_hifigan_forward.9} parent=27 // pred_check
        %p394 = pneg %p78
      $region30: #{soft_hifigan_forward.9} parent=27 // pred_check_branch
        %396 = sbr.rel (%p394) target = $region32
      $region31: #{soft_hifigan_forward.9} parent=27 // pred_region
        _
      $region32: #{soft_hifigan_forward.9} parent=27 // pred_fallthru
        _
    $region28: #{soft_hifigan_forward.9} parent=5 // pred_fallthru
      _
    %p397 = scmp.le.s32.totalorder 2, %s8
    // Predicated region
    $region33: #{soft_hifigan_forward.9} parent=5 // pred_check
      %p398 = pneg %p397
    $region34: #{soft_hifigan_forward.9} parent=5 // pred_check_branch
      %400 = sbr.rel (%p398) target = $region36
    $region35: #{soft_hifigan_forward.9} parent=5 // pred_region
      %s401 = ssub.s32 %s8, 2
      // Predicated region
      $region37: #{soft_hifigan_forward.9} parent=35 // pred_check
        %p402 = pneg %p84
      $region38: #{soft_hifigan_forward.9} parent=35 // pred_check_branch
        %404 = sbr.rel (%p402) target = $region40
      $region39: #{soft_hifigan_forward.9} parent=35 // pred_region
        %p405 = scmp.lt.s32.totalorder %s14, 1
        %s406 = scalar_select %p405, %s14, 1
        %s407 = smul.addr %s406, 4
        %s408 = smul.addr %s407, 4
        %s409 = scalar_lea.vmem %s2, %s408
      $region40: #{soft_hifigan_forward.9} parent=35 // pred_fallthru
        _
    $region36: #{soft_hifigan_forward.9} parent=5 // pred_fallthru
      _
  $region6: #{soft_hifigan_forward.9} parent=0 // loop_footer
    %s12 = sadd.s32 1, %s8
  $region7: #{soft_hifigan_forward.9} parent=0 // loop_footer_branch
    %7 = sbr.rel target = $region3
  $region8: #{soft_hifigan_forward.9} parent=0 // loop_exit
    _

// kernel: soft_hifigan_forward.11
$region0: #{soft_hifigan_forward.11}
  #allocation0 [shape = 'u32[]', space=smem, size = 0x4, offset = 0x4, fixed_abs, tag = 'smem constant byte address 0x4 - core index']
  #allocation1 [shape = 'u32[144,128]{1,0:T(1,128)}', space=vmem, size = 0x12000, scoped, tag = 'internal scratch']
  %s0 = inlined_call_operand.vmem [shape: bf16[2,16,256], index: 0, kind: input, shape index: {}]
  %s1 = inlined_call_operand.vmem [shape: bf16[2,8,33], index: 1, kind: input, shape index: {}]
  %s2 = inlined_call_operand.vmem [shape: bf16[2,2,8,256], index: 2, kind: output, shape index: {}]
  %s3 = sld [smem:[#allocation0]]
  $region41: #{soft_hifigan_forward.11} parent=0
    _
  %s5 = ssub.s32 1, %s3
  %s6 = scalar_select 0, %s5, %s3
  loop: start=0, step=1, limit=4
  $region2: #{soft_hifigan_forward.11} parent=0 // loop_pre_header
    _
  $region3: #{soft_hifigan_forward.11} parent=0 // loop_header
    %s8 = sphi 0, %s12
    %p9 = scmp.ge.s32.totalorder %s8, 4
    %s18 = sphi 0, %s20
    %s21 = sphi 0, %s18
    %s22 = sphi 0, %s21
    %s38 = sphi 0, %s22
    %s42 = sphi 0, %s42
    %s44 = sphi 0, %s42
    %s45 = sphi 0, %s44
    %s59 = sphi 0, %s45
    %s65 = sphi 0, %s67
    %s68 = sphi 0, %s65
    %s69 = sphi 0, %s68
    %s85 = sphi 0, %s69
  $region4: #{soft_hifigan_forward.11} parent=0 // loop_header_branch
    %11 = sbr.rel (%p9) target = $region8
  $region5: #{soft_hifigan_forward.11} parent=0 // loop_body
    %s13 = ssub.s32 %s8, 1
    %s14 = ssub.s32 %s8, 2
    %s15 = sadd.s32 %s8, 1
    %s16 = ssub.s32 %s8, %s15
    %p17 = scmp.eq.s32.totalorder %s16, 0
    %s19 = sadd.s32 %s18, 1
    %s20 = scalar_select %p17, %s18, %s19
    %p23 = pneg %p17
    %p24 = scmp.eq.s32.totalorder %s8, 1
    %p25 = por %p23, %p24
    %p26 = scmp.ne.s32.totalorder %s18, %s21
    %p27 = scmp.eq.s32.totalorder %s8, 0
    %p28 = por %p26, %p27
    %p29 = scmp.ne.s32.totalorder %s18, %s21
    %p30 = scmp.eq.s32.totalorder %s13, 1
    %p31 = por %p29, %p30
    %p32 = scmp.ne.s32.totalorder %s21, %s22
    %p33 = scmp.eq.s32.totalorder %s13, 0
    %p34 = por %p32, %p33
    %p35 = scmp.ne.s32.totalorder %s21, %s22
    %p36 = scmp.eq.s32.totalorder %s14, 1
    %p37 = por %p35, %p36
    %p39 = scmp.ne.s32.totalorder %s22, %s38
    %p40 = scmp.eq.s32.totalorder %s14, 0
    %p41 = por %p39, %p40
    %s43 = sadd.s32 %s42, 1
    %p46 = scmp.eq.s32.totalorder %s8, 1
    %p47 = scmp.ne.s32.totalorder %s42, %s44
    %p48 = scmp.eq.s32.totalorder %s8, 0
    %p49 = por %p47, %p48
    %p50 = scmp.ne.s32.totalorder %s42, %s44
    %p51 = scmp.eq.s32.totalorder %s13, 1
    %p52 = por %p50, %p51
    %p53 = scmp.ne.s32.totalorder %s44, %s45
    %p54 = scmp.eq.s32.totalorder %s13, 0
    %p55 = por %p53, %p54
    %p56 = scmp.ne.s32.totalorder %s44, %s45
    %p57 = scmp.eq.s32.totalorder %s14, 1
    %p58 = por %p56, %p57
    %p60 = scmp.ne.s32.totalorder %s45, %s59
    %p61 = scmp.eq.s32.totalorder %s14, 0
    %p62 = por %p60, %p61
    %s63 = ssub.s32 %s8, %s15
    %p64 = scmp.eq.s32.totalorder %s63, 0
    %s66 = sadd.s32 %s65, 1
    %s67 = scalar_select %p64, %s65, %s66
    %p70 = pneg %p64
    %p71 = scmp.eq.s32.totalorder %s8, 1
    %p72 = por %p70, %p71
    %p73 = scmp.ne.s32.totalorder %s65, %s68
    %p74 = scmp.eq.s32.totalorder %s8, 0
    %p75 = por %p73, %p74
    %p76 = scmp.ne.s32.totalorder %s65, %s68
    %p77 = scmp.eq.s32.totalorder %s13, 1
    %p78 = por %p76, %p77
    %p79 = scmp.ne.s32.totalorder %s68, %s69
    %p80 = scmp.eq.s32.totalorder %s13, 0
    %p81 = por %p79, %p80
    %p82 = scmp.ne.s32.totalorder %s68, %s69
    %p83 = scmp.eq.s32.totalorder %s14, 1
    %p84 = por %p82, %p83
    %p86 = scmp.ne.s32.totalorder %s69, %s85
    %p87 = scmp.eq.s32.totalorder %s14, 0
    %p88 = por %p86, %p87
    %p89 = scmp.le.s32.totalorder 1, %s8
    %p90 = scmp.lt.s32.totalorder %s8, 3
    %p91 = pnand %p89, %p90
    %p92 = pneg %p91
    // Predicated region
    $region9: #{soft_hifigan_forward.11} parent=5 // pred_check
      _
    $region10: #{soft_hifigan_forward.11} parent=5 // pred_check_branch
      %94 = sbr.rel (%p91) target = $region12
    $region11: #{soft_hifigan_forward.11} parent=5 // pred_region
      %s95 = ssub.s32 %s8, 1
      // Predicated region
      $region13: #{soft_hifigan_forward.11} parent=11 // pred_check
        %p96 = pneg %p55
      $region14: #{soft_hifigan_forward.11} parent=11 // pred_check_branch
        %98 = sbr.rel (%p96) target = $region16
      $region15: #{soft_hifigan_forward.11} parent=11 // pred_region
        _
      $region16: #{soft_hifigan_forward.11} parent=11 // pred_fallthru
        _
    $region12: #{soft_hifigan_forward.11} parent=5 // pred_fallthru
      _
    %p99 = scmp.lt.s32.totalorder %s8, 2
    // Predicated region
    $region17: #{soft_hifigan_forward.11} parent=5 // pred_check
      %p100 = pneg %p99
    $region18: #{soft_hifigan_forward.11} parent=5 // pred_check_branch
      %102 = sbr.rel (%p100) target = $region20
    $region19: #{soft_hifigan_forward.11} parent=5 // pred_region
      // Predicated region
      $region21: #{soft_hifigan_forward.11} parent=19 // pred_check
        %p103 = pneg %p28
      $region22: #{soft_hifigan_forward.11} parent=19 // pred_check_branch
        %105 = sbr.rel (%p103) target = $region24
      $region23: #{soft_hifigan_forward.11} parent=19 // pred_region
        %p106 = scmp.lt.s32.totalorder %s8, 1
        %s107 = scalar_select %p106, %s8, 1
        %s108 = smul.addr %s107, 4
        %s109 = smul.addr %s108, 4
        %s110 = scalar_lea.vmem %s0, %s109
      $region24: #{soft_hifigan_forward.11} parent=19 // pred_fallthru
        _
    $region20: #{soft_hifigan_forward.11} parent=5 // pred_fallthru
      _
    %p111 = scmp.le.s32.totalorder 1, %s8
    %p112 = scmp.lt.s32.totalorder %s8, 3
    %p113 = pnand %p111, %p112
    %p114 = pneg %p113
    // Predicated region
    $region25: #{soft_hifigan_forward.11} parent=5 // pred_check
      _
    $region26: #{soft_hifigan_forward.11} parent=5 // pred_check_branch
      %116 = sbr.rel (%p113) target = $region28
    $region27: #{soft_hifigan_forward.11} parent=5 // pred_region
      %s117 = ssub.s32 %s8, 1
      %p118 = scmp.lt.s32.totalorder %s13, 1
      %s119 = scalar_select %p118, %s13, 1
      %s120 = smul.addr %s119, 4
      %s121 = smul.addr %s120, 4
      %s122 = scalar_lea.vmem %s0, %s121
      %p123 = pneg %p34
      %p124 = pneg %p31
      %p125 = pneg %p55
      %p126 = pneg %p52
      %p127 = pneg %p81
      %p128 = pneg %p78
      %p129 = scmp.lt.s32.totalorder %s13, 1
      %s130 = scalar_select %p129, %s13, 1
      %s131 = smul.addr %s130, 4
      %s132 = smul.addr %s131, 4
      %s133 = scalar_lea.vmem %s2, %s132
      %p134 = scmp.lt.s32.totalorder %s13, 1
      %s135 = scalar_select %p134, %s13, 1
      %s136 = smul.addr %s135, 4
      %s137 = smul.addr %s136, 4
      %s138 = scalar_lea.vmem %s0, %s137
      %p139 = scmp.lt.s32.totalorder %s13, 1
      %s140 = scalar_select %p139, %s13, 1
      %s141 = smul.addr %s140, 4
      %s142 = smul.addr %s141, 4
      %s143 = scalar_lea.vmem %s2, %s142
      %v146 = vld [vmem:[%s138] sm:$0xff]
      %v147 = vld [vmem:[%s138 + $0x8] sm:$0xff]
      %v150 = vunpack.c.l.b16 %v146
      %v151 = vunpack.c.h.b16 %v146
      %v152 = vunpack.c.l.b16 %v147
      %v153 = vunpack.c.h.b16 %v147
      %v154 = vpack.c.b16 %v152, %v150
      %v155 = vpack.c.b16 %v153, %v151
      %156 = vrot.lane.b32.xlu0 %v154, 1
      %v157 = vpop.permute.xlu0 %156
      %158 = vrot.lane.b32.xlu0 %v155, 1
      %v159 = vpop.permute.xlu0 %158
      %vm160 = vcmask 7168
      %v161 = vsel %vm160, %v157, %v159
      %vm162 = vcmask 7168
      %v165 = vsel %vm162, 0, %v157
      %v167 = vsel %vm162, %v159, 0
      %169 = vrot.lane.b32.xlu0 %v165, 1
      %v170 = vpop.permute.xlu0 %169
      %171 = vrot.lane.b32.xlu0 %v161, 1
      %v172 = vpop.permute.xlu0 %171
      %v173 = vsel %vm160, %v170, %v172
      %v174 = vld [vmem:[%s1] sm:$0xf]
      %177 = vrot.lane.b32.xlu0 %v165, 127
      %v178 = vpop.permute.xlu0 %177
      %179 = vrot.lane.b32.xlu0 %v161, 127
      %v180 = vpop.permute.xlu0 %179
      %181 = vrot.lane.b32.xlu0 %v167, 127
      %v182 = vpop.permute.xlu0 %181
      %183 = vrot.lane.b32.xlu0 %v170, 127
      %v184 = vpop.permute.xlu0 %183
      %185 = vrot.lane.b32.xlu0 %v173, 127
      %v186 = vpop.permute.xlu0 %185
      %187 = vrot.lane.b32.xlu0 %v172, 127
      %v188 = vpop.permute.xlu0 %187
      %189 = vrot.lane.b32.xlu0 1065369472, 127
      %v190 = vpop.permute.xlu0 %189
      %vm191 = vcmask 1039360
      %v192 = vsel %vm191, %v178, %v180
      %v193 = vsel %vm191, %v180, %v182
      %v194 = vsel %vm191, %v184, %v186
      %v195 = vsel %vm191, %v186, %v188
      %vm200 = vcmask 269312
      %v202 = vsel %vm200, %v174, 0
      %vm204 = vcmask 1040384
      %v205 = vsel 0, 4294967295, 65535
      %v206 = vsel %vm204, %v205, 0
      %v208 = vand.u32 %v190, %v206
      %210 = vmatprep.subr.bf16.mxu0 0
      %211 = vmatpush1.bf16.msra.mxu0 0
      %212 = vmatprep.subr.bf16.mxu0 0
      %213 = vmatpush1.bf16.msra.mxu0 0
      %214 = vmatprep.subr.bf16.mxu0 0
      %215 = vmatpush1.bf16.msra.mxu0 0
      %216 = vmatprep.subr.bf16.mxu0 0
      %217 = vmatpush1.bf16.msra.mxu0 0
      %218 = vmatprep.subr.bf16.mxu0 0
      %219 = vmatpush1.bf16.msra.mxu0 0
      %220 = vmatprep.subr.bf16.mxu0 %v208
      %221 = vmatpush1.bf16.msra.mxu0 %v208
      %222 = vmatprep.subr.bf16.mxu0 %v195
      %223 = vmatpush1.bf16.msra.mxu0 %v194
      %224 = vmatprep.subr.bf16.mxu0 %v193
      %225 = vmatpush1.bf16.msra.mxu0 %v192
      %226 = vmatprep.subr.bf16.mxu0 0
      %227 = vmatpush2.bf16.msra.mxu0 0
      %228 = vmatprep.subr.bf16.mxu0 0
      %229 = vmatpush2.bf16.msra.mxu0 0
      %230 = vmatprep.subr.bf16.mxu0 0
      %231 = vmatpush2.bf16.msra.mxu0 0
      %232 = vmatprep.subr.bf16.mxu0 0
      %233 = vmatpush2.bf16.msra.mxu0 0
      %234 = vmatprep.subr.bf16.mxu0 0
      %235 = vmatpush2.bf16.msra.mxu0 0
      %236 = vmatprep.subr.bf16.mxu0 0
      %237 = vmatpush2.bf16.msra.mxu0 0
      %238 = vmatprep.subr.bf16.mxu0 0
      %239 = vmatpush2.bf16.msra.mxu0 0
      %240 = vmatprep.subr.bf16.mxu0 0
      %241 = vmatpush2.bf16.msra.mxu0 0
      %242 = vmatprep.mubr.bf16.mxu0 0
      %243 = vmatmul.mubr.bf16.gmra.mxu0 %v202
      %v244 = vpop.f32.mrf.mxu0
      %v245 = vadd.f32 0.0, %v244
      %v246 = vpop.f32.mrf.mxu0
      %v247 = vadd.f32 0.0, %v246
      %v248 = vpop.f32.mrf.mxu0
      %v249 = vpop.f32.mrf.mxu0
      %250 = vdwg.mxu0
      %vm251 = vcmp.ge.f32.partialorder %v245, 0.0
      %vm252 = vcmp.ge.f32.partialorder %v247, 0.0
      %v253 = vmul.f32 %v245, 0.1
      %v254 = vmul.f32 %v247, 0.1
      %v255 = vsel %vm251, %v245, %v253
      %v256 = vsel %vm252, %v247, %v254
      %v257 = vlaneseq
      %v258 = vand.u32 %v257, 127
      %v259 = vadd.s32 %v258, 128
      %vm260 = vcmp.lt.s32.totalorder %v258, 16
      %vm261 = vcmp.lt.s32.totalorder %v259, 16
      %v262 = vsel %vm260, %v255, 0.0
      %v263 = vsel %vm261, %v256, 0.0
      %v264 = vpack.c.bf16 %v262, %v262
      %v265 = vpack.c.bf16 %v263, %v263
      %v268 = vunpack.c.l.b16 %v264
      %v269 = vunpack.c.l.b16 %v265
      %v270 = vpack.c.b16 %v269, %v268
      %272 = vst [vmem:[%s143] sm:$0xff] %v270
      %273 = vrot.lane.b32.xlu0 %v167, 1
      %v274 = vpop.permute.xlu0 %273
      %v275 = vsel %vm160, %v172, %v274
      %s276 = scalar_lea.vmem %s1, 4
      %v277 = vld [vmem:[%s276] sm:$0xf]
      %278 = vrot.lane.b32.xlu0 %v165, 126
      %v279 = vpop.permute.xlu0 %278
      %280 = vrot.lane.b32.xlu0 %v161, 126
      %v281 = vpop.permute.xlu0 %280
      %282 = vrot.lane.b32.xlu0 %v167, 126
      %v283 = vpop.permute.xlu0 %282
      %284 = vrot.lane.b32.xlu0 %v170, 126
      %v285 = vpop.permute.xlu0 %284
      %286 = vrot.lane.b32.xlu0 %v173, 126
      %v287 = vpop.permute.xlu0 %286
      %288 = vrot.lane.b32.xlu0 %v275, 126
      %v289 = vpop.permute.xlu0 %288
      %290 = vrot.lane.b32.xlu0 1065369472, 126
      %v291 = vpop.permute.xlu0 %290
      %vm292 = vcmask 1031168
      %v293 = vsel %vm292, %v279, %v281
      %v294 = vsel %vm292, %v281, %v283
      %v295 = vsel %vm292, %v285, %v287
      %v296 = vsel %vm292, %v287, %v289
      %v302 = vsel %vm200, %v277, 0
      %v305 = vand.u32 %v291, %v206
      %307 = vmatprep.subr.bf16.mxu0 0
      %308 = vmatpush1.bf16.msra.mxu0 0
      %309 = vmatprep.subr.bf16.mxu0 0
      %310 = vmatpush1.bf16.msra.mxu0 0
      %311 = vmatprep.subr.bf16.mxu0 0
      %312 = vmatpush1.bf16.msra.mxu0 0
      %313 = vmatprep.subr.bf16.mxu0 0
      %314 = vmatpush1.bf16.msra.mxu0 0
      %315 = vmatprep.subr.bf16.mxu0 0
      %316 = vmatpush1.bf16.msra.mxu0 0
      %317 = vmatprep.subr.bf16.mxu0 %v305
      %318 = vmatpush1.bf16.msra.mxu0 %v305
      %319 = vmatprep.subr.bf16.mxu0 %v296
      %320 = vmatpush1.bf16.msra.mxu0 %v295
      %321 = vmatprep.subr.bf16.mxu0 %v294
      %322 = vmatpush1.bf16.msra.mxu0 %v293
      %323 = vmatprep.subr.bf16.mxu0 0
      %324 = vmatpush2.bf16.msra.mxu0 0
      %325 = vmatprep.subr.bf16.mxu0 0
      %326 = vmatpush2.bf16.msra.mxu0 0
      %327 = vmatprep.subr.bf16.mxu0 0
      %328 = vmatpush2.bf16.msra.mxu0 0
      %329 = vmatprep.subr.bf16.mxu0 0
      %330 = vmatpush2.bf16.msra.mxu0 0
      %331 = vmatprep.subr.bf16.mxu0 0
      %332 = vmatpush2.bf16.msra.mxu0 0
      %333 = vmatprep.subr.bf16.mxu0 0
      %334 = vmatpush2.bf16.msra.mxu0 0
      %335 = vmatprep.subr.bf16.mxu0 0
      %336 = vmatpush2.bf16.msra.mxu0 0
      %337 = vmatprep.subr.bf16.mxu0 0
      %338 = vmatpush2.bf16.msra.mxu0 0
      %339 = vmatprep.mubr.bf16.mxu0 0
      %340 = vmatmul.mubr.bf16.gmra.mxu0 %v302
      %v341 = vpop.f32.mrf.mxu0
      %v342 = vadd.f32 0.0, %v341
      %v343 = vpop.f32.mrf.mxu0
      %v344 = vadd.f32 0.0, %v343
      %v345 = vpop.f32.mrf.mxu0
      %v346 = vpop.f32.mrf.mxu0
      %347 = vdwg.mxu0
      %vm348 = vcmp.ge.f32.partialorder %v342, 0.0
      %vm349 = vcmp.ge.f32.partialorder %v344, 0.0
      %v350 = vmul.f32 %v342, 0.1
      %v351 = vmul.f32 %v344, 0.1
      %v352 = vsel %vm348, %v342, %v350
      %v353 = vsel %vm349, %v344, %v351
      %v354 = vsel %vm260, %v352, 0.0
      %v355 = vsel %vm261, %v353, 0.0
      %v356 = vpack.c.bf16 %v354, %v354
      %v357 = vpack.c.bf16 %v355, %v355
      %v360 = vunpack.c.l.b16 %v356
      %v361 = vunpack.c.l.b16 %v357
      %v362 = vpack.c.b16 %v361, %v360
      %s364 = scalar_lea.vmem %s143, 8
      %365 = vst [vmem:[%s364] sm:$0xff] %v362
      %p366 = scmp.lt.s32.totalorder %s13, 1
      %s367 = scalar_select %p366, %s13, 1
      %s368 = smul.addr %s367, 4
      %s369 = smul.addr %s368, 4
      %s370 = scalar_lea.vmem %s2, %s369
      // Predicated region
      $region29: #{soft_hifigan_forward.11} parent=27 // pred_check
        %p371 = pneg %p78
      $region30: #{soft_hifigan_forward.11} parent=27 // pred_check_branch
        %373 = sbr.rel (%p371) target = $region32
      $region31: #{soft_hifigan_forward.11} parent=27 // pred_region
        _
      $region32: #{soft_hifigan_forward.11} parent=27 // pred_fallthru
        _
    $region28: #{soft_hifigan_forward.11} parent=5 // pred_fallthru
      _
    %p374 = scmp.le.s32.totalorder 2, %s8
    // Predicated region
    $region33: #{soft_hifigan_forward.11} parent=5 // pred_check
      %p375 = pneg %p374
    $region34: #{soft_hifigan_forward.11} parent=5 // pred_check_branch
      %377 = sbr.rel (%p375) target = $region36
    $region35: #{soft_hifigan_forward.11} parent=5 // pred_region
      %s378 = ssub.s32 %s8, 2
      // Predicated region
      $region37: #{soft_hifigan_forward.11} parent=35 // pred_check
        %p379 = pneg %p84
      $region38: #{soft_hifigan_forward.11} parent=35 // pred_check_branch
        %381 = sbr.rel (%p379) target = $region40
      $region39: #{soft_hifigan_forward.11} parent=35 // pred_region
        %p382 = scmp.lt.s32.totalorder %s14, 1
        %s383 = scalar_select %p382, %s14, 1
        %s384 = smul.addr %s383, 4
        %s385 = smul.addr %s384, 4
        %s386 = scalar_lea.vmem %s2, %s385
      $region40: #{soft_hifigan_forward.11} parent=35 // pred_fallthru
        _
    $region36: #{soft_hifigan_forward.11} parent=5 // pred_fallthru
      _
  $region6: #{soft_hifigan_forward.11} parent=0 // loop_footer
    %s12 = sadd.s32 1, %s8
  $region7: #{soft_hifigan_forward.11} parent=0 // loop_footer_branch
    %7 = sbr.rel target = $region3
  $region8: #{soft_hifigan_forward.11} parent=0 // loop_exit
    _

// kernel: soft_hifigan_forward.10
$region0: #{soft_hifigan_forward.10}
  #allocation0 [shape = 'u32[]', space=smem, size = 0x4, offset = 0x4, fixed_abs, tag = 'smem constant byte address 0x4 - core index']
  #allocation1 [shape = 'u32[144,128]{1,0:T(1,128)}', space=vmem, size = 0x12000, scoped, tag = 'internal scratch']
  %s0 = inlined_call_operand.vmem [shape: bf16[2,16,256], index: 0, kind: input, shape index: {}]
  %s1 = inlined_call_operand.vmem [shape: bf16[4,16,49], index: 1, kind: input, shape index: {}]
  %s2 = inlined_call_operand.vmem [shape: bf16[2,16,256], index: 2, kind: output, shape index: {}]
  %s3 = sld [smem:[#allocation0]]
  $region41: #{soft_hifigan_forward.10} parent=0
    _
  %s5 = ssub.s32 1, %s3
  %s6 = scalar_select 0, %s5, %s3
  loop: start=0, step=1, limit=4
  $region2: #{soft_hifigan_forward.10} parent=0 // loop_pre_header
    _
  $region3: #{soft_hifigan_forward.10} parent=0 // loop_header
    %s8 = sphi 0, %s12
    %p9 = scmp.ge.s32.totalorder %s8, 4
    %s18 = sphi 0, %s20
    %s21 = sphi 0, %s18
    %s22 = sphi 0, %s21
    %s38 = sphi 0, %s22
    %s42 = sphi 0, %s42
    %s44 = sphi 0, %s42
    %s45 = sphi 0, %s44
    %s59 = sphi 0, %s45
    %s65 = sphi 0, %s67
    %s68 = sphi 0, %s65
    %s69 = sphi 0, %s68
    %s85 = sphi 0, %s69
  $region4: #{soft_hifigan_forward.10} parent=0 // loop_header_branch
    %11 = sbr.rel (%p9) target = $region8
  $region5: #{soft_hifigan_forward.10} parent=0 // loop_body
    %s13 = ssub.s32 %s8, 1
    %s14 = ssub.s32 %s8, 2
    %s15 = sadd.s32 %s8, 1
    %s16 = ssub.s32 %s8, %s15
    %p17 = scmp.eq.s32.totalorder %s16, 0
    %s19 = sadd.s32 %s18, 1
    %s20 = scalar_select %p17, %s18, %s19
    %p23 = pneg %p17
    %p24 = scmp.eq.s32.totalorder %s8, 1
    %p25 = por %p23, %p24
    %p26 = scmp.ne.s32.totalorder %s18, %s21
    %p27 = scmp.eq.s32.totalorder %s8, 0
    %p28 = por %p26, %p27
    %p29 = scmp.ne.s32.totalorder %s18, %s21
    %p30 = scmp.eq.s32.totalorder %s13, 1
    %p31 = por %p29, %p30
    %p32 = scmp.ne.s32.totalorder %s21, %s22
    %p33 = scmp.eq.s32.totalorder %s13, 0
    %p34 = por %p32, %p33
    %p35 = scmp.ne.s32.totalorder %s21, %s22
    %p36 = scmp.eq.s32.totalorder %s14, 1
    %p37 = por %p35, %p36
    %p39 = scmp.ne.s32.totalorder %s22, %s38
    %p40 = scmp.eq.s32.totalorder %s14, 0
    %p41 = por %p39, %p40
    %s43 = sadd.s32 %s42, 1
    %p46 = scmp.eq.s32.totalorder %s8, 1
    %p47 = scmp.ne.s32.totalorder %s42, %s44
    %p48 = scmp.eq.s32.totalorder %s8, 0
    %p49 = por %p47, %p48
    %p50 = scmp.ne.s32.totalorder %s42, %s44
    %p51 = scmp.eq.s32.totalorder %s13, 1
    %p52 = por %p50, %p51
    %p53 = scmp.ne.s32.totalorder %s44, %s45
    %p54 = scmp.eq.s32.totalorder %s13, 0
    %p55 = por %p53, %p54
    %p56 = scmp.ne.s32.totalorder %s44, %s45
    %p57 = scmp.eq.s32.totalorder %s14, 1
    %p58 = por %p56, %p57
    %p60 = scmp.ne.s32.totalorder %s45, %s59
    %p61 = scmp.eq.s32.totalorder %s14, 0
    %p62 = por %p60, %p61
    %s63 = ssub.s32 %s8, %s15
    %p64 = scmp.eq.s32.totalorder %s63, 0
    %s66 = sadd.s32 %s65, 1
    %s67 = scalar_select %p64, %s65, %s66
    %p70 = pneg %p64
    %p71 = scmp.eq.s32.totalorder %s8, 1
    %p72 = por %p70, %p71
    %p73 = scmp.ne.s32.totalorder %s65, %s68
    %p74 = scmp.eq.s32.totalorder %s8, 0
    %p75 = por %p73, %p74
    %p76 = scmp.ne.s32.totalorder %s65, %s68
    %p77 = scmp.eq.s32.totalorder %s13, 1
    %p78 = por %p76, %p77
    %p79 = scmp.ne.s32.totalorder %s68, %s69
    %p80 = scmp.eq.s32.totalorder %s13, 0
    %p81 = por %p79, %p80
    %p82 = scmp.ne.s32.totalorder %s68, %s69
    %p83 = scmp.eq.s32.totalorder %s14, 1
    %p84 = por %p82, %p83
    %p86 = scmp.ne.s32.totalorder %s69, %s85
    %p87 = scmp.eq.s32.totalorder %s14, 0
    %p88 = por %p86, %p87
    %p89 = scmp.le.s32.totalorder 1, %s8
    %p90 = scmp.lt.s32.totalorder %s8, 3
    %p91 = pnand %p89, %p90
    %p92 = pneg %p91
    // Predicated region
    $region9: #{soft_hifigan_forward.10} parent=5 // pred_check
      _
    $region10: #{soft_hifigan_forward.10} parent=5 // pred_check_branch
      %94 = sbr.rel (%p91) target = $region12
    $region11: #{soft_hifigan_forward.10} parent=5 // pred_region
      %s95 = ssub.s32 %s8, 1
      // Predicated region
      $region13: #{soft_hifigan_forward.10} parent=11 // pred_check
        %p96 = pneg %p55
      $region14: #{soft_hifigan_forward.10} parent=11 // pred_check_branch
        %98 = sbr.rel (%p96) target = $region16
      $region15: #{soft_hifigan_forward.10} parent=11 // pred_region
        _
      $region16: #{soft_hifigan_forward.10} parent=11 // pred_fallthru
        _
    $region12: #{soft_hifigan_forward.10} parent=5 // pred_fallthru
      _
    %p99 = scmp.lt.s32.totalorder %s8, 2
    // Predicated region
    $region17: #{soft_hifigan_forward.10} parent=5 // pred_check
      %p100 = pneg %p99
    $region18: #{soft_hifigan_forward.10} parent=5 // pred_check_branch
      %102 = sbr.rel (%p100) target = $region20
    $region19: #{soft_hifigan_forward.10} parent=5 // pred_region
      // Predicated region
      $region21: #{soft_hifigan_forward.10} parent=19 // pred_check
        %p103 = pneg %p28
      $region22: #{soft_hifigan_forward.10} parent=19 // pred_check_branch
        %105 = sbr.rel (%p103) target = $region24
      $region23: #{soft_hifigan_forward.10} parent=19 // pred_region
        %p106 = scmp.lt.s32.totalorder %s8, 1
        %s107 = scalar_select %p106, %s8, 1
        %s108 = smul.addr %s107, 4
        %s109 = smul.addr %s108, 4
        %s110 = scalar_lea.vmem %s0, %s109
      $region24: #{soft_hifigan_forward.10} parent=19 // pred_fallthru
        _
    $region20: #{soft_hifigan_forward.10} parent=5 // pred_fallthru
      _
    %p111 = scmp.le.s32.totalorder 1, %s8
    %p112 = scmp.lt.s32.totalorder %s8, 3
    %p113 = pnand %p111, %p112
    %p114 = pneg %p113
    // Predicated region
    $region25: #{soft_hifigan_forward.10} parent=5 // pred_check
      _
    $region26: #{soft_hifigan_forward.10} parent=5 // pred_check_branch
      %116 = sbr.rel (%p113) target = $region28
    $region27: #{soft_hifigan_forward.10} parent=5 // pred_region
      %s117 = ssub.s32 %s8, 1
      %p118 = scmp.lt.s32.totalorder %s13, 1
      %s119 = scalar_select %p118, %s13, 1
      %s120 = smul.addr %s119, 4
      %s121 = smul.addr %s120, 4
      %s122 = scalar_lea.vmem %s0, %s121
      %p123 = pneg %p34
      %p124 = pneg %p31
      %p125 = pneg %p55
      %p126 = pneg %p52
      %p127 = pneg %p81
      %p128 = pneg %p78
      %p129 = scmp.lt.s32.totalorder %s13, 1
      %s130 = scalar_select %p129, %s13, 1
      %s131 = smul.addr %s130, 4
      %s132 = smul.addr %s131, 4
      %s133 = scalar_lea.vmem %s2, %s132
      %p134 = scmp.lt.s32.totalorder %s13, 1
      %s135 = scalar_select %p134, %s13, 1
      %s136 = smul.addr %s135, 4
      %s137 = smul.addr %s136, 4
      %s138 = scalar_lea.vmem %s0, %s137
      %p139 = scmp.lt.s32.totalorder %s13, 1
      %s140 = scalar_select %p139, %s13, 1
      %s141 = smul.addr %s140, 4
      %s142 = smul.addr %s141, 4
      %s143 = scalar_lea.vmem %s2, %s142
      %v146 = vld [vmem:[%s138] sm:$0xff]
      %v147 = vld [vmem:[%s138 + $0x8] sm:$0xff]
      %v148 = vunpack.c.l.bf16 %v146
      %v149 = vunpack.c.h.bf16 %v146
      %v150 = vunpack.c.l.bf16 %v147
      %v151 = vunpack.c.h.bf16 %v147
      %vm152 = vcmp.ge.f32.partialorder %v148, 0.0
      %vm153 = vcmp.ge.f32.partialorder %v149, 0.0
      %vm154 = vcmp.ge.f32.partialorder %v150, 0.0
      %vm155 = vcmp.ge.f32.partialorder %v151, 0.0
      %v156 = vmul.f32 %v148, 0.1
      %v157 = vmul.f32 %v149, 0.1
      %v158 = vmul.f32 %v150, 0.1
      %v159 = vmul.f32 %v151, 0.1
      %v160 = vsel %vm152, %v148, %v156
      %v161 = vsel %vm153, %v149, %v157
      %v162 = vsel %vm154, %v150, %v158
      %v163 = vsel %vm155, %v151, %v159
      %v164 = vpack.c.bf16 %v162, %v160
      %v165 = vpack.c.bf16 %v163, %v161
      %v166 = vld [vmem:[%s1] sm:$0xf]
      %v167 = vld [vmem:[%s1 + $0x4] sm:$0xf]
      %170 = vrot.lane.b32.xlu0 %v164, 1
      %v171 = vpop.permute.xlu0 %170
      %172 = vrot.lane.b32.xlu0 %v165, 1
      %v173 = vpop.permute.xlu0 %172
      %vm174 = vcmask 7168
      %v175 = vsel %vm174, %v171, %v173
      %vm177 = vcmask 7168
      %v180 = vsel %vm177, 0, %v171
      %v183 = vsel %vm177, %v173, 0
      %186 = vrot.lane.b32.xlu0 %v180, 127
      %v187 = vpop.permute.xlu0 %186
      %188 = vrot.lane.b32.xlu0 %v175, 127
      %v189 = vpop.permute.xlu0 %188
      %190 = vrot.lane.b32.xlu0 %v183, 127
      %v191 = vpop.permute.xlu0 %190
      %vm192 = vcmask 1039360
      %v193 = vsel %vm192, %v187, %v189
      %v194 = vsel %vm192, %v189, %v191
      %197 = vrot.lane.b32.xlu0 %v180, 126
      %v198 = vpop.permute.xlu0 %197
      %199 = vrot.lane.b32.xlu0 %v175, 126
      %v200 = vpop.permute.xlu0 %199
      %201 = vrot.lane.b32.xlu0 %v183, 126
      %v202 = vpop.permute.xlu0 %201
      %vm203 = vcmask 1031168
      %v204 = vsel %vm203, %v198, %v200
      %v205 = vsel %vm203, %v200, %v202
      %v210 = vunpack.c.l.b16 %v166
      %v211 = vunpack.c.l.b16 %v167
      %v212 = vpack.c.b16 %v211, %v210
      %vm213 = vcmask 400384
      %v215 = vsel %vm213, %v212, 0
      %vm217 = vcmask 1040384
      %v218 = vsel 0, 4294967295, 65535
      %v219 = vsel %vm217, %v218, 0
      %v221 = vand.u32 1065369472, %v219
      %223 = vmatprep.subr.bf16.mxu0 0
      %224 = vmatpush1.bf16.msra.mxu0 0
      %225 = vmatprep.subr.bf16.mxu0 0
      %226 = vmatpush1.bf16.msra.mxu0 0
      %227 = vmatprep.subr.bf16.mxu0 0
      %228 = vmatpush1.bf16.msra.mxu0 0
      %229 = vmatprep.subr.bf16.mxu0 0
      %230 = vmatpush1.bf16.msra.mxu0 0
      %231 = vmatprep.subr.bf16.mxu0 %v221
      %232 = vmatpush1.bf16.msra.mxu0 %v221
      %233 = vmatprep.subr.bf16.mxu0 %v205
      %234 = vmatpush1.bf16.msra.mxu0 %v204
      %235 = vmatprep.subr.bf16.mxu0 %v194
      %236 = vmatpush1.bf16.msra.mxu0 %v193
      %237 = vmatprep.subr.bf16.mxu0 %v175
      %238 = vmatpush1.bf16.msra.mxu0 %v180
      %239 = vmatprep.subr.bf16.mxu0 0
      %240 = vmatpush2.bf16.msra.mxu0 0
      %241 = vmatprep.subr.bf16.mxu0 0
      %242 = vmatpush2.bf16.msra.mxu0 0
      %243 = vmatprep.subr.bf16.mxu0 0
      %244 = vmatpush2.bf16.msra.mxu0 0
      %245 = vmatprep.subr.bf16.mxu0 0
      %246 = vmatpush2.bf16.msra.mxu0 0
      %247 = vmatprep.subr.bf16.mxu0 0
      %248 = vmatpush2.bf16.msra.mxu0 0
      %249 = vmatprep.subr.bf16.mxu0 0
      %250 = vmatpush2.bf16.msra.mxu0 0
      %251 = vmatprep.subr.bf16.mxu0 0
      %252 = vmatpush2.bf16.msra.mxu0 0
      %253 = vmatprep.subr.bf16.mxu0 0
      %254 = vmatpush2.bf16.msra.mxu0 0
      %255 = vmatprep.mubr.bf16.mxu0 0
      %256 = vmatmul.mubr.bf16.gmra.mxu0 %v215
      %v257 = vpop.f32.mrf.mxu0
      %v258 = vadd.f32 0.0, %v257
      %v259 = vpop.f32.mrf.mxu0
      %v260 = vadd.f32 0.0, %v259
      %v261 = vpop.f32.mrf.mxu0
      %v262 = vadd.f32 0.0, %v261
      %v263 = vpop.f32.mrf.mxu0
      %v264 = vadd.f32 0.0, %v263
      %265 = vdwg.mxu0
      %v266 = vlaneseq
      %v267 = vand.u32 %v266, 127
      %v268 = vadd.s32 %v267, 128
      %vm269 = vcmp.lt.s32.totalorder %v267, 16
      %vm270 = vcmp.lt.s32.totalorder %v268, 16
      %v271 = vsel %vm269, %v258, 0.0
      %v272 = vsel %vm270, %v260, 0.0
      %v273 = vsel %vm269, %v262, 0.0
      %v274 = vsel %vm270, %v264, 0.0
      %vm275 = vcmp.ge.f32.partialorder %v271, 0.0
      %vm276 = vcmp.ge.f32.partialorder %v272, 0.0
      %vm277 = vcmp.ge.f32.partialorder %v273, 0.0
      %vm278 = vcmp.ge.f32.partialorder %v274, 0.0
      %v279 = vmul.f32 %v271, 0.1
      %v280 = vmul.f32 %v272, 0.1
      %v281 = vmul.f32 %v273, 0.1
      %v282 = vmul.f32 %v274, 0.1
      %v283 = vsel %vm275, %v271, %v279
      %v284 = vsel %vm276, %v272, %v280
      %v285 = vsel %vm277, %v273, %v281
      %v286 = vsel %vm278, %v274, %v282
      %v287 = vpack.c.bf16 %v285, %v283
      %v288 = vpack.c.bf16 %v286, %v284
      %s289 = scalar_lea.vmem %s1, 8
      %v290 = vld [vmem:[%s289] sm:$0xf]
      %v291 = vld [vmem:[%s289 + $0x4] sm:$0xf]
      %294 = vrot.lane.b32.xlu0 %v287, 1
      %v295 = vpop.permute.xlu0 %294
      %296 = vrot.lane.b32.xlu0 %v288, 1
      %v297 = vpop.permute.xlu0 %296
      %v298 = vsel %vm174, %v295, %v297
      %v301 = vsel %vm177, 0, %v295
      %v304 = vsel %vm177, %v297, 0
      %307 = vrot.lane.b32.xlu0 %v301, 127
      %v308 = vpop.permute.xlu0 %307
      %309 = vrot.lane.b32.xlu0 %v298, 127
      %v310 = vpop.permute.xlu0 %309
      %311 = vrot.lane.b32.xlu0 %v304, 127
      %v312 = vpop.permute.xlu0 %311
      %v313 = vsel %vm192, %v308, %v310
      %v314 = vsel %vm192, %v310, %v312
      %317 = vrot.lane.b32.xlu0 %v301, 126
      %v318 = vpop.permute.xlu0 %317
      %319 = vrot.lane.b32.xlu0 %v298, 126
      %v320 = vpop.permute.xlu0 %319
      %321 = vrot.lane.b32.xlu0 %v304, 126
      %v322 = vpop.permute.xlu0 %321
      %v323 = vsel %vm203, %v318, %v320
      %v324 = vsel %vm203, %v320, %v322
      %v329 = vunpack.c.l.b16 %v290
      %v330 = vunpack.c.l.b16 %v291
      %v331 = vpack.c.b16 %v330, %v329
      %v333 = vsel %vm213, %v331, 0
      %335 = vmatprep.subr.bf16.mxu0 0
      %336 = vmatpush1.bf16.msra.mxu0 0
      %337 = vmatprep.subr.bf16.mxu0 0
      %338 = vmatpush1.bf16.msra.mxu0 0
      %339 = vmatprep.subr.bf16.mxu0 0
      %340 = vmatpush1.bf16.msra.mxu0 0
      %341 = vmatprep.subr.bf16.mxu0 0
      %342 = vmatpush1.bf16.msra.mxu0 0
      %343 = vmatprep.subr.bf16.mxu0 %v221
      %344 = vmatpush1.bf16.msra.mxu0 %v221
      %345 = vmatprep.subr.bf16.mxu0 %v324
      %346 = vmatpush1.bf16.msra.mxu0 %v323
      %347 = vmatprep.subr.bf16.mxu0 %v314
      %348 = vmatpush1.bf16.msra.mxu0 %v313
      %349 = vmatprep.subr.bf16.mxu0 %v298
      %350 = vmatpush1.bf16.msra.mxu0 %v301
      %351 = vmatprep.subr.bf16.mxu0 0
      %352 = vmatpush2.bf16.msra.mxu0 0
      %353 = vmatprep.subr.bf16.mxu0 0
      %354 = vmatpush2.bf16.msra.mxu0 0
      %355 = vmatprep.subr.bf16.mxu0 0
      %356 = vmatpush2.bf16.msra.mxu0 0
      %357 = vmatprep.subr.bf16.mxu0 0
      %358 = vmatpush2.bf16.msra.mxu0 0
      %359 = vmatprep.subr.bf16.mxu0 0
      %360 = vmatpush2.bf16.msra.mxu0 0
      %361 = vmatprep.subr.bf16.mxu0 0
      %362 = vmatpush2.bf16.msra.mxu0 0
      %363 = vmatprep.subr.bf16.mxu0 0
      %364 = vmatpush2.bf16.msra.mxu0 0
      %365 = vmatprep.subr.bf16.mxu0 0
      %366 = vmatpush2.bf16.msra.mxu0 0
      %367 = vmatprep.mubr.bf16.mxu0 0
      %368 = vmatmul.mubr.bf16.gmra.mxu0 %v333
      %v369 = vpop.f32.mrf.mxu0
      %v370 = vadd.f32 0.0, %v369
      %v371 = vpop.f32.mrf.mxu0
      %v372 = vadd.f32 0.0, %v371
      %v373 = vpop.f32.mrf.mxu0
      %v374 = vadd.f32 0.0, %v373
      %v375 = vpop.f32.mrf.mxu0
      %v376 = vadd.f32 0.0, %v375
      %377 = vdwg.mxu0
      %v378 = vsel %vm269, %v370, 0.0
      %v379 = vsel %vm270, %v372, 0.0
      %v380 = vsel %vm269, %v374, 0.0
      %v381 = vsel %vm270, %v376, 0.0
      %v382 = vadd.f32 %v148, %v378
      %v383 = vadd.f32 %v149, %v379
      %v384 = vadd.f32 %v150, %v380
      %v385 = vadd.f32 %v151, %v381
      %vm386 = vcmp.ge.f32.partialorder %v382, 0.0
      %vm387 = vcmp.ge.f32.partialorder %v383, 0.0
      %vm388 = vcmp.ge.f32.partialorder %v384, 0.0
      %vm389 = vcmp.ge.f32.partialorder %v385, 0.0
      %v390 = vmul.f32 %v382, 0.1
      %v391 = vmul.f32 %v383, 0.1
      %v392 = vmul.f32 %v384, 0.1
      %v393 = vmul.f32 %v385, 0.1
      %v394 = vsel %vm386, %v382, %v390
      %v395 = vsel %vm387, %v383, %v391
      %v396 = vsel %vm388, %v384, %v392
      %v397 = vsel %vm389, %v385, %v393
      %v398 = vpack.c.bf16 %v396, %v394
      %v399 = vpack.c.bf16 %v397, %v395
      %s400 = scalar_lea.vmem %s1, 16
      %v401 = vld [vmem:[%s400] sm:$0xf]
      %v402 = vld [vmem:[%s400 + $0x4] sm:$0xf]
      %405 = vrot.lane.b32.xlu0 %v398, 3
      %v406 = vpop.permute.xlu0 %405
      %407 = vrot.lane.b32.xlu0 %v399, 3
      %v408 = vpop.permute.xlu0 %407
      %vm409 = vcmask 23552
      %v410 = vsel %vm409, %v406, %v408
      %vm412 = vcmask 23552
      %v414 = vsel %vm412, 0, %v406
      %v417 = vsel %vm412, %v408, 0
      %420 = vrot.lane.b32.xlu0 %v414, 125
      %v421 = vpop.permute.xlu0 %420
      %422 = vrot.lane.b32.xlu0 %v410, 125
      %v423 = vpop.permute.xlu0 %422
      %424 = vrot.lane.b32.xlu0 %v417, 125
      %v425 = vpop.permute.xlu0 %424
      %vm426 = vcmask 1022976
      %v427 = vsel %vm426, %v421, %v423
      %v428 = vsel %vm426, %v423, %v425
      %431 = vrot.lane.b32.xlu0 %v414, 122
      %v432 = vpop.permute.xlu0 %431
      %433 = vrot.lane.b32.xlu0 %v410, 122
      %v434 = vpop.permute.xlu0 %433
      %435 = vrot.lane.b32.xlu0 %v417, 122
      %v436 = vpop.permute.xlu0 %435
      %vm437 = vcmask 998400
      %v438 = vsel %vm437, %v432, %v434
      %v439 = vsel %vm437, %v434, %v436
      %v444 = vunpack.c.l.b16 %v401
      %v445 = vunpack.c.l.b16 %v402
      %v446 = vpack.c.b16 %v445, %v444
      %v448 = vsel %vm213, %v446, 0
      %450 = vmatprep.subr.bf16.mxu0 0
      %451 = vmatpush1.bf16.msra.mxu0 0
      %452 = vmatprep.subr.bf16.mxu0 0
      %453 = vmatpush1.bf16.msra.mxu0 0
      %454 = vmatprep.subr.bf16.mxu0 0
      %455 = vmatpush1.bf16.msra.mxu0 0
      %456 = vmatprep.subr.bf16.mxu0 0
      %457 = vmatpush1.bf16.msra.mxu0 0
      %458 = vmatprep.subr.bf16.mxu0 %v221
      %459 = vmatpush1.bf16.msra.mxu0 %v221
      %460 = vmatprep.subr.bf16.mxu0 %v439
      %461 = vmatpush1.bf16.msra.mxu0 %v438
      %462 = vmatprep.subr.bf16.mxu0 %v428
      %463 = vmatpush1.bf16.msra.mxu0 %v427
      %464 = vmatprep.subr.bf16.mxu0 %v410
      %465 = vmatpush1.bf16.msra.mxu0 %v414
      %466 = vmatprep.subr.bf16.mxu0 0
      %467 = vmatpush2.bf16.msra.mxu0 0
      %468 = vmatprep.subr.bf16.mxu0 0
      %469 = vmatpush2.bf16.msra.mxu0 0
      %470 = vmatprep.subr.bf16.mxu0 0
      %471 = vmatpush2.bf16.msra.mxu0 0
      %472 = vmatprep.subr.bf16.mxu0 0
      %473 = vmatpush2.bf16.msra.mxu0 0
      %474 = vmatprep.subr.bf16.mxu0 0
      %475 = vmatpush2.bf16.msra.mxu0 0
      %476 = vmatprep.subr.bf16.mxu0 0
      %477 = vmatpush2.bf16.msra.mxu0 0
      %478 = vmatprep.subr.bf16.mxu0 0
      %479 = vmatpush2.bf16.msra.mxu0 0
      %480 = vmatprep.subr.bf16.mxu0 0
      %481 = vmatpush2.bf16.msra.mxu0 0
      %482 = vmatprep.mubr.bf16.mxu0 0
      %483 = vmatmul.mubr.bf16.gmra.mxu0 %v448
      %v484 = vpop.f32.mrf.mxu0
      %v485 = vadd.f32 0.0, %v484
      %v486 = vpop.f32.mrf.mxu0
      %v487 = vadd.f32 0.0, %v486
      %v488 = vpop.f32.mrf.mxu0
      %v489 = vadd.f32 0.0, %v488
      %v490 = vpop.f32.mrf.mxu0
      %v491 = vadd.f32 0.0, %v490
      %492 = vdwg.mxu0
      %v493 = vsel %vm269, %v485, 0.0
      %v494 = vsel %vm270, %v487, 0.0
      %v495 = vsel %vm269, %v489, 0.0
      %v496 = vsel %vm270, %v491, 0.0
      %vm497 = vcmp.ge.f32.partialorder %v493, 0.0
      %vm498 = vcmp.ge.f32.partialorder %v494, 0.0
      %vm499 = vcmp.ge.f32.partialorder %v495, 0.0
      %vm500 = vcmp.ge.f32.partialorder %v496, 0.0
      %v501 = vmul.f32 %v493, 0.1
      %v502 = vmul.f32 %v494, 0.1
      %v503 = vmul.f32 %v495, 0.1
      %v504 = vmul.f32 %v496, 0.1
      %v505 = vsel %vm497, %v493, %v501
      %v506 = vsel %vm498, %v494, %v502
      %v507 = vsel %vm499, %v495, %v503
      %v508 = vsel %vm500, %v496, %v504
      %v509 = vpack.c.bf16 %v507, %v505
      %v510 = vpack.c.bf16 %v508, %v506
      %s511 = scalar_lea.vmem %s1, 24
      %v512 = vld [vmem:[%s511] sm:$0xf]
      %v513 = vld [vmem:[%s511 + $0x4] sm:$0xf]
      %516 = vrot.lane.b32.xlu0 %v509, 1
      %v517 = vpop.permute.xlu0 %516
      %518 = vrot.lane.b32.xlu0 %v510, 1
      %v519 = vpop.permute.xlu0 %518
      %v520 = vsel %vm174, %v517, %v519
      %v523 = vsel %vm177, 0, %v517
      %v526 = vsel %vm177, %v519, 0
      %529 = vrot.lane.b32.xlu0 %v523, 127
      %v530 = vpop.permute.xlu0 %529
      %531 = vrot.lane.b32.xlu0 %v520, 127
      %v532 = vpop.permute.xlu0 %531
      %533 = vrot.lane.b32.xlu0 %v526, 127
      %v534 = vpop.permute.xlu0 %533
      %v535 = vsel %vm192, %v530, %v532
      %v536 = vsel %vm192, %v532, %v534
      %539 = vrot.lane.b32.xlu0 %v523, 126
      %v540 = vpop.permute.xlu0 %539
      %541 = vrot.lane.b32.xlu0 %v520, 126
      %v542 = vpop.permute.xlu0 %541
      %543 = vrot.lane.b32.xlu0 %v526, 126
      %v544 = vpop.permute.xlu0 %543
      %v545 = vsel %vm203, %v540, %v542
      %v546 = vsel %vm203, %v542, %v544
      %v551 = vunpack.c.l.b16 %v512
      %v552 = vunpack.c.l.b16 %v513
      %v553 = vpack.c.b16 %v552, %v551
      %v555 = vsel %vm213, %v553, 0
      %557 = vmatprep.subr.bf16.mxu0 0
      %558 = vmatpush1.bf16.msra.mxu0 0
      %559 = vmatprep.subr.bf16.mxu0 0
      %560 = vmatpush1.bf16.msra.mxu0 0
      %561 = vmatprep.subr.bf16.mxu0 0
      %562 = vmatpush1.bf16.msra.mxu0 0
      %563 = vmatprep.subr.bf16.mxu0 0
      %564 = vmatpush1.bf16.msra.mxu0 0
      %565 = vmatprep.subr.bf16.mxu0 %v221
      %566 = vmatpush1.bf16.msra.mxu0 %v221
      %567 = vmatprep.subr.bf16.mxu0 %v546
      %568 = vmatpush1.bf16.msra.mxu0 %v545
      %569 = vmatprep.subr.bf16.mxu0 %v536
      %570 = vmatpush1.bf16.msra.mxu0 %v535
      %571 = vmatprep.subr.bf16.mxu0 %v520
      %572 = vmatpush1.bf16.msra.mxu0 %v523
      %573 = vmatprep.subr.bf16.mxu0 0
      %574 = vmatpush2.bf16.msra.mxu0 0
      %575 = vmatprep.subr.bf16.mxu0 0
      %576 = vmatpush2.bf16.msra.mxu0 0
      %577 = vmatprep.subr.bf16.mxu0 0
      %578 = vmatpush2.bf16.msra.mxu0 0
      %579 = vmatprep.subr.bf16.mxu0 0
      %580 = vmatpush2.bf16.msra.mxu0 0
      %581 = vmatprep.subr.bf16.mxu0 0
      %582 = vmatpush2.bf16.msra.mxu0 0
      %583 = vmatprep.subr.bf16.mxu0 0
      %584 = vmatpush2.bf16.msra.mxu0 0
      %585 = vmatprep.subr.bf16.mxu0 0
      %586 = vmatpush2.bf16.msra.mxu0 0
      %587 = vmatprep.subr.bf16.mxu0 0
      %588 = vmatpush2.bf16.msra.mxu0 0
      %589 = vmatprep.mubr.bf16.mxu0 0
      %590 = vmatmul.mubr.bf16.gmra.mxu0 %v555
      %v591 = vpop.f32.mrf.mxu0
      %v592 = vadd.f32 0.0, %v591
      %v593 = vpop.f32.mrf.mxu0
      %v594 = vadd.f32 0.0, %v593
      %v595 = vpop.f32.mrf.mxu0
      %v596 = vadd.f32 0.0, %v595
      %v597 = vpop.f32.mrf.mxu0
      %v598 = vadd.f32 0.0, %v597
      %599 = vdwg.mxu0
      %v600 = vsel %vm269, %v592, 0.0
      %v601 = vsel %vm270, %v594, 0.0
      %v602 = vsel %vm269, %v596, 0.0
      %v603 = vsel %vm270, %v598, 0.0
      %v604 = vadd.f32 %v382, %v600
      %v605 = vadd.f32 %v383, %v601
      %v606 = vadd.f32 %v384, %v602
      %v607 = vadd.f32 %v385, %v603
      %v608 = vpack.c.bf16 %v606, %v604
      %v609 = vpack.c.bf16 %v607, %v605
      %v612 = vunpack.c.l.b16 %v608
      %v613 = vunpack.c.l.b16 %v609
      %v614 = vunpack.c.h.b16 %v608
      %v615 = vunpack.c.h.b16 %v609
      %v616 = vpack.c.b16 %v613, %v612
      %v617 = vpack.c.b16 %v615, %v614
      %620 = vst [vmem:[%s143] sm:$0xff] %v616
      %621 = vst [vmem:[%s143 + $0x8] sm:$0xff] %v617
      %p622 = scmp.lt.s32.totalorder %s13, 1
      %s623 = scalar_select %p622, %s13, 1
      %s624 = smul.addr %s623, 4
      %s625 = smul.addr %s624, 4
      %s626 = scalar_lea.vmem %s2, %s625
      // Predicated region
      $region29: #{soft_hifigan_forward.10} parent=27 // pred_check
        %p627 = pneg %p78
      $region30: #{soft_hifigan_forward.10} parent=27 // pred_check_branch
        %629 = sbr.rel (%p627) target = $region32
      $region31: #{soft_hifigan_forward.10} parent=27 // pred_region
        _
      $region32: #{soft_hifigan_forward.10} parent=27 // pred_fallthru
        _
    $region28: #{soft_hifigan_forward.10} parent=5 // pred_fallthru
      _
    %p630 = scmp.le.s32.totalorder 2, %s8
    // Predicated region
    $region33: #{soft_hifigan_forward.10} parent=5 // pred_check
      %p631 = pneg %p630
    $region34: #{soft_hifigan_forward.10} parent=5 // pred_check_branch
      %633 = sbr.rel (%p631) target = $region36
    $region35: #{soft_hifigan_forward.10} parent=5 // pred_region
      %s634 = ssub.s32 %s8, 2
      // Predicated region
      $region37: #{soft_hifigan_forward.10} parent=35 // pred_check
        %p635 = pneg %p84
      $region38: #{soft_hifigan_forward.10} parent=35 // pred_check_branch
        %637 = sbr.rel (%p635) target = $region40
      $region39: #{soft_hifigan_forward.10} parent=35 // pred_region
        %p638 = scmp.lt.s32.totalorder %s14, 1
        %s639 = scalar_select %p638, %s14, 1
        %s640 = smul.addr %s639, 4
        %s641 = smul.addr %s640, 4
        %s642 = scalar_lea.vmem %s2, %s641
      $region40: #{soft_hifigan_forward.10} parent=35 // pred_fallthru
        _
    $region36: #{soft_hifigan_forward.10} parent=5 // pred_fallthru
      _
  $region6: #{soft_hifigan_forward.10} parent=0 // loop_footer
    %s12 = sadd.s32 1, %s8
  $region7: #{soft_hifigan_forward.10} parent=0 // loop_footer_branch
    %7 = sbr.rel target = $region3
  $region8: #{soft_hifigan_forward.10} parent=0 // loop_exit
    _

// kernel: soft_hifigan_forward.12
$region0: #{soft_hifigan_forward.12}
  #allocation0 [shape = 'u32[]', space=smem, size = 0x4, offset = 0x4, fixed_abs, tag = 'smem constant byte address 0x4 - core index']
  #allocation1 [shape = 'u32[144,128]{1,0:T(1,128)}', space=vmem, size = 0x12000, scoped, tag = 'internal scratch']
  %s0 = inlined_call_operand.vmem [shape: bf16[2,8,512], index: 0, kind: input, shape index: {}]
  %s1 = inlined_call_operand.vmem [shape: bf16[4,8,25], index: 1, kind: input, shape index: {}]
  %s2 = inlined_call_operand.vmem [shape: bf16[2,8,512], index: 2, kind: output, shape index: {}]
  %s3 = sld [smem:[#allocation0]]
  $region41: #{soft_hifigan_forward.12} parent=0
    _
  %s5 = ssub.s32 1, %s3
  %s6 = scalar_select 0, %s5, %s3
  loop: start=0, step=1, limit=4
  $region2: #{soft_hifigan_forward.12} parent=0 // loop_pre_header
    _
  $region3: #{soft_hifigan_forward.12} parent=0 // loop_header
    %s8 = sphi 0, %s12
    %p9 = scmp.ge.s32.totalorder %s8, 4
    %s18 = sphi 0, %s20
    %s21 = sphi 0, %s18
    %s22 = sphi 0, %s21
    %s38 = sphi 0, %s22
    %s42 = sphi 0, %s42
    %s44 = sphi 0, %s42
    %s45 = sphi 0, %s44
    %s59 = sphi 0, %s45
    %s65 = sphi 0, %s67
    %s68 = sphi 0, %s65
    %s69 = sphi 0, %s68
    %s85 = sphi 0, %s69
  $region4: #{soft_hifigan_forward.12} parent=0 // loop_header_branch
    %11 = sbr.rel (%p9) target = $region8
  $region5: #{soft_hifigan_forward.12} parent=0 // loop_body
    %s13 = ssub.s32 %s8, 1
    %s14 = ssub.s32 %s8, 2
    %s15 = sadd.s32 %s8, 1
    %s16 = ssub.s32 %s8, %s15
    %p17 = scmp.eq.s32.totalorder %s16, 0
    %s19 = sadd.s32 %s18, 1
    %s20 = scalar_select %p17, %s18, %s19
    %p23 = pneg %p17
    %p24 = scmp.eq.s32.totalorder %s8, 1
    %p25 = por %p23, %p24
    %p26 = scmp.ne.s32.totalorder %s18, %s21
    %p27 = scmp.eq.s32.totalorder %s8, 0
    %p28 = por %p26, %p27
    %p29 = scmp.ne.s32.totalorder %s18, %s21
    %p30 = scmp.eq.s32.totalorder %s13, 1
    %p31 = por %p29, %p30
    %p32 = scmp.ne.s32.totalorder %s21, %s22
    %p33 = scmp.eq.s32.totalorder %s13, 0
    %p34 = por %p32, %p33
    %p35 = scmp.ne.s32.totalorder %s21, %s22
    %p36 = scmp.eq.s32.totalorder %s14, 1
    %p37 = por %p35, %p36
    %p39 = scmp.ne.s32.totalorder %s22, %s38
    %p40 = scmp.eq.s32.totalorder %s14, 0
    %p41 = por %p39, %p40
    %s43 = sadd.s32 %s42, 1
    %p46 = scmp.eq.s32.totalorder %s8, 1
    %p47 = scmp.ne.s32.totalorder %s42, %s44
    %p48 = scmp.eq.s32.totalorder %s8, 0
    %p49 = por %p47, %p48
    %p50 = scmp.ne.s32.totalorder %s42, %s44
    %p51 = scmp.eq.s32.totalorder %s13, 1
    %p52 = por %p50, %p51
    %p53 = scmp.ne.s32.totalorder %s44, %s45
    %p54 = scmp.eq.s32.totalorder %s13, 0
    %p55 = por %p53, %p54
    %p56 = scmp.ne.s32.totalorder %s44, %s45
    %p57 = scmp.eq.s32.totalorder %s14, 1
    %p58 = por %p56, %p57
    %p60 = scmp.ne.s32.totalorder %s45, %s59
    %p61 = scmp.eq.s32.totalorder %s14, 0
    %p62 = por %p60, %p61
    %s63 = ssub.s32 %s8, %s15
    %p64 = scmp.eq.s32.totalorder %s63, 0
    %s66 = sadd.s32 %s65, 1
    %s67 = scalar_select %p64, %s65, %s66
    %p70 = pneg %p64
    %p71 = scmp.eq.s32.totalorder %s8, 1
    %p72 = por %p70, %p71
    %p73 = scmp.ne.s32.totalorder %s65, %s68
    %p74 = scmp.eq.s32.totalorder %s8, 0
    %p75 = por %p73, %p74
    %p76 = scmp.ne.s32.totalorder %s65, %s68
    %p77 = scmp.eq.s32.totalorder %s13, 1
    %p78 = por %p76, %p77
    %p79 = scmp.ne.s32.totalorder %s68, %s69
    %p80 = scmp.eq.s32.totalorder %s13, 0
    %p81 = por %p79, %p80
    %p82 = scmp.ne.s32.totalorder %s68, %s69
    %p83 = scmp.eq.s32.totalorder %s14, 1
    %p84 = por %p82, %p83
    %p86 = scmp.ne.s32.totalorder %s69, %s85
    %p87 = scmp.eq.s32.totalorder %s14, 0
    %p88 = por %p86, %p87
    %p89 = scmp.le.s32.totalorder 1, %s8
    %p90 = scmp.lt.s32.totalorder %s8, 3
    %p91 = pnand %p89, %p90
    %p92 = pneg %p91
    // Predicated region
    $region9: #{soft_hifigan_forward.12} parent=5 // pred_check
      _
    $region10: #{soft_hifigan_forward.12} parent=5 // pred_check_branch
      %94 = sbr.rel (%p91) target = $region12
    $region11: #{soft_hifigan_forward.12} parent=5 // pred_region
      %s95 = ssub.s32 %s8, 1
      // Predicated region
      $region13: #{soft_hifigan_forward.12} parent=11 // pred_check
        %p96 = pneg %p55
      $region14: #{soft_hifigan_forward.12} parent=11 // pred_check_branch
        %98 = sbr.rel (%p96) target = $region16
      $region15: #{soft_hifigan_forward.12} parent=11 // pred_region
        _
      $region16: #{soft_hifigan_forward.12} parent=11 // pred_fallthru
        _
    $region12: #{soft_hifigan_forward.12} parent=5 // pred_fallthru
      _
    %p99 = scmp.lt.s32.totalorder %s8, 2
    // Predicated region
    $region17: #{soft_hifigan_forward.12} parent=5 // pred_check
      %p100 = pneg %p99
    $region18: #{soft_hifigan_forward.12} parent=5 // pred_check_branch
      %102 = sbr.rel (%p100) target = $region20
    $region19: #{soft_hifigan_forward.12} parent=5 // pred_region
      // Predicated region
      $region21: #{soft_hifigan_forward.12} parent=19 // pred_check
        %p103 = pneg %p28
      $region22: #{soft_hifigan_forward.12} parent=19 // pred_check_branch
        %105 = sbr.rel (%p103) target = $region24
      $region23: #{soft_hifigan_forward.12} parent=19 // pred_region
        %p106 = scmp.lt.s32.totalorder %s8, 1
        %s107 = scalar_select %p106, %s8, 1
        %s108 = smul.addr %s107, 4
        %s109 = smul.addr %s108, 4
        %s110 = scalar_lea.vmem %s0, %s109
      $region24: #{soft_hifigan_forward.12} parent=19 // pred_fallthru
        _
    $region20: #{soft_hifigan_forward.12} parent=5 // pred_fallthru
      _
    %p111 = scmp.le.s32.totalorder 1, %s8
    %p112 = scmp.lt.s32.totalorder %s8, 3
    %p113 = pnand %p111, %p112
    %p114 = pneg %p113
    // Predicated region
    $region25: #{soft_hifigan_forward.12} parent=5 // pred_check
      _
    $region26: #{soft_hifigan_forward.12} parent=5 // pred_check_branch
      %116 = sbr.rel (%p113) target = $region28
    $region27: #{soft_hifigan_forward.12} parent=5 // pred_region
      %s117 = ssub.s32 %s8, 1
      %p118 = scmp.lt.s32.totalorder %s13, 1
      %s119 = scalar_select %p118, %s13, 1
      %s120 = smul.addr %s119, 4
      %s121 = smul.addr %s120, 4
      %s122 = scalar_lea.vmem %s0, %s121
      %p123 = pneg %p34
      %p124 = pneg %p31
      %p125 = pneg %p55
      %p126 = pneg %p52
      %p127 = pneg %p81
      %p128 = pneg %p78
      %p129 = scmp.lt.s32.totalorder %s13, 1
      %s130 = scalar_select %p129, %s13, 1
      %s131 = smul.addr %s130, 4
      %s132 = smul.addr %s131, 4
      %s133 = scalar_lea.vmem %s2, %s132
      %p134 = scmp.lt.s32.totalorder %s13, 1
      %s135 = scalar_select %p134, %s13, 1
      %s136 = smul.addr %s135, 4
      %s137 = smul.addr %s136, 4
      %s138 = scalar_lea.vmem %s0, %s137
      %p139 = scmp.lt.s32.totalorder %s13, 1
      %s140 = scalar_select %p139, %s13, 1
      %s141 = smul.addr %s140, 4
      %s142 = smul.addr %s141, 4
      %s143 = scalar_lea.vmem %s2, %s142
      %v146 = vld [vmem:[%s138] sm:$0xff]
      %v147 = vld [vmem:[%s138 + $0x8] sm:$0xff]
      %v148 = vunpack.c.l.bf16 %v146
      %v149 = vunpack.c.h.bf16 %v146
      %v150 = vunpack.c.l.bf16 %v147
      %v151 = vunpack.c.h.bf16 %v147
      %vm152 = vcmp.ge.f32.partialorder %v148, 0.0
      %vm153 = vcmp.ge.f32.partialorder %v149, 0.0
      %vm154 = vcmp.ge.f32.partialorder %v150, 0.0
      %vm155 = vcmp.ge.f32.partialorder %v151, 0.0
      %v156 = vmul.f32 %v148, 0.1
      %v157 = vmul.f32 %v149, 0.1
      %v158 = vmul.f32 %v150, 0.1
      %v159 = vmul.f32 %v151, 0.1
      %v160 = vsel %vm152, %v148, %v156
      %v161 = vsel %vm153, %v149, %v157
      %v162 = vsel %vm154, %v150, %v158
      %v163 = vsel %vm155, %v151, %v159
      %v164 = vpack.c.bf16 %v160, %v160
      %v165 = vpack.c.bf16 %v161, %v161
      %v166 = vpack.c.bf16 %v162, %v162
      %v167 = vpack.c.bf16 %v163, %v163
      %v168 = vld [vmem:[%s1] sm:$0xf]
      %173 = vrot.lane.b32.xlu0 %v164, 1
      %v174 = vpop.permute.xlu0 %173
      %175 = vrot.lane.b32.xlu0 %v165, 1
      %v176 = vpop.permute.xlu0 %175
      %177 = vrot.lane.b32.xlu0 %v166, 1
      %v178 = vpop.permute.xlu0 %177
      %179 = vrot.lane.b32.xlu0 %v167, 1
      %v180 = vpop.permute.xlu0 %179
      %vm181 = vcmask 7168
      %v182 = vsel %vm181, %v174, %v176
      %v183 = vsel %vm181, %v176, %v178
      %v184 = vsel %vm181, %v178, %v180
      %vm185 = vcmask 7168
      %v188 = vsel %vm185, 0, %v174
      %v190 = vsel %vm185, %v180, 0
      %v193 = vrot.slane %v188, 4
      %v194 = vrot.slane %v182, 4
      %v195 = vrot.slane %v183, 4
      %v196 = vrot.slane %v184, 4
      %v197 = vrot.slane %v190, 4
      %198 = vrot.lane.b32.xlu0 %v193, 127
      %v199 = vpop.permute.xlu0 %198
      %200 = vrot.lane.b32.xlu0 %v194, 127
      %v201 = vpop.permute.xlu0 %200
      %202 = vrot.lane.b32.xlu0 %v195, 127
      %v203 = vpop.permute.xlu0 %202
      %204 = vrot.lane.b32.xlu0 %v196, 127
      %v205 = vpop.permute.xlu0 %204
      %206 = vrot.lane.b32.xlu0 %v197, 127
      %v207 = vpop.permute.xlu0 %206
      %vm208 = vcmask 1039360
      %v209 = vsel %vm208, %v199, %v201
      %v210 = vsel %vm208, %v201, %v203
      %v211 = vsel %vm208, %v203, %v205
      %v212 = vsel %vm208, %v205, %v207
      %213 = vrot.lane.b32.xlu0 %v188, 126
      %v214 = vpop.permute.xlu0 %213
      %215 = vrot.lane.b32.xlu0 %v182, 126
      %v216 = vpop.permute.xlu0 %215
      %217 = vrot.lane.b32.xlu0 %v183, 126
      %v218 = vpop.permute.xlu0 %217
      %219 = vrot.lane.b32.xlu0 %v184, 126
      %v220 = vpop.permute.xlu0 %219
      %221 = vrot.lane.b32.xlu0 %v190, 126
      %v222 = vpop.permute.xlu0 %221
      %vm223 = vcmask 1031168
      %v224 = vsel %vm223, %v214, %v216
      %v225 = vsel %vm223, %v216, %v218
      %v226 = vsel %vm223, %v218, %v220
      %v227 = vsel %vm223, %v220, %v222
      %vm228 = vcmask 1043456
      %v230 = vsel %vm228, %v188, %v209
      %v234 = vsel %vm228, %v182, %v210
      %v238 = vsel %vm228, %v183, %v211
      %v242 = vsel %vm228, %v184, %v212
      %v246 = vsel %vm228, %v224, 1065369472
      %v248 = vsel %vm228, %v225, 1065369472
      %v250 = vsel %vm228, %v226, 1065369472
      %v252 = vsel %vm228, %v227, 1065369472
      %vm253 = vcmask 203776
      %v255 = vsel %vm253, %v168, 0
      %vm257 = vcmask 1044480
      %v258 = vsel %vm228, 4294967295, 65535
      %v259 = vsel %vm257, %v258, 0
      %v260 = vand.u32 %v246, %v259
      %v262 = vand.u32 %v248, %v259
      %v264 = vand.u32 %v250, %v259
      %v266 = vand.u32 %v252, %v259
      %268 = vmatprep.subr.bf16.mxu0 0
      %269 = vmatpush1.bf16.msra.mxu0 0
      %270 = vmatprep.subr.bf16.mxu0 0
      %271 = vmatpush1.bf16.msra.mxu0 0
      %272 = vmatprep.subr.bf16.mxu0 0
      %273 = vmatpush1.bf16.msra.mxu0 0
      %274 = vmatprep.subr.bf16.mxu0 0
      %275 = vmatpush1.bf16.msra.mxu0 0
      %276 = vmatprep.subr.bf16.mxu0 0
      %277 = vmatpush1.bf16.msra.mxu0 0
      %278 = vmatprep.subr.bf16.mxu0 0
      %279 = vmatpush1.bf16.msra.mxu0 0
      %280 = vmatprep.subr.bf16.mxu0 %v262
      %281 = vmatpush1.bf16.msra.mxu0 %v260
      %282 = vmatprep.subr.bf16.mxu0 %v234
      %283 = vmatpush1.bf16.msra.mxu0 %v230
      %284 = vmatprep.subr.bf16.mxu0 0
      %285 = vmatpush2.bf16.msra.mxu0 0
      %286 = vmatprep.subr.bf16.mxu0 0
      %287 = vmatpush2.bf16.msra.mxu0 0
      %288 = vmatprep.subr.bf16.mxu0 0
      %289 = vmatpush2.bf16.msra.mxu0 0
      %290 = vmatprep.subr.bf16.mxu0 0
      %291 = vmatpush2.bf16.msra.mxu0 0
      %292 = vmatprep.subr.bf16.mxu0 0
      %293 = vmatpush2.bf16.msra.mxu0 0
      %294 = vmatprep.subr.bf16.mxu0 0
      %295 = vmatpush2.bf16.msra.mxu0 0
      %296 = vmatprep.subr.bf16.mxu0 0
      %297 = vmatpush2.bf16.msra.mxu0 0
      %298 = vmatprep.subr.bf16.mxu0 0
      %299 = vmatpush2.bf16.msra.mxu0 0
      %300 = vmatprep.mubr.bf16.mxu0 0
      %301 = vmatmul.mubr.bf16.gmra.mxu0 %v255
      %v302 = vpop.f32.mrf.mxu0
      %v303 = vadd.f32 0.0, %v302
      %v304 = vpop.f32.mrf.mxu0
      %v305 = vadd.f32 0.0, %v304
      %v306 = vpop.f32.mrf.mxu0
      %v307 = vpop.f32.mrf.mxu0
      %308 = vdwg.mxu0
      %309 = vmatprep.subr.bf16.mxu0 0
      %310 = vmatpush1.bf16.msra.mxu0 0
      %311 = vmatprep.subr.bf16.mxu0 0
      %312 = vmatpush1.bf16.msra.mxu0 0
      %313 = vmatprep.subr.bf16.mxu0 0
      %314 = vmatpush1.bf16.msra.mxu0 0
      %315 = vmatprep.subr.bf16.mxu0 0
      %316 = vmatpush1.bf16.msra.mxu0 0
      %317 = vmatprep.subr.bf16.mxu0 0
      %318 = vmatpush1.bf16.msra.mxu0 0
      %319 = vmatprep.subr.bf16.mxu0 0
      %320 = vmatpush1.bf16.msra.mxu0 0
      %321 = vmatprep.subr.bf16.mxu0 %v266
      %322 = vmatpush1.bf16.msra.mxu0 %v264
      %323 = vmatprep.subr.bf16.mxu0 %v242
      %324 = vmatpush1.bf16.msra.mxu0 %v238
      %325 = vmatprep.subr.bf16.mxu0 0
      %326 = vmatpush2.bf16.msra.mxu0 0
      %327 = vmatprep.subr.bf16.mxu0 0
      %328 = vmatpush2.bf16.msra.mxu0 0
      %329 = vmatprep.subr.bf16.mxu0 0
      %330 = vmatpush2.bf16.msra.mxu0 0
      %331 = vmatprep.subr.bf16.mxu0 0
      %332 = vmatpush2.bf16.msra.mxu0 0
      %333 = vmatprep.subr.bf16.mxu0 0
      %334 = vmatpush2.bf16.msra.mxu0 0
      %335 = vmatprep.subr.bf16.mxu0 0
      %336 = vmatpush2.bf16.msra.mxu0 0
      %337 = vmatprep.subr.bf16.mxu0 0
      %338 = vmatpush2.bf16.msra.mxu0 0
      %339 = vmatprep.subr.bf16.mxu0 0
      %340 = vmatpush2.bf16.msra.mxu0 0
      %341 = vmatprep.mubr.bf16.mxu0 0
      %342 = vmatmul.mubr.bf16.gmra.mxu0 %v255
      %v343 = vpop.f32.mrf.mxu0
      %v344 = vadd.f32 0.0, %v343
      %v345 = vpop.f32.mrf.mxu0
      %v346 = vadd.f32 0.0, %v345
      %v347 = vpop.f32.mrf.mxu0
      %v348 = vpop.f32.mrf.mxu0
      %349 = vdwg.mxu0
      %v350 = vlaneseq
      %v351 = vand.u32 %v350, 127
      %v352 = vadd.s32 %v351, 128
      %v353 = vadd.s32 %v351, 256
      %v354 = vadd.s32 %v351, 384
      %vm355 = vcmp.lt.s32.totalorder %v351, 32
      %vm356 = vcmp.lt.s32.totalorder %v352, 32
      %vm357 = vcmp.lt.s32.totalorder %v353, 32
      %vm358 = vcmp.lt.s32.totalorder %v354, 32
      %v359 = vsel %vm355, %v303, 0.0
      %v360 = vsel %vm356, %v305, 0.0
      %v361 = vsel %vm357, %v344, 0.0
      %v362 = vsel %vm358, %v346, 0.0
      %vm363 = vcmp.ge.f32.partialorder %v359, 0.0
      %vm364 = vcmp.ge.f32.partialorder %v360, 0.0
      %vm365 = vcmp.ge.f32.partialorder %v361, 0.0
      %vm366 = vcmp.ge.f32.partialorder %v362, 0.0
      %v367 = vmul.f32 %v359, 0.1
      %v368 = vmul.f32 %v360, 0.1
      %v369 = vmul.f32 %v361, 0.1
      %v370 = vmul.f32 %v362, 0.1
      %v371 = vsel %vm363, %v359, %v367
      %v372 = vsel %vm364, %v360, %v368
      %v373 = vsel %vm365, %v361, %v369
      %v374 = vsel %vm366, %v362, %v370
      %v375 = vpack.c.bf16 %v371, %v371
      %v376 = vpack.c.bf16 %v372, %v372
      %v377 = vpack.c.bf16 %v373, %v373
      %v378 = vpack.c.bf16 %v374, %v374
      %s379 = scalar_lea.vmem %s1, 4
      %v380 = vld [vmem:[%s379] sm:$0xf]
      %385 = vrot.lane.b32.xlu0 %v375, 1
      %v386 = vpop.permute.xlu0 %385
      %387 = vrot.lane.b32.xlu0 %v376, 1
      %v388 = vpop.permute.xlu0 %387
      %389 = vrot.lane.b32.xlu0 %v377, 1
      %v390 = vpop.permute.xlu0 %389
      %391 = vrot.lane.b32.xlu0 %v378, 1
      %v392 = vpop.permute.xlu0 %391
      %v393 = vsel %vm181, %v386, %v388
      %v394 = vsel %vm181, %v388, %v390
      %v395 = vsel %vm181, %v390, %v392
      %v397 = vsel %vm185, 0, %v386
      %v399 = vsel %vm185, %v392, 0
      %v402 = vrot.slane %v397, 4
      %v403 = vrot.slane %v393, 4
      %v404 = vrot.slane %v394, 4
      %v405 = vrot.slane %v395, 4
      %v406 = vrot.slane %v399, 4
      %407 = vrot.lane.b32.xlu0 %v402, 127
      %v408 = vpop.permute.xlu0 %407
      %409 = vrot.lane.b32.xlu0 %v403, 127
      %v410 = vpop.permute.xlu0 %409
      %411 = vrot.lane.b32.xlu0 %v404, 127
      %v412 = vpop.permute.xlu0 %411
      %413 = vrot.lane.b32.xlu0 %v405, 127
      %v414 = vpop.permute.xlu0 %413
      %415 = vrot.lane.b32.xlu0 %v406, 127
      %v416 = vpop.permute.xlu0 %415
      %v417 = vsel %vm208, %v408, %v410
      %v418 = vsel %vm208, %v410, %v412
      %v419 = vsel %vm208, %v412, %v414
      %v420 = vsel %vm208, %v414, %v416
      %421 = vrot.lane.b32.xlu0 %v397, 126
      %v422 = vpop.permute.xlu0 %421
      %423 = vrot.lane.b32.xlu0 %v393, 126
      %v424 = vpop.permute.xlu0 %423
      %425 = vrot.lane.b32.xlu0 %v394, 126
      %v426 = vpop.permute.xlu0 %425
      %427 = vrot.lane.b32.xlu0 %v395, 126
      %v428 = vpop.permute.xlu0 %427
      %429 = vrot.lane.b32.xlu0 %v399, 126
      %v430 = vpop.permute.xlu0 %429
      %v431 = vsel %vm223, %v422, %v424
      %v432 = vsel %vm223, %v424, %v426
      %v433 = vsel %vm223, %v426, %v428
      %v434 = vsel %vm223, %v428, %v430
      %v436 = vsel %vm228, %v397, %v417
      %v440 = vsel %vm228, %v393, %v418
      %v444 = vsel %vm228, %v394, %v419
      %v448 = vsel %vm228, %v395, %v420
      %v451 = vsel %vm228, %v431, 1065369472
      %v453 = vsel %vm228, %v432, 1065369472
      %v455 = vsel %vm228, %v433, 1065369472
      %v457 = vsel %vm228, %v434, 1065369472
      %v459 = vsel %vm253, %v380, 0
      %v461 = vand.u32 %v451, %v259
      %v463 = vand.u32 %v453, %v259
      %v465 = vand.u32 %v455, %v259
      %v467 = vand.u32 %v457, %v259
      %469 = vmatprep.subr.bf16.mxu0 0
      %470 = vmatpush1.bf16.msra.mxu0 0
      %471 = vmatprep.subr.bf16.mxu0 0
      %472 = vmatpush1.bf16.msra.mxu0 0
      %473 = vmatprep.subr.bf16.mxu0 0
      %474 = vmatpush1.bf16.msra.mxu0 0
      %475 = vmatprep.subr.bf16.mxu0 0
      %476 = vmatpush1.bf16.msra.mxu0 0
      %477 = vmatprep.subr.bf16.mxu0 0
      %478 = vmatpush1.bf16.msra.mxu0 0
      %479 = vmatprep.subr.bf16.mxu0 0
      %480 = vmatpush1.bf16.msra.mxu0 0
      %481 = vmatprep.subr.bf16.mxu0 %v463
      %482 = vmatpush1.bf16.msra.mxu0 %v461
      %483 = vmatprep.subr.bf16.mxu0 %v440
      %484 = vmatpush1.bf16.msra.mxu0 %v436
      %485 = vmatprep.subr.bf16.mxu0 0
      %486 = vmatpush2.bf16.msra.mxu0 0
      %487 = vmatprep.subr.bf16.mxu0 0
      %488 = vmatpush2.bf16.msra.mxu0 0
      %489 = vmatprep.subr.bf16.mxu0 0
      %490 = vmatpush2.bf16.msra.mxu0 0
      %491 = vmatprep.subr.bf16.mxu0 0
      %492 = vmatpush2.bf16.msra.mxu0 0
      %493 = vmatprep.subr.bf16.mxu0 0
      %494 = vmatpush2.bf16.msra.mxu0 0
      %495 = vmatprep.subr.bf16.mxu0 0
      %496 = vmatpush2.bf16.msra.mxu0 0
      %497 = vmatprep.subr.bf16.mxu0 0
      %498 = vmatpush2.bf16.msra.mxu0 0
      %499 = vmatprep.subr.bf16.mxu0 0
      %500 = vmatpush2.bf16.msra.mxu0 0
      %501 = vmatprep.mubr.bf16.mxu0 0
      %502 = vmatmul.mubr.bf16.gmra.mxu0 %v459
      %v503 = vpop.f32.mrf.mxu0
      %v504 = vadd.f32 0.0, %v503
      %v505 = vpop.f32.mrf.mxu0
      %v506 = vadd.f32 0.0, %v505
      %v507 = vpop.f32.mrf.mxu0
      %v508 = vpop.f32.mrf.mxu0
      %509 = vdwg.mxu0
      %510 = vmatprep.subr.bf16.mxu0 0
      %511 = vmatpush1.bf16.msra.mxu0 0
      %512 = vmatprep.subr.bf16.mxu0 0
      %513 = vmatpush1.bf16.msra.mxu0 0
      %514 = vmatprep.subr.bf16.mxu0 0
      %515 = vmatpush1.bf16.msra.mxu0 0
      %516 = vmatprep.subr.bf16.mxu0 0
      %517 = vmatpush1.bf16.msra.mxu0 0
      %518 = vmatprep.subr.bf16.mxu0 0
      %519 = vmatpush1.bf16.msra.mxu0 0
      %520 = vmatprep.subr.bf16.mxu0 0
      %521 = vmatpush1.bf16.msra.mxu0 0
      %522 = vmatprep.subr.bf16.mxu0 %v467
      %523 = vmatpush1.bf16.msra.mxu0 %v465
      %524 = vmatprep.subr.bf16.mxu0 %v448
      %525 = vmatpush1.bf16.msra.mxu0 %v444
      %526 = vmatprep.subr.bf16.mxu0 0
      %527 = vmatpush2.bf16.msra.mxu0 0
      %528 = vmatprep.subr.bf16.mxu0 0
      %529 = vmatpush2.bf16.msra.mxu0 0
      %530 = vmatprep.subr.bf16.mxu0 0
      %531 = vmatpush2.bf16.msra.mxu0 0
      %532 = vmatprep.subr.bf16.mxu0 0
      %533 = vmatpush2.bf16.msra.mxu0 0
      %534 = vmatprep.subr.bf16.mxu0 0
      %535 = vmatpush2.bf16.msra.mxu0 0
      %536 = vmatprep.subr.bf16.mxu0 0
      %537 = vmatpush2.bf16.msra.mxu0 0
      %538 = vmatprep.subr.bf16.mxu0 0
      %539 = vmatpush2.bf16.msra.mxu0 0
      %540 = vmatprep.subr.bf16.mxu0 0
      %541 = vmatpush2.bf16.msra.mxu0 0
      %542 = vmatprep.mubr.bf16.mxu0 0
      %543 = vmatmul.mubr.bf16.gmra.mxu0 %v459
      %v544 = vpop.f32.mrf.mxu0
      %v545 = vadd.f32 0.0, %v544
      %v546 = vpop.f32.mrf.mxu0
      %v547 = vadd.f32 0.0, %v546
      %v548 = vpop.f32.mrf.mxu0
      %v549 = vpop.f32.mrf.mxu0
      %550 = vdwg.mxu0
      %v551 = vsel %vm355, %v504, 0.0
      %v552 = vsel %vm356, %v506, 0.0
      %v553 = vsel %vm357, %v545, 0.0
      %v554 = vsel %vm358, %v547, 0.0
      %v555 = vadd.f32 %v148, %v551
      %v556 = vadd.f32 %v149, %v552
      %v557 = vadd.f32 %v150, %v553
      %v558 = vadd.f32 %v151, %v554
      %vm559 = vcmp.ge.f32.partialorder %v555, 0.0
      %vm560 = vcmp.ge.f32.partialorder %v556, 0.0
      %vm561 = vcmp.ge.f32.partialorder %v557, 0.0
      %vm562 = vcmp.ge.f32.partialorder %v558, 0.0
      %v563 = vmul.f32 %v555, 0.1
      %v564 = vmul.f32 %v556, 0.1
      %v565 = vmul.f32 %v557, 0.1
      %v566 = vmul.f32 %v558, 0.1
      %v567 = vsel %vm559, %v555, %v563
      %v568 = vsel %vm560, %v556, %v564
      %v569 = vsel %vm561, %v557, %v565
      %v570 = vsel %vm562, %v558, %v566
      %v571 = vpack.c.bf16 %v567, %v567
      %v572 = vpack.c.bf16 %v568, %v568
      %v573 = vpack.c.bf16 %v569, %v569
      %v574 = vpack.c.bf16 %v570, %v570
      %s575 = scalar_lea.vmem %s1, 8
      %v576 = vld [vmem:[%s575] sm:$0xf]
      %581 = vrot.lane.b32.xlu0 %v571, 3
      %v582 = vpop.permute.xlu0 %581
      %583 = vrot.lane.b32.xlu0 %v572, 3
      %v584 = vpop.permute.xlu0 %583
      %585 = vrot.lane.b32.xlu0 %v573, 3
      %v586 = vpop.permute.xlu0 %585
      %587 = vrot.lane.b32.xlu0 %v574, 3
      %v588 = vpop.permute.xlu0 %587
      %vm589 = vcmask 23552
      %v590 = vsel %vm589, %v582, %v584
      %v591 = vsel %vm589, %v584, %v586
      %v592 = vsel %vm589, %v586, %v588
      %vm593 = vcmask 23552
      %v595 = vsel %vm593, 0, %v582
      %v597 = vsel %vm593, %v588, 0
      %v600 = vrot.slane %v595, 4
      %v601 = vrot.slane %v590, 4
      %v602 = vrot.slane %v591, 4
      %v603 = vrot.slane %v592, 4
      %v604 = vrot.slane %v597, 4
      %605 = vrot.lane.b32.xlu0 %v600, 125
      %v606 = vpop.permute.xlu0 %605
      %607 = vrot.lane.b32.xlu0 %v601, 125
      %v608 = vpop.permute.xlu0 %607
      %609 = vrot.lane.b32.xlu0 %v602, 125
      %v610 = vpop.permute.xlu0 %609
      %611 = vrot.lane.b32.xlu0 %v603, 125
      %v612 = vpop.permute.xlu0 %611
      %613 = vrot.lane.b32.xlu0 %v604, 125
      %v614 = vpop.permute.xlu0 %613
      %vm615 = vcmask 1022976
      %v616 = vsel %vm615, %v606, %v608
      %v617 = vsel %vm615, %v608, %v610
      %v618 = vsel %vm615, %v610, %v612
      %v619 = vsel %vm615, %v612, %v614
      %620 = vrot.lane.b32.xlu0 %v595, 122
      %v621 = vpop.permute.xlu0 %620
      %622 = vrot.lane.b32.xlu0 %v590, 122
      %v623 = vpop.permute.xlu0 %622
      %624 = vrot.lane.b32.xlu0 %v591, 122
      %v625 = vpop.permute.xlu0 %624
      %626 = vrot.lane.b32.xlu0 %v592, 122
      %v627 = vpop.permute.xlu0 %626
      %628 = vrot.lane.b32.xlu0 %v597, 122
      %v629 = vpop.permute.xlu0 %628
      %vm630 = vcmask 998400
      %v631 = vsel %vm630, %v621, %v623
      %v632 = vsel %vm630, %v623, %v625
      %v633 = vsel %vm630, %v625, %v627
      %v634 = vsel %vm630, %v627, %v629
      %v636 = vsel %vm228, %v595, %v616
      %v640 = vsel %vm228, %v590, %v617
      %v644 = vsel %vm228, %v591, %v618
      %v648 = vsel %vm228, %v592, %v619
      %v651 = vsel %vm228, %v631, 1065369472
      %v653 = vsel %vm228, %v632, 1065369472
      %v655 = vsel %vm228, %v633, 1065369472
      %v657 = vsel %vm228, %v634, 1065369472
      %v659 = vsel %vm253, %v576, 0
      %v661 = vand.u32 %v651, %v259
      %v663 = vand.u32 %v653, %v259
      %v665 = vand.u32 %v655, %v259
      %v667 = vand.u32 %v657, %v259
      %669 = vmatprep.subr.bf16.mxu0 0
      %670 = vmatpush1.bf16.msra.mxu0 0
      %671 = vmatprep.subr.bf16.mxu0 0
      %672 = vmatpush1.bf16.msra.mxu0 0
      %673 = vmatprep.subr.bf16.mxu0 0
      %674 = vmatpush1.bf16.msra.mxu0 0
      %675 = vmatprep.subr.bf16.mxu0 0
      %676 = vmatpush1.bf16.msra.mxu0 0
      %677 = vmatprep.subr.bf16.mxu0 0
      %678 = vmatpush1.bf16.msra.mxu0 0
      %679 = vmatprep.subr.bf16.mxu0 0
      %680 = vmatpush1.bf16.msra.mxu0 0
      %681 = vmatprep.subr.bf16.mxu0 %v663
      %682 = vmatpush1.bf16.msra.mxu0 %v661
      %683 = vmatprep.subr.bf16.mxu0 %v640
      %684 = vmatpush1.bf16.msra.mxu0 %v636
      %685 = vmatprep.subr.bf16.mxu0 0
      %686 = vmatpush2.bf16.msra.mxu0 0
      %687 = vmatprep.subr.bf16.mxu0 0
      %688 = vmatpush2.bf16.msra.mxu0 0
      %689 = vmatprep.subr.bf16.mxu0 0
      %690 = vmatpush2.bf16.msra.mxu0 0
      %691 = vmatprep.subr.bf16.mxu0 0
      %692 = vmatpush2.bf16.msra.mxu0 0
      %693 = vmatprep.subr.bf16.mxu0 0
      %694 = vmatpush2.bf16.msra.mxu0 0
      %695 = vmatprep.subr.bf16.mxu0 0
      %696 = vmatpush2.bf16.msra.mxu0 0
      %697 = vmatprep.subr.bf16.mxu0 0
      %698 = vmatpush2.bf16.msra.mxu0 0
      %699 = vmatprep.subr.bf16.mxu0 0
      %700 = vmatpush2.bf16.msra.mxu0 0
      %701 = vmatprep.mubr.bf16.mxu0 0
      %702 = vmatmul.mubr.bf16.gmra.mxu0 %v659
      %v703 = vpop.f32.mrf.mxu0
      %v704 = vadd.f32 0.0, %v703
      %v705 = vpop.f32.mrf.mxu0
      %v706 = vadd.f32 0.0, %v705
      %v707 = vpop.f32.mrf.mxu0
      %v708 = vpop.f32.mrf.mxu0
      %709 = vdwg.mxu0
      %710 = vmatprep.subr.bf16.mxu0 0
      %711 = vmatpush1.bf16.msra.mxu0 0
      %712 = vmatprep.subr.bf16.mxu0 0
      %713 = vmatpush1.bf16.msra.mxu0 0
      %714 = vmatprep.subr.bf16.mxu0 0
      %715 = vmatpush1.bf16.msra.mxu0 0
      %716 = vmatprep.subr.bf16.mxu0 0
      %717 = vmatpush1.bf16.msra.mxu0 0
      %718 = vmatprep.subr.bf16.mxu0 0
      %719 = vmatpush1.bf16.msra.mxu0 0
      %720 = vmatprep.subr.bf16.mxu0 0
      %721 = vmatpush1.bf16.msra.mxu0 0
      %722 = vmatprep.subr.bf16.mxu0 %v667
      %723 = vmatpush1.bf16.msra.mxu0 %v665
      %724 = vmatprep.subr.bf16.mxu0 %v648
      %725 = vmatpush1.bf16.msra.mxu0 %v644
      %726 = vmatprep.subr.bf16.mxu0 0
      %727 = vmatpush2.bf16.msra.mxu0 0
      %728 = vmatprep.subr.bf16.mxu0 0
      %729 = vmatpush2.bf16.msra.mxu0 0
      %730 = vmatprep.subr.bf16.mxu0 0
      %731 = vmatpush2.bf16.msra.mxu0 0
      %732 = vmatprep.subr.bf16.mxu0 0
      %733 = vmatpush2.bf16.msra.mxu0 0
      %734 = vmatprep.subr.bf16.mxu0 0
      %735 = vmatpush2.bf16.msra.mxu0 0
      %736 = vmatprep.subr.bf16.mxu0 0
      %737 = vmatpush2.bf16.msra.mxu0 0
      %738 = vmatprep.subr.bf16.mxu0 0
      %739 = vmatpush2.bf16.msra.mxu0 0
      %740 = vmatprep.subr.bf16.mxu0 0
      %741 = vmatpush2.bf16.msra.mxu0 0
      %742 = vmatprep.mubr.bf16.mxu0 0
      %743 = vmatmul.mubr.bf16.gmra.mxu0 %v659
      %v744 = vpop.f32.mrf.mxu0
      %v745 = vadd.f32 0.0, %v744
      %v746 = vpop.f32.mrf.mxu0
      %v747 = vadd.f32 0.0, %v746
      %v748 = vpop.f32.mrf.mxu0
      %v749 = vpop.f32.mrf.mxu0
      %750 = vdwg.mxu0
      %v751 = vsel %vm355, %v704, 0.0
      %v752 = vsel %vm356, %v706, 0.0
      %v753 = vsel %vm357, %v745, 0.0
      %v754 = vsel %vm358, %v747, 0.0
      %vm755 = vcmp.ge.f32.partialorder %v751, 0.0
      %vm756 = vcmp.ge.f32.partialorder %v752, 0.0
      %vm757 = vcmp.ge.f32.partialorder %v753, 0.0
      %vm758 = vcmp.ge.f32.partialorder %v754, 0.0
      %v759 = vmul.f32 %v751, 0.1
      %v760 = vmul.f32 %v752, 0.1
      %v761 = vmul.f32 %v753, 0.1
      %v762 = vmul.f32 %v754, 0.1
      %v763 = vsel %vm755, %v751, %v759
      %v764 = vsel %vm756, %v752, %v760
      %v765 = vsel %vm757, %v753, %v761
      %v766 = vsel %vm758, %v754, %v762
      %v767 = vpack.c.bf16 %v763, %v763
      %v768 = vpack.c.bf16 %v764, %v764
      %v769 = vpack.c.bf16 %v765, %v765
      %v770 = vpack.c.bf16 %v766, %v766
      %s771 = scalar_lea.vmem %s1, 12
      %v772 = vld [vmem:[%s771] sm:$0xf]
      %777 = vrot.lane.b32.xlu0 %v767, 1
      %v778 = vpop.permute.xlu0 %777
      %779 = vrot.lane.b32.xlu0 %v768, 1
      %v780 = vpop.permute.xlu0 %779
      %781 = vrot.lane.b32.xlu0 %v769, 1
      %v782 = vpop.permute.xlu0 %781
      %783 = vrot.lane.b32.xlu0 %v770, 1
      %v784 = vpop.permute.xlu0 %783
      %v785 = vsel %vm181, %v778, %v780
      %v786 = vsel %vm181, %v780, %v782
      %v787 = vsel %vm181, %v782, %v784
      %v789 = vsel %vm185, 0, %v778
      %v791 = vsel %vm185, %v784, 0
      %v794 = vrot.slane %v789, 4
      %v795 = vrot.slane %v785, 4
      %v796 = vrot.slane %v786, 4
      %v797 = vrot.slane %v787, 4
      %v798 = vrot.slane %v791, 4
      %799 = vrot.lane.b32.xlu0 %v794, 127
      %v800 = vpop.permute.xlu0 %799
      %801 = vrot.lane.b32.xlu0 %v795, 127
      %v802 = vpop.permute.xlu0 %801
      %803 = vrot.lane.b32.xlu0 %v796, 127
      %v804 = vpop.permute.xlu0 %803
      %805 = vrot.lane.b32.xlu0 %v797, 127
      %v806 = vpop.permute.xlu0 %805
      %807 = vrot.lane.b32.xlu0 %v798, 127
      %v808 = vpop.permute.xlu0 %807
      %v809 = vsel %vm208, %v800, %v802
      %v810 = vsel %vm208, %v802, %v804
      %v811 = vsel %vm208, %v804, %v806
      %v812 = vsel %vm208, %v806, %v808
      %813 = vrot.lane.b32.xlu0 %v789, 126
      %v814 = vpop.permute.xlu0 %813
      %815 = vrot.lane.b32.xlu0 %v785, 126
      %v816 = vpop.permute.xlu0 %815
      %817 = vrot.lane.b32.xlu0 %v786, 126
      %v818 = vpop.permute.xlu0 %817
      %819 = vrot.lane.b32.xlu0 %v787, 126
      %v820 = vpop.permute.xlu0 %819
      %821 = vrot.lane.b32.xlu0 %v791, 126
      %v822 = vpop.permute.xlu0 %821
      %v823 = vsel %vm223, %v814, %v816
      %v824 = vsel %vm223, %v816, %v818
      %v825 = vsel %vm223, %v818, %v820
      %v826 = vsel %vm223, %v820, %v822
      %v828 = vsel %vm228, %v789, %v809
      %v832 = vsel %vm228, %v785, %v810
      %v836 = vsel %vm228, %v786, %v811
      %v840 = vsel %vm228, %v787, %v812
      %v843 = vsel %vm228, %v823, 1065369472
      %v845 = vsel %vm228, %v824, 1065369472
      %v847 = vsel %vm228, %v825, 1065369472
      %v849 = vsel %vm228, %v826, 1065369472
      %v851 = vsel %vm253, %v772, 0
      %v853 = vand.u32 %v843, %v259
      %v855 = vand.u32 %v845, %v259
      %v857 = vand.u32 %v847, %v259
      %v859 = vand.u32 %v849, %v259
      %861 = vmatprep.subr.bf16.mxu0 0
      %862 = vmatpush1.bf16.msra.mxu0 0
      %863 = vmatprep.subr.bf16.mxu0 0
      %864 = vmatpush1.bf16.msra.mxu0 0
      %865 = vmatprep.subr.bf16.mxu0 0
      %866 = vmatpush1.bf16.msra.mxu0 0
      %867 = vmatprep.subr.bf16.mxu0 0
      %868 = vmatpush1.bf16.msra.mxu0 0
      %869 = vmatprep.subr.bf16.mxu0 0
      %870 = vmatpush1.bf16.msra.mxu0 0
      %871 = vmatprep.subr.bf16.mxu0 0
      %872 = vmatpush1.bf16.msra.mxu0 0
      %873 = vmatprep.subr.bf16.mxu0 %v855
      %874 = vmatpush1.bf16.msra.mxu0 %v853
      %875 = vmatprep.subr.bf16.mxu0 %v832
      %876 = vmatpush1.bf16.msra.mxu0 %v828
      %877 = vmatprep.subr.bf16.mxu0 0
      %878 = vmatpush2.bf16.msra.mxu0 0
      %879 = vmatprep.subr.bf16.mxu0 0
      %880 = vmatpush2.bf16.msra.mxu0 0
      %881 = vmatprep.subr.bf16.mxu0 0
      %882 = vmatpush2.bf16.msra.mxu0 0
      %883 = vmatprep.subr.bf16.mxu0 0
      %884 = vmatpush2.bf16.msra.mxu0 0
      %885 = vmatprep.subr.bf16.mxu0 0
      %886 = vmatpush2.bf16.msra.mxu0 0
      %887 = vmatprep.subr.bf16.mxu0 0
      %888 = vmatpush2.bf16.msra.mxu0 0
      %889 = vmatprep.subr.bf16.mxu0 0
      %890 = vmatpush2.bf16.msra.mxu0 0
      %891 = vmatprep.subr.bf16.mxu0 0
      %892 = vmatpush2.bf16.msra.mxu0 0
      %893 = vmatprep.mubr.bf16.mxu0 0
      %894 = vmatmul.mubr.bf16.gmra.mxu0 %v851
      %v895 = vpop.f32.mrf.mxu0
      %v896 = vadd.f32 0.0, %v895
      %v897 = vpop.f32.mrf.mxu0
      %v898 = vadd.f32 0.0, %v897
      %v899 = vpop.f32.mrf.mxu0
      %v900 = vpop.f32.mrf.mxu0
      %901 = vdwg.mxu0
      %902 = vmatprep.subr.bf16.mxu0 0
      %903 = vmatpush1.bf16.msra.mxu0 0
      %904 = vmatprep.subr.bf16.mxu0 0
      %905 = vmatpush1.bf16.msra.mxu0 0
      %906 = vmatprep.subr.bf16.mxu0 0
      %907 = vmatpush1.bf16.msra.mxu0 0
      %908 = vmatprep.subr.bf16.mxu0 0
      %909 = vmatpush1.bf16.msra.mxu0 0
      %910 = vmatprep.subr.bf16.mxu0 0
      %911 = vmatpush1.bf16.msra.mxu0 0
      %912 = vmatprep.subr.bf16.mxu0 0
      %913 = vmatpush1.bf16.msra.mxu0 0
      %914 = vmatprep.subr.bf16.mxu0 %v859
      %915 = vmatpush1.bf16.msra.mxu0 %v857
      %916 = vmatprep.subr.bf16.mxu0 %v840
      %917 = vmatpush1.bf16.msra.mxu0 %v836
      %918 = vmatprep.subr.bf16.mxu0 0
      %919 = vmatpush2.bf16.msra.mxu0 0
      %920 = vmatprep.subr.bf16.mxu0 0
      %921 = vmatpush2.bf16.msra.mxu0 0
      %922 = vmatprep.subr.bf16.mxu0 0
      %923 = vmatpush2.bf16.msra.mxu0 0
      %924 = vmatprep.subr.bf16.mxu0 0
      %925 = vmatpush2.bf16.msra.mxu0 0
      %926 = vmatprep.subr.bf16.mxu0 0
      %927 = vmatpush2.bf16.msra.mxu0 0
      %928 = vmatprep.subr.bf16.mxu0 0
      %929 = vmatpush2.bf16.msra.mxu0 0
      %930 = vmatprep.subr.bf16.mxu0 0
      %931 = vmatpush2.bf16.msra.mxu0 0
      %932 = vmatprep.subr.bf16.mxu0 0
      %933 = vmatpush2.bf16.msra.mxu0 0
      %934 = vmatprep.mubr.bf16.mxu0 0
      %935 = vmatmul.mubr.bf16.gmra.mxu0 %v851
      %v936 = vpop.f32.mrf.mxu0
      %v937 = vadd.f32 0.0, %v936
      %v938 = vpop.f32.mrf.mxu0
      %v939 = vadd.f32 0.0, %v938
      %v940 = vpop.f32.mrf.mxu0
      %v941 = vpop.f32.mrf.mxu0
      %942 = vdwg.mxu0
      %v943 = vsel %vm355, %v896, 0.0
      %v944 = vsel %vm356, %v898, 0.0
      %v945 = vsel %vm357, %v937, 0.0
      %v946 = vsel %vm358, %v939, 0.0
      %v947 = vadd.f32 %v555, %v943
      %v948 = vadd.f32 %v556, %v944
      %v949 = vadd.f32 %v557, %v945
      %v950 = vadd.f32 %v558, %v946
      %v951 = vpack.c.bf16 %v947, %v947
      %v952 = vpack.c.bf16 %v948, %v948
      %v953 = vpack.c.bf16 %v949, %v949
      %v954 = vpack.c.bf16 %v950, %v950
      %v959 = vunpack.c.l.b16 %v951
      %v960 = vunpack.c.l.b16 %v952
      %v961 = vunpack.c.l.b16 %v953
      %v962 = vunpack.c.l.b16 %v954
      %v963 = vpack.c.b16 %v960, %v959
      %v964 = vpack.c.b16 %v962, %v961
      %967 = vst [vmem:[%s143] sm:$0xff] %v963
      %968 = vst [vmem:[%s143 + $0x8] sm:$0xff] %v964
      %p969 = scmp.lt.s32.totalorder %s13, 1
      %s970 = scalar_select %p969, %s13, 1
      %s971 = smul.addr %s970, 4
      %s972 = smul.addr %s971, 4
      %s973 = scalar_lea.vmem %s2, %s972
      // Predicated region
      $region29: #{soft_hifigan_forward.12} parent=27 // pred_check
        %p974 = pneg %p78
      $region30: #{soft_hifigan_forward.12} parent=27 // pred_check_branch
        %976 = sbr.rel (%p974) target = $region32
      $region31: #{soft_hifigan_forward.12} parent=27 // pred_region
        _
      $region32: #{soft_hifigan_forward.12} parent=27 // pred_fallthru
        _
    $region28: #{soft_hifigan_forward.12} parent=5 // pred_fallthru
      _
    %p977 = scmp.le.s32.totalorder 2, %s8
    // Predicated region
    $region33: #{soft_hifigan_forward.12} parent=5 // pred_check
      %p978 = pneg %p977
    $region34: #{soft_hifigan_forward.12} parent=5 // pred_check_branch
      %980 = sbr.rel (%p978) target = $region36
    $region35: #{soft_hifigan_forward.12} parent=5 // pred_region
      %s981 = ssub.s32 %s8, 2
      // Predicated region
      $region37: #{soft_hifigan_forward.12} parent=35 // pred_check
        %p982 = pneg %p84
      $region38: #{soft_hifigan_forward.12} parent=35 // pred_check_branch
        %984 = sbr.rel (%p982) target = $region40
      $region39: #{soft_hifigan_forward.12} parent=35 // pred_region
        %p985 = scmp.lt.s32.totalorder %s14, 1
        %s986 = scalar_select %p985, %s14, 1
        %s987 = smul.addr %s986, 4
        %s988 = smul.addr %s987, 4
        %s989 = scalar_lea.vmem %s2, %s988
      $region40: #{soft_hifigan_forward.12} parent=35 // pred_fallthru
        _
    $region36: #{soft_hifigan_forward.12} parent=5 // pred_fallthru
      _
  $region6: #{soft_hifigan_forward.12} parent=0 // loop_footer
    %s12 = sadd.s32 1, %s8
  $region7: #{soft_hifigan_forward.12} parent=0 // loop_footer_branch
    %7 = sbr.rel target = $region3
  $region8: #{soft_hifigan_forward.12} parent=0 // loop_exit
    _

// kernel: soft_hifigan_forward.13
$region0: #{soft_hifigan_forward.13}
  #allocation0 [shape = 'u32[]', space=smem, size = 0x4, offset = 0x4, fixed_abs, tag = 'smem constant byte address 0x4 - core index']
  #allocation1 [shape = 'u32[144,128]{1,0:T(1,128)}', space=vmem, size = 0x12000, scoped, tag = 'internal scratch']
  %s0 = inlined_call_operand.vmem [shape: bf16[2,8,512], index: 0, kind: input, shape index: {}]
  %s1 = inlined_call_operand.vmem [shape: bf16[1,57], index: 1, kind: input, shape index: {}]
  %s2 = inlined_call_operand.vmem [shape: f32[2,1,512], index: 2, kind: output, shape index: {}]
  %s3 = sld [smem:[#allocation0]]
  $region41: #{soft_hifigan_forward.13} parent=0
    _
  %s5 = ssub.s32 1, %s3
  %s6 = scalar_select 0, %s5, %s3
  loop: start=0, step=1, limit=4
  $region2: #{soft_hifigan_forward.13} parent=0 // loop_pre_header
    _
  $region3: #{soft_hifigan_forward.13} parent=0 // loop_header
    %s8 = sphi 0, %s12
    %p9 = scmp.ge.s32.totalorder %s8, 4
    %s18 = sphi 0, %s20
    %s21 = sphi 0, %s18
    %s22 = sphi 0, %s21
    %s38 = sphi 0, %s22
    %s42 = sphi 0, %s42
    %s44 = sphi 0, %s42
    %s45 = sphi 0, %s44
    %s59 = sphi 0, %s45
    %s65 = sphi 0, %s67
    %s68 = sphi 0, %s65
    %s69 = sphi 0, %s68
    %s85 = sphi 0, %s69
  $region4: #{soft_hifigan_forward.13} parent=0 // loop_header_branch
    %11 = sbr.rel (%p9) target = $region8
  $region5: #{soft_hifigan_forward.13} parent=0 // loop_body
    %s13 = ssub.s32 %s8, 1
    %s14 = ssub.s32 %s8, 2
    %s15 = sadd.s32 %s8, 1
    %s16 = ssub.s32 %s8, %s15
    %p17 = scmp.eq.s32.totalorder %s16, 0
    %s19 = sadd.s32 %s18, 1
    %s20 = scalar_select %p17, %s18, %s19
    %p23 = pneg %p17
    %p24 = scmp.eq.s32.totalorder %s8, 1
    %p25 = por %p23, %p24
    %p26 = scmp.ne.s32.totalorder %s18, %s21
    %p27 = scmp.eq.s32.totalorder %s8, 0
    %p28 = por %p26, %p27
    %p29 = scmp.ne.s32.totalorder %s18, %s21
    %p30 = scmp.eq.s32.totalorder %s13, 1
    %p31 = por %p29, %p30
    %p32 = scmp.ne.s32.totalorder %s21, %s22
    %p33 = scmp.eq.s32.totalorder %s13, 0
    %p34 = por %p32, %p33
    %p35 = scmp.ne.s32.totalorder %s21, %s22
    %p36 = scmp.eq.s32.totalorder %s14, 1
    %p37 = por %p35, %p36
    %p39 = scmp.ne.s32.totalorder %s22, %s38
    %p40 = scmp.eq.s32.totalorder %s14, 0
    %p41 = por %p39, %p40
    %s43 = sadd.s32 %s42, 1
    %p46 = scmp.eq.s32.totalorder %s8, 1
    %p47 = scmp.ne.s32.totalorder %s42, %s44
    %p48 = scmp.eq.s32.totalorder %s8, 0
    %p49 = por %p47, %p48
    %p50 = scmp.ne.s32.totalorder %s42, %s44
    %p51 = scmp.eq.s32.totalorder %s13, 1
    %p52 = por %p50, %p51
    %p53 = scmp.ne.s32.totalorder %s44, %s45
    %p54 = scmp.eq.s32.totalorder %s13, 0
    %p55 = por %p53, %p54
    %p56 = scmp.ne.s32.totalorder %s44, %s45
    %p57 = scmp.eq.s32.totalorder %s14, 1
    %p58 = por %p56, %p57
    %p60 = scmp.ne.s32.totalorder %s45, %s59
    %p61 = scmp.eq.s32.totalorder %s14, 0
    %p62 = por %p60, %p61
    %s63 = ssub.s32 %s8, %s15
    %p64 = scmp.eq.s32.totalorder %s63, 0
    %s66 = sadd.s32 %s65, 1
    %s67 = scalar_select %p64, %s65, %s66
    %p70 = pneg %p64
    %p71 = scmp.eq.s32.totalorder %s8, 1
    %p72 = por %p70, %p71
    %p73 = scmp.ne.s32.totalorder %s65, %s68
    %p74 = scmp.eq.s32.totalorder %s8, 0
    %p75 = por %p73, %p74
    %p76 = scmp.ne.s32.totalorder %s65, %s68
    %p77 = scmp.eq.s32.totalorder %s13, 1
    %p78 = por %p76, %p77
    %p79 = scmp.ne.s32.totalorder %s68, %s69
    %p80 = scmp.eq.s32.totalorder %s13, 0
    %p81 = por %p79, %p80
    %p82 = scmp.ne.s32.totalorder %s68, %s69
    %p83 = scmp.eq.s32.totalorder %s14, 1
    %p84 = por %p82, %p83
    %p86 = scmp.ne.s32.totalorder %s69, %s85
    %p87 = scmp.eq.s32.totalorder %s14, 0
    %p88 = por %p86, %p87
    %p89 = scmp.le.s32.totalorder 1, %s8
    %p90 = scmp.lt.s32.totalorder %s8, 3
    %p91 = pnand %p89, %p90
    %p92 = pneg %p91
    // Predicated region
    $region9: #{soft_hifigan_forward.13} parent=5 // pred_check
      _
    $region10: #{soft_hifigan_forward.13} parent=5 // pred_check_branch
      %94 = sbr.rel (%p91) target = $region12
    $region11: #{soft_hifigan_forward.13} parent=5 // pred_region
      %s95 = ssub.s32 %s8, 1
      // Predicated region
      $region13: #{soft_hifigan_forward.13} parent=11 // pred_check
        %p96 = pneg %p55
      $region14: #{soft_hifigan_forward.13} parent=11 // pred_check_branch
        %98 = sbr.rel (%p96) target = $region16
      $region15: #{soft_hifigan_forward.13} parent=11 // pred_region
        _
      $region16: #{soft_hifigan_forward.13} parent=11 // pred_fallthru
        _
    $region12: #{soft_hifigan_forward.13} parent=5 // pred_fallthru
      _
    %p99 = scmp.lt.s32.totalorder %s8, 2
    // Predicated region
    $region17: #{soft_hifigan_forward.13} parent=5 // pred_check
      %p100 = pneg %p99
    $region18: #{soft_hifigan_forward.13} parent=5 // pred_check_branch
      %102 = sbr.rel (%p100) target = $region20
    $region19: #{soft_hifigan_forward.13} parent=5 // pred_region
      // Predicated region
      $region21: #{soft_hifigan_forward.13} parent=19 // pred_check
        %p103 = pneg %p28
      $region22: #{soft_hifigan_forward.13} parent=19 // pred_check_branch
        %105 = sbr.rel (%p103) target = $region24
      $region23: #{soft_hifigan_forward.13} parent=19 // pred_region
        %p106 = scmp.lt.s32.totalorder %s8, 1
        %s107 = scalar_select %p106, %s8, 1
        %s108 = smul.addr %s107, 4
        %s109 = smul.addr %s108, 4
        %s110 = scalar_lea.vmem %s0, %s109
      $region24: #{soft_hifigan_forward.13} parent=19 // pred_fallthru
        _
    $region20: #{soft_hifigan_forward.13} parent=5 // pred_fallthru
      _
    %p111 = scmp.le.s32.totalorder 1, %s8
    %p112 = scmp.lt.s32.totalorder %s8, 3
    %p113 = pnand %p111, %p112
    %p114 = pneg %p113
    // Predicated region
    $region25: #{soft_hifigan_forward.13} parent=5 // pred_check
      _
    $region26: #{soft_hifigan_forward.13} parent=5 // pred_check_branch
      %116 = sbr.rel (%p113) target = $region28
    $region27: #{soft_hifigan_forward.13} parent=5 // pred_region
      %s117 = ssub.s32 %s8, 1
      %p118 = scmp.lt.s32.totalorder %s13, 1
      %s119 = scalar_select %p118, %s13, 1
      %s120 = smul.addr %s119, 4
      %s121 = smul.addr %s120, 4
      %s122 = scalar_lea.vmem %s0, %s121
      %p123 = pneg %p34
      %p124 = pneg %p31
      %p125 = pneg %p55
      %p126 = pneg %p52
      %p127 = pneg %p81
      %p128 = pneg %p78
      %p129 = scmp.lt.s32.totalorder %s13, 1
      %s130 = scalar_select %p129, %s13, 1
      %s131 = smul.addr %s130, 4
      %s132 = scalar_lea.vmem %s2, %s131
      %p133 = scmp.lt.s32.totalorder %s13, 1
      %s134 = scalar_select %p133, %s13, 1
      %s135 = smul.addr %s134, 4
      %s136 = smul.addr %s135, 4
      %s137 = scalar_lea.vmem %s0, %s136
      %p138 = scmp.lt.s32.totalorder %s13, 1
      %s139 = scalar_select %p138, %s13, 1
      %s140 = smul.addr %s139, 4
      %s141 = scalar_lea.vmem %s2, %s140
      %v144 = vld [vmem:[%s137] sm:$0xff]
      %v145 = vld [vmem:[%s137 + $0x8] sm:$0xff]
      %v146 = vunpack.c.l.bf16 %v144
      %v147 = vunpack.c.h.bf16 %v144
      %v148 = vunpack.c.l.bf16 %v145
      %v149 = vunpack.c.h.bf16 %v145
      %vm150 = vcmp.ge.f32.partialorder %v146, 0.0
      %vm151 = vcmp.ge.f32.partialorder %v147, 0.0
      %vm152 = vcmp.ge.f32.partialorder %v148, 0.0
      %vm153 = vcmp.ge.f32.partialorder %v149, 0.0
      %v154 = vmul.f32 %v146, 0.1
      %v155 = vmul.f32 %v147, 0.1
      %v156 = vmul.f32 %v148, 0.1
      %v157 = vmul.f32 %v149, 0.1
      %v158 = vsel %vm150, %v146, %v154
      %v159 = vsel %vm151, %v147, %v155
      %v160 = vsel %vm152, %v148, %v156
      %v161 = vsel %vm153, %v149, %v157
      %v162 = vpack.c.bf16 %v158, %v158
      %v163 = vpack.c.bf16 %v159, %v159
      %v164 = vpack.c.bf16 %v160, %v160
      %v165 = vpack.c.bf16 %v161, %v161
      %v166 = vld [vmem:[%s1] sm:$0x1]
      %171 = vrot.lane.b32.xlu0 %v162, 3
      %v172 = vpop.permute.xlu0 %171
      %173 = vrot.lane.b32.xlu0 %v163, 3
      %v174 = vpop.permute.xlu0 %173
      %175 = vrot.lane.b32.xlu0 %v164, 3
      %v176 = vpop.permute.xlu0 %175
      %177 = vrot.lane.b32.xlu0 %v165, 3
      %v178 = vpop.permute.xlu0 %177
      %vm179 = vcmask 23552
      %v180 = vsel %vm179, %v172, %v174
      %v181 = vsel %vm179, %v174, %v176
      %v182 = vsel %vm179, %v176, %v178
      %vm183 = vcmask 23552
      %v186 = vsel %vm183, 0, %v172
      %v188 = vsel %vm183, %v178, 0
      %v191 = vrot.slane %v186, 4
      %v192 = vrot.slane %v180, 4
      %v193 = vrot.slane %v181, 4
      %v194 = vrot.slane %v182, 4
      %v195 = vrot.slane %v188, 4
      %196 = vrot.lane.b32.xlu0 %v191, 127
      %v197 = vpop.permute.xlu0 %196
      %198 = vrot.lane.b32.xlu0 %v192, 127
      %v199 = vpop.permute.xlu0 %198
      %200 = vrot.lane.b32.xlu0 %v193, 127
      %v201 = vpop.permute.xlu0 %200
      %202 = vrot.lane.b32.xlu0 %v194, 127
      %v203 = vpop.permute.xlu0 %202
      %204 = vrot.lane.b32.xlu0 %v195, 127
      %v205 = vpop.permute.xlu0 %204
      %vm206 = vcmask 1039360
      %v207 = vsel %vm206, %v197, %v199
      %v208 = vsel %vm206, %v199, %v201
      %v209 = vsel %vm206, %v201, %v203
      %v210 = vsel %vm206, %v203, %v205
      %211 = vrot.lane.b32.xlu0 %v186, 126
      %v212 = vpop.permute.xlu0 %211
      %213 = vrot.lane.b32.xlu0 %v180, 126
      %v214 = vpop.permute.xlu0 %213
      %215 = vrot.lane.b32.xlu0 %v181, 126
      %v216 = vpop.permute.xlu0 %215
      %217 = vrot.lane.b32.xlu0 %v182, 126
      %v218 = vpop.permute.xlu0 %217
      %219 = vrot.lane.b32.xlu0 %v188, 126
      %v220 = vpop.permute.xlu0 %219
      %vm221 = vcmask 1031168
      %v222 = vsel %vm221, %v212, %v214
      %v223 = vsel %vm221, %v214, %v216
      %v224 = vsel %vm221, %v216, %v218
      %v225 = vsel %vm221, %v218, %v220
      %226 = vrot.lane.b32.xlu0 %v191, 125
      %v227 = vpop.permute.xlu0 %226
      %228 = vrot.lane.b32.xlu0 %v192, 125
      %v229 = vpop.permute.xlu0 %228
      %230 = vrot.lane.b32.xlu0 %v193, 125
      %v231 = vpop.permute.xlu0 %230
      %232 = vrot.lane.b32.xlu0 %v194, 125
      %v233 = vpop.permute.xlu0 %232
      %234 = vrot.lane.b32.xlu0 %v195, 125
      %v235 = vpop.permute.xlu0 %234
      %vm236 = vcmask 1022976
      %v237 = vsel %vm236, %v227, %v229
      %v238 = vsel %vm236, %v229, %v231
      %v239 = vsel %vm236, %v231, %v233
      %v240 = vsel %vm236, %v233, %v235
      %241 = vrot.lane.b32.xlu0 %v186, 124
      %v242 = vpop.permute.xlu0 %241
      %243 = vrot.lane.b32.xlu0 %v180, 124
      %v244 = vpop.permute.xlu0 %243
      %245 = vrot.lane.b32.xlu0 %v181, 124
      %v246 = vpop.permute.xlu0 %245
      %247 = vrot.lane.b32.xlu0 %v182, 124
      %v248 = vpop.permute.xlu0 %247
      %249 = vrot.lane.b32.xlu0 %v188, 124
      %v250 = vpop.permute.xlu0 %249
      %vm251 = vcmask 1014784
      %v252 = vsel %vm251, %v242, %v244
      %v253 = vsel %vm251, %v244, %v246
      %v254 = vsel %vm251, %v246, %v248
      %v255 = vsel %vm251, %v248, %v250
      %256 = vrot.lane.b32.xlu0 %v191, 123
      %v257 = vpop.permute.xlu0 %256
      %258 = vrot.lane.b32.xlu0 %v192, 123
      %v259 = vpop.permute.xlu0 %258
      %260 = vrot.lane.b32.xlu0 %v193, 123
      %v261 = vpop.permute.xlu0 %260
      %262 = vrot.lane.b32.xlu0 %v194, 123
      %v263 = vpop.permute.xlu0 %262
      %264 = vrot.lane.b32.xlu0 %v195, 123
      %v265 = vpop.permute.xlu0 %264
      %vm266 = vcmask 1006592
      %v267 = vsel %vm266, %v257, %v259
      %v268 = vsel %vm266, %v259, %v261
      %v269 = vsel %vm266, %v261, %v263
      %v270 = vsel %vm266, %v263, %v265
      %271 = vrot.lane.b32.xlu0 %v186, 122
      %v272 = vpop.permute.xlu0 %271
      %273 = vrot.lane.b32.xlu0 %v180, 122
      %v274 = vpop.permute.xlu0 %273
      %275 = vrot.lane.b32.xlu0 %v181, 122
      %v276 = vpop.permute.xlu0 %275
      %277 = vrot.lane.b32.xlu0 %v182, 122
      %v278 = vpop.permute.xlu0 %277
      %279 = vrot.lane.b32.xlu0 %v188, 122
      %v280 = vpop.permute.xlu0 %279
      %vm281 = vcmask 998400
      %v282 = vsel %vm281, %v272, %v274
      %v283 = vsel %vm281, %v274, %v276
      %v284 = vsel %vm281, %v276, %v278
      %v285 = vsel %vm281, %v278, %v280
      %vm286 = vcmask 1043456
      %v288 = vsel %vm286, %v186, %v207
      %v292 = vsel %vm286, %v180, %v208
      %v296 = vsel %vm286, %v181, %v209
      %v300 = vsel %vm286, %v182, %v210
      %v304 = vsel %vm286, %v222, %v237
      %v308 = vsel %vm286, %v223, %v238
      %v312 = vsel %vm286, %v224, %v239
      %v316 = vsel %vm286, %v225, %v240
      %v320 = vsel %vm286, %v252, %v267
      %v324 = vsel %vm286, %v253, %v268
      %v328 = vsel %vm286, %v254, %v269
      %v332 = vsel %vm286, %v255, %v270
      %v336 = vsel %vm286, %v282, 1065369472
      %v338 = vsel %vm286, %v283, 1065369472
      %v340 = vsel %vm286, %v284, 1065369472
      %v342 = vsel %vm286, %v285, 1065369472
      %vm343 = vcmask 465920
      %v345 = vsel %vm343, %v166, 0
      %vm347 = vcmask 1044480
      %v348 = vsel %vm286, 4294967295, 65535
      %v349 = vsel %vm347, %v348, 0
      %v350 = vand.u32 %v336, %v349
      %v352 = vand.u32 %v338, %v349
      %v354 = vand.u32 %v340, %v349
      %v356 = vand.u32 %v342, %v349
      %358 = vmatprep.subr.bf16.mxu0 0
      %359 = vmatpush1.bf16.msra.mxu0 0
      %360 = vmatprep.subr.bf16.mxu0 0
      %361 = vmatpush1.bf16.msra.mxu0 0
      %362 = vmatprep.subr.bf16.mxu0 0
      %363 = vmatpush1.bf16.msra.mxu0 0
      %364 = vmatprep.subr.bf16.mxu0 0
      %365 = vmatpush1.bf16.msra.mxu0 0
      %366 = vmatprep.subr.bf16.mxu0 %v352
      %367 = vmatpush1.bf16.msra.mxu0 %v350
      %368 = vmatprep.subr.bf16.mxu0 %v324
      %369 = vmatpush1.bf16.msra.mxu0 %v320
      %370 = vmatprep.subr.bf16.mxu0 %v308
      %371 = vmatpush1.bf16.msra.mxu0 %v304
      %372 = vmatprep.subr.bf16.mxu0 %v292
      %373 = vmatpush1.bf16.msra.mxu0 %v288
      %374 = vmatprep.subr.bf16.mxu0 0
      %375 = vmatpush2.bf16.msra.mxu0 0
      %376 = vmatprep.subr.bf16.mxu0 0
      %377 = vmatpush2.bf16.msra.mxu0 0
      %378 = vmatprep.subr.bf16.mxu0 0
      %379 = vmatpush2.bf16.msra.mxu0 0
      %380 = vmatprep.subr.bf16.mxu0 0
      %381 = vmatpush2.bf16.msra.mxu0 0
      %382 = vmatprep.subr.bf16.mxu0 0
      %383 = vmatpush2.bf16.msra.mxu0 0
      %384 = vmatprep.subr.bf16.mxu0 0
      %385 = vmatpush2.bf16.msra.mxu0 0
      %386 = vmatprep.subr.bf16.mxu0 0
      %387 = vmatpush2.bf16.msra.mxu0 0
      %388 = vmatprep.subr.bf16.mxu0 0
      %389 = vmatpush2.bf16.msra.mxu0 0
      %390 = vmatprep.mubr.bf16.mxu0 0
      %391 = vmatmul.mubr.bf16.gmra.mxu0 %v345
      %v392 = vpop.f32.mrf.mxu0
      %v393 = vadd.f32 0.0, %v392
      %v394 = vpop.f32.mrf.mxu0
      %v395 = vadd.f32 0.0, %v394
      %v396 = vpop.f32.mrf.mxu0
      %v397 = vpop.f32.mrf.mxu0
      %398 = vdwg.mxu0
      %399 = vmatprep.subr.bf16.mxu0 0
      %400 = vmatpush1.bf16.msra.mxu0 0
      %401 = vmatprep.subr.bf16.mxu0 0
      %402 = vmatpush1.bf16.msra.mxu0 0
      %403 = vmatprep.subr.bf16.mxu0 0
      %404 = vmatpush1.bf16.msra.mxu0 0
      %405 = vmatprep.subr.bf16.mxu0 0
      %406 = vmatpush1.bf16.msra.mxu0 0
      %407 = vmatprep.subr.bf16.mxu0 %v356
      %408 = vmatpush1.bf16.msra.mxu0 %v354
      %409 = vmatprep.subr.bf16.mxu0 %v332
      %410 = vmatpush1.bf16.msra.mxu0 %v328
      %411 = vmatprep.subr.bf16.mxu0 %v316
      %412 = vmatpush1.bf16.msra.mxu0 %v312
      %413 = vmatprep.subr.bf16.mxu0 %v300
      %414 = vmatpush1.bf16.msra.mxu0 %v296
      %415 = vmatprep.subr.bf16.mxu0 0
      %416 = vmatpush2.bf16.msra.mxu0 0
      %417 = vmatprep.subr.bf16.mxu0 0
      %418 = vmatpush2.bf16.msra.mxu0 0
      %419 = vmatprep.subr.bf16.mxu0 0
      %420 = vmatpush2.bf16.msra.mxu0 0
      %421 = vmatprep.subr.bf16.mxu0 0
      %422 = vmatpush2.bf16.msra.mxu0 0
      %423 = vmatprep.subr.bf16.mxu0 0
      %424 = vmatpush2.bf16.msra.mxu0 0
      %425 = vmatprep.subr.bf16.mxu0 0
      %426 = vmatpush2.bf16.msra.mxu0 0
      %427 = vmatprep.subr.bf16.mxu0 0
      %428 = vmatpush2.bf16.msra.mxu0 0
      %429 = vmatprep.subr.bf16.mxu0 0
      %430 = vmatpush2.bf16.msra.mxu0 0
      %431 = vmatprep.mubr.bf16.mxu0 0
      %432 = vmatmul.mubr.bf16.gmra.mxu0 %v345
      %v433 = vpop.f32.mrf.mxu0
      %v434 = vadd.f32 0.0, %v433
      %v435 = vpop.f32.mrf.mxu0
      %v436 = vadd.f32 0.0, %v435
      %v437 = vpop.f32.mrf.mxu0
      %v438 = vpop.f32.mrf.mxu0
      %439 = vdwg.mxu0
      %v440 = vlaneseq
      %v441 = vand.u32 %v440, 127
      %v442 = vadd.s32 %v441, 128
      %v443 = vadd.s32 %v441, 256
      %v444 = vadd.s32 %v441, 384
      %vm445 = vcmp.lt.s32.totalorder %v441, 32
      %vm446 = vcmp.lt.s32.totalorder %v442, 32
      %vm447 = vcmp.lt.s32.totalorder %v443, 32
      %vm448 = vcmp.lt.s32.totalorder %v444, 32
      %v449 = vsel %vm445, %v393, 0.0
      %v450 = vsel %vm446, %v395, 0.0
      %v451 = vsel %vm447, %v434, 0.0
      %v452 = vsel %vm448, %v436, 0.0
      %v453 = vtanh.pop %v449
      %v454 = vtanh.pop %v450
      %v455 = vtanh.pop %v451
      %v456 = vtanh.pop %v452
      %v461 = vcombine.low %v453, %v454
      %v462 = vcombine.low %v455, %v456
      %v464 = vunpack.c.l.s4 1966171168
      %v465 = vunpack.c.0.s8 %v464
      %v466 = vlaneseq
      %v467 = vshrl.u32 %v466, 7
      %v468 = vsub.s32 %v465, %v467
      %v469 = vrot.slane %v461, %v468
      %v471 = vunpack.c.l.s4 1966171168
      %v472 = vunpack.c.0.s8 %v471
      %v473 = vlaneseq
      %v474 = vshrl.u32 %v473, 7
      %v475 = vsub.s32 %v472, %v474
      %v476 = vrot.slane %v462, %v475
      %v477 = vcombine.low %v469, %v476
      %v479 = vunpack.c.l.s4 1966171168
      %v480 = vunpack.c.0.s8 %v479
      %v481 = vlaneseq
      %v482 = vshrl.u32 %v481, 7
      %v483 = vsub.s32 %v480, %v482
      %v484 = vrot.slane %v477, %v483
      %v486 = vlaneseq
      %vm487 = vcmp.ge.s32.totalorder %v486, 0
      %vm488 = vcmp.lt.s32.totalorder %v486, 512
      %vm489 = vmand %vm487, %vm488
      %490 = vst.msk [vmem:[%s141] sm:$0xf] %vm489, %v484
      %p491 = scmp.lt.s32.totalorder %s13, 1
      %s492 = scalar_select %p491, %s13, 1
      %s493 = smul.addr %s492, 4
      %s494 = scalar_lea.vmem %s2, %s493
      // Predicated region
      $region29: #{soft_hifigan_forward.13} parent=27 // pred_check
        %p495 = pneg %p78
      $region30: #{soft_hifigan_forward.13} parent=27 // pred_check_branch
        %497 = sbr.rel (%p495) target = $region32
      $region31: #{soft_hifigan_forward.13} parent=27 // pred_region
        _
      $region32: #{soft_hifigan_forward.13} parent=27 // pred_fallthru
        _
    $region28: #{soft_hifigan_forward.13} parent=5 // pred_fallthru
      _
    %p498 = scmp.le.s32.totalorder 2, %s8
    // Predicated region
    $region33: #{soft_hifigan_forward.13} parent=5 // pred_check
      %p499 = pneg %p498
    $region34: #{soft_hifigan_forward.13} parent=5 // pred_check_branch
      %501 = sbr.rel (%p499) target = $region36
    $region35: #{soft_hifigan_forward.13} parent=5 // pred_region
      %s502 = ssub.s32 %s8, 2
      // Predicated region
      $region37: #{soft_hifigan_forward.13} parent=35 // pred_check
        %p503 = pneg %p84
      $region38: #{soft_hifigan_forward.13} parent=35 // pred_check_branch
        %505 = sbr.rel (%p503) target = $region40
      $region39: #{soft_hifigan_forward.13} parent=35 // pred_region
        %p506 = scmp.lt.s32.totalorder %s14, 1
        %s507 = scalar_select %p506, %s14, 1
        %s508 = smul.addr %s507, 4
        %s509 = scalar_lea.vmem %s2, %s508
      $region40: #{soft_hifigan_forward.13} parent=35 // pred_fallthru
        _
    $region36: #{soft_hifigan_forward.13} parent=5 // pred_fallthru
      _
  $region6: #{soft_hifigan_forward.13} parent=0 // loop_footer
    %s12 = sadd.s32 1, %s8
  $region7: #{soft_hifigan_forward.13} parent=0 // loop_footer_branch
    %7 = sbr.rel target = $region3
  $region8: #{soft_hifigan_forward.13} parent=0 // loop_exit
    _

</llo_original>
